<compile_context>
chip_gen: v5e
topology: v5e:2x2
jax: 0.10.0
libtpu: 0.0.40
codegen_flags: <defaults>
</compile_context>

<pallas_src>
import jax
import jax.numpy as jnp
from jax import lax
from jax.experimental import pallas as pl
from jax.experimental.pallas import tpu as pltpu


def _rec_decoder_kernel(x_ref, wt_ref, b1_ref, r0_ref, r1_ref, rc_ref, b2_ref,
                        o_ref):
    Nb, H, W, C = x_ref.shape
    M = Nb * H * W

    # --- ConvTranspose2d(k=2,s=2) + BN1 + ReLU: one fused bf16 matmul ---------
    xf = x_ref[...].reshape(M, C)                                   # bf16
    y = jnp.dot(xf, wt_ref[...], preferred_element_type=jnp.float32)
    t = jnp.maximum(y + b1_ref[...], 0.0)                           # (M, 4C) f32
    # column blocks p = 0..3  <->  parity (di, dj) = (0,0),(0,1),(1,0),(1,1)

    # --- Conv2d(k=3,s=2,p=1) + BN2 + ReLU over the parity maps ----------------
    # The top/left zero padding of the conv == roll by one image-row / one
    # image-column in the flattened (M, .) map plus a border mask.
    ridx = lax.broadcasted_iota(jnp.int32, (M, 1), 0)
    keep_row = ((ridx % (H * W)) >= W).astype(jnp.float32)   # zero where i == 0
    keep_col = ((ridx % W) != 0).astype(jnp.float32)         # zero where j == 0

    def shift_rows(a):      # value at (n, i, j) becomes a[n, i-1, j]; 0 at i == 0
        return pltpu.roll(a, W, axis=0) * keep_row

    def shift_cols(a):      # value at (n, i, j) becomes a[n, i, j-1]; 0 at j == 0
        return pltpu.roll(a, 1, axis=0) * keep_col

    bf16 = jnp.bfloat16
    # taps (1,1),(1,2),(2,1),(2,2): the 4 unshifted parity maps, stacked matmul
    acc = jnp.dot(t.astype(bf16), r0_ref[...],
                  preferred_element_type=jnp.float32)
    # taps (0,1),(0,2): row-shifted t10 | t11 (both in one matmul)
    tr = shift_rows(t[:, 2 * C:])                                   # (M, 2C)
    acc += jnp.dot(tr.astype(bf16), r1_ref[...],
                   preferred_element_type=jnp.float32)
    # tap (1,0): column-shifted t01
    acc += jnp.dot(shift_cols(t[:, C:2 * C]).astype(bf16), rc_ref[0],
                   preferred_element_type=jnp.float32)
    # tap (2,0): column-shifted t11
    acc += jnp.dot(shift_cols(t[:, 3 * C:]).astype(bf16), rc_ref[1],
                   preferred_element_type=jnp.float32)
    # tap (0,0): row+column shifted t11
    acc += jnp.dot(shift_cols(tr[:, C:]).astype(bf16), rc_ref[2],
                   preferred_element_type=jnp.float32)

    z = jnp.maximum(acc + b2_ref[...], 0.0)
    o_ref[...] = z.reshape(Nb, H, W, C).astype(o_ref.dtype)


def _pick_block_batch(n, h, w, max_rows=1024):
    """Largest divisor Nb of n with Nb*H*W <= max_rows, keeping the grid >= 2."""
    best = 1
    for nb in range(1, n + 1):
        if n % nb:
            continue
        if nb * h * w > max_rows:
            continue
        if n // nb < 2 and n > 1:
            continue          # keep >= 2 grid steps so both v7x TCs stay busy
        best = nb
    return best


def _prepare_layer(params):
    """Fold BN scales into the conv weights and lay them out for the kernel."""
    c = params["s1"].shape[0]
    # ConvTranspose2d weight (Cin, Cout, 2, 2) -> (Cin, 4*Cout); BN1 scale folded.
    wt = jnp.transpose(params["wt"], (2, 3, 0, 1)) * params["s1"][None, None, None, :]
    wt_f = jnp.transpose(wt.reshape(4, c, c), (1, 0, 2)).reshape(c, 4 * c)
    b1_t = jnp.tile(params["b1"], 4).reshape(1, 4 * c)
    # Conv2d weight (Cout, Cin, 3, 3) -> per-tap (Cin, Cout); BN2 scale folded.
    w2 = jnp.transpose(params["w2"], (2, 3, 1, 0)) * params["s2"][None, None, None, :]
    r0 = jnp.concatenate([w2[1, 1], w2[1, 2], w2[2, 1], w2[2, 2]], axis=0)  # (4C, C)
    r1 = jnp.concatenate([w2[0, 1], w2[0, 2]], axis=0)                      # (2C, C)
    rc = jnp.stack([w2[1, 0], w2[2, 0], w2[0, 0]], axis=0)                  # (3, C, C)
    return dict(
        wt=wt_f.astype(jnp.bfloat16),
        b1=b1_t.astype(jnp.float32),
        r0=r0.astype(jnp.bfloat16),
        r1=r1.astype(jnp.bfloat16),
        rc=rc.astype(jnp.bfloat16),
        b2=params["b2"].reshape(1, c).astype(jnp.float32),
    )


def rec_decoder_layer(x_nchw, prep):
    """Applies one decoder_rec block. x: (N, C, H, W) -> (N, C, H, W)."""
    n, c, h, w = x_nchw.shape
    nb = _pick_block_batch(n, h, w)
    x = jnp.transpose(x_nchw, (0, 2, 3, 1)).astype(jnp.bfloat16)    # NHWC, bf16

    out = pl.pallas_call(
        _rec_decoder_kernel,
        out_shape=jax.ShapeDtypeStruct((n, h, w, c), jnp.float32),
        grid_spec=pltpu.PrefetchScalarGridSpec(
            num_scalar_prefetch=0,
            grid=(n // nb,),
            in_specs=[
                pl.BlockSpec((nb, h, w, c), lambda i: (i, 0, 0, 0)),
                pl.BlockSpec((c, 4 * c), lambda i: (0, 0)),
                pl.BlockSpec((1, 4 * c), lambda i: (0, 0)),
                pl.BlockSpec((4 * c, c), lambda i: (0, 0)),
                pl.BlockSpec((2 * c, c), lambda i: (0, 0)),
                pl.BlockSpec((3, c, c), lambda i: (0, 0, 0)),
                pl.BlockSpec((1, c), lambda i: (0, 0)),
            ],
            out_specs=pl.BlockSpec((nb, h, w, c), lambda i: (i, 0, 0, 0)),
        ),
        compiler_params=pltpu.CompilerParams(
            dimension_semantics=("parallel",)),
    )(x, prep["wt"], prep["b1"], prep["r0"], prep["r1"], prep["rc"], prep["b2"])
    return jnp.transpose(out, (0, 3, 1, 2))                         # back to NCHW


def _init_layer_params(key, c, eps=1e-3):
    ks = jax.random.split(key, 10)
    wt = jax.random.normal(ks[0], (c, c, 2, 2), jnp.float32) / jnp.sqrt(4.0 * c)
    w2 = jax.random.normal(ks[1], (c, c, 3, 3), jnp.float32) / jnp.sqrt(9.0 * c)
    g1 = 1.0 + 0.1 * jax.random.normal(ks[2], (c,), jnp.float32)
    be1 = 0.1 * jax.random.normal(ks[3], (c,), jnp.float32)
    m1 = 0.1 * jax.random.normal(ks[4], (c,), jnp.float32)
    v1 = 0.5 + jax.random.uniform(ks[5], (c,), jnp.float32)
    g2 = 1.0 + 0.1 * jax.random.normal(ks[6], (c,), jnp.float32)
    be2 = 0.1 * jax.random.normal(ks[7], (c,), jnp.float32)
    m2 = 0.1 * jax.random.normal(ks[8], (c,), jnp.float32)
    v2 = 0.5 + jax.random.uniform(ks[9], (c,), jnp.float32)
    s1 = g1 / jnp.sqrt(v1 + eps)
    s2 = g2 / jnp.sqrt(v2 + eps)
    return dict(wt=wt, w2=w2, s1=s1, b1=be1 - m1 * s1, s2=s2, b2=be2 - m2 * s2)


class RecDecoderPallas:
    def __init__(self, feature_num, layer_num, key):
        self.feature_num = feature_num
        self.layer_num = layer_num
        self.layers = []
        fn = feature_num
        keys = jax.random.split(key, max(layer_num, 1))
        for i in range(layer_num):
            raw = _init_layer_params(keys[i], fn)
            self.layers.append(dict(raw=raw, prep=_prepare_layer(raw)))
            fn //= 2

    def __call__(self, x):
        if not self.layers:
            raise ValueError("RecDecoder requires layer_num >= 1")
        # The PyTorch forward applies decoder_rec[i] to the ORIGINAL x for
        # i = layer_num-1 .. 0 and returns only the i == 0 result, so earlier
        # iterations are dead work (and for layer_num > 1 would not even match
        # x's channel count).  Only decoder_rec[0] is evaluated here.
        return rec_decoder_layer(x, self.layers[0]["prep"])


def _reference_layer(x, params):
    """Pure-JAX reference (NCHW, high precision) for one decoder_rec block."""
    y = jnp.einsum('ncij,cokl->noikjl', x, params["wt"],
                   precision=lax.Precision.HIGHEST)
    n, c, h = x.shape[0], x.shape[1], x.shape[2]
    w = x.shape[3]
    y = y.reshape(n, c, 2 * h, 2 * w)
    y = jnp.maximum(y * params["s1"][None, :, None, None]
                    + params["b1"][None, :, None, None], 0.0)
    z = lax.conv_general_dilated(
        y, params["w2"], window_strides=(2, 2), padding=((1, 1), (1, 1)),
        dimension_numbers=('NCHW', 'OIHW', 'NCHW'),
        precision=lax.Precision.HIGHEST)
    z = jnp.maximum(z * params["s2"][None, :, None, None]
                    + params["b2"][None, :, None, None], 0.0)
    return z


if __name__ == "__main__":
    feature_num, layer_num = 128, 1
    N, H, W = 4, 8, 16

    key = jax.random.PRNGKey(0)
    k_model, k_x = jax.random.split(key)
    model = RecDecoderPallas(feature_num, layer_num, k_model)
    x = jax.random.normal(k_x, (N, feature_num, H, W), jnp.float32)

    fwd = jax.jit(lambda v: model(v))
    out = jax.block_until_ready(fwd(x))

    ref = _reference_layer(x, model.layers[0]["raw"])
    assert out.shape == (N, feature_num, H, W), out.shape
    max_err = float(jnp.max(jnp.abs(out - ref)))
    assert bool(jnp.allclose(out, ref, atol=1e-2, rtol=1e-2)), max_err
    print("KERNEL_OK")
</pallas_src>

<mosaic_0001>
module attributes {stable_mosaic.version = 11 : i64} {
  func.func @_rec_decoder_kernel(%arg0: i32, %arg1: memref<2x8x16x128xbf16, #tpu.memory_space<vmem>>, %arg2: memref<128x512xbf16, #tpu.memory_space<vmem>>, %arg3: memref<1x512xf32, #tpu.memory_space<vmem>>, %arg4: memref<512x128xbf16, #tpu.memory_space<vmem>>, %arg5: memref<256x128xbf16, #tpu.memory_space<vmem>>, %arg6: memref<3x128x128xbf16, #tpu.memory_space<vmem>>, %arg7: memref<1x128xf32, #tpu.memory_space<vmem>>, %arg8: memref<2x8x16x128xf32, #tpu.memory_space<vmem>>) attributes {dimension_semantics = [#tpu.dimension_semantics<parallel>], iteration_bounds = array<i64: 2>, scalar_prefetch = 0 : i64, scratch_operands = 0 : i64, tpu.core_type = #tpu.core_type<tc>, window_params = [{transform_indices = @transform_0, window_bounds = array<i64: 2, 8, 16, 128>}, {pipeline_mode = #tpu.pipeline_mode<synchronous>, transform_indices = @transform_1, window_bounds = array<i64: 128, 512>}, {pipeline_mode = #tpu.pipeline_mode<synchronous>, transform_indices = @transform_2, window_bounds = array<i64: 1, 512>}, {pipeline_mode = #tpu.pipeline_mode<synchronous>, transform_indices = @transform_3, window_bounds = array<i64: 512, 128>}, {pipeline_mode = #tpu.pipeline_mode<synchronous>, transform_indices = @transform_4, window_bounds = array<i64: 256, 128>}, {pipeline_mode = #tpu.pipeline_mode<synchronous>, transform_indices = @transform_5, window_bounds = array<i64: 3, 128, 128>}, {pipeline_mode = #tpu.pipeline_mode<synchronous>, transform_indices = @transform_6, window_bounds = array<i64: 1, 128>}, {transform_indices = @transform_7, window_bounds = array<i64: 2, 8, 16, 128>}]} {
    %c0 = arith.constant 0 : index
    %c0_0 = arith.constant 0 : index
    %c0_1 = arith.constant 0 : index
    %c0_2 = arith.constant 0 : index
    %0 = vector.load %arg1[%c0, %c0_0, %c0_1, %c0_2] : memref<2x8x16x128xbf16, #tpu.memory_space<vmem>>, vector<2x8x16x128xbf16>
    %1 = vector.shape_cast %0 : vector<2x8x16x128xbf16> to vector<256x128xbf16>
    %c0_3 = arith.constant 0 : index
    %c0_4 = arith.constant 0 : index
    %2 = vector.load %arg2[%c0_3, %c0_4] : memref<128x512xbf16, #tpu.memory_space<vmem>>, vector<128x512xbf16>
    %cst = arith.constant dense<0.000000e+00> : vector<256x512xf32>
    %3 = tpu.matmul %1, %2, %cst {dimension_numbers = #tpu.dot_dimension_numbers<[1], [0], [0], [1], [0, 0, 1, 1], [], []>} : vector<256x128xbf16>, vector<128x512xbf16>, vector<256x512xf32> -> vector<256x512xf32>
    %c0_5 = arith.constant 0 : index
    %c0_6 = arith.constant 0 : index
    %4 = vector.load %arg3[%c0_5, %c0_6] : memref<1x512xf32, #tpu.memory_space<vmem>>, vector<1x512xf32>
    %5 = vector.broadcast %4 : vector<1x512xf32> to vector<256x512xf32>
    %6 = arith.addf %3, %5 : vector<256x512xf32>
    %cst_7 = arith.constant 0.000000e+00 : f32
    %7 = vector.broadcast %cst_7 : f32 to vector<256x512xf32>
    %8 = arith.maximumf %6, %7 : vector<256x512xf32>
    %9 = tpu.iota {dimensions = array<i32: 0>} : vector<256x1xi32>
    %c128_i32 = arith.constant 128 : i32
    %c0_i32 = arith.constant 0 : i32
    %10 = arith.cmpi eq, %c128_i32, %c0_i32 : i32
    %c1_i32 = arith.constant 1 : i32
    %11 = arith.select %10, %c1_i32, %c128_i32 : i32
    %12 = vector.broadcast %11 : i32 to vector<256x1xi32>
    %13 = arith.remsi %9, %12 : vector<256x1xi32>
    %c0_i32_8 = arith.constant 0 : i32
    %14 = vector.broadcast %c0_i32_8 : i32 to vector<256x1xi32>
    %15 = arith.cmpi ne, %13, %14 : vector<256x1xi32>
    %c0_i32_9 = arith.constant 0 : i32
    %16 = vector.broadcast %c0_i32_9 : i32 to vector<256x1xi32>
    %17 = arith.cmpi slt, %13, %16 : vector<256x1xi32>
    %c0_i32_10 = arith.constant 0 : i32
    %18 = arith.cmpi slt, %11, %c0_i32_10 : i32
    %19 = vector.broadcast %18 : i1 to vector<256x1xi1>
    %20 = vector.broadcast %19 : vector<256x1xi1> to vector<256x1xi1>
    %21 = arith.xori %17, %20 : vector<256x1xi1>
    %22 = arith.andi %21, %15 : vector<256x1xi1>
    %23 = vector.broadcast %11 : i32 to vector<256x1xi32>
    %24 = arith.addi %13, %23 : vector<256x1xi32>
    %25 = arith.select %22, %24, %13 : vector<256x1xi1>, vector<256x1xi32>
    %c16_i32 = arith.constant 16 : i32
    %26 = vector.broadcast %c16_i32 : i32 to vector<256x1xi32>
    %27 = arith.cmpi sge, %25, %26 : vector<256x1xi32>
    %28 = arith.extui %27 : vector<256x1xi1> to vector<256x1xi32>
    %29 = arith.sitofp %28 : vector<256x1xi32> to vector<256x1xf32>
    %c16_i32_11 = arith.constant 16 : i32
    %c0_i32_12 = arith.constant 0 : i32
    %30 = arith.cmpi eq, %c16_i32_11, %c0_i32_12 : i32
    %c1_i32_13 = arith.constant 1 : i32
    %31 = arith.select %30, %c1_i32_13, %c16_i32_11 : i32
    %32 = vector.broadcast %31 : i32 to vector<256x1xi32>
    %33 = arith.remsi %9, %32 : vector<256x1xi32>
    %c0_i32_14 = arith.constant 0 : i32
    %34 = vector.broadcast %c0_i32_14 : i32 to vector<256x1xi32>
    %35 = arith.cmpi ne, %33, %34 : vector<256x1xi32>
    %c0_i32_15 = arith.constant 0 : i32
    %36 = vector.broadcast %c0_i32_15 : i32 to vector<256x1xi32>
    %37 = arith.cmpi slt, %33, %36 : vector<256x1xi32>
    %c0_i32_16 = arith.constant 0 : i32
    %38 = arith.cmpi slt, %31, %c0_i32_16 : i32
    %39 = vector.broadcast %38 : i1 to vector<256x1xi1>
    %40 = vector.broadcast %39 : vector<256x1xi1> to vector<256x1xi1>
    %41 = arith.xori %37, %40 : vector<256x1xi1>
    %42 = arith.andi %41, %35 : vector<256x1xi1>
    %43 = vector.broadcast %31 : i32 to vector<256x1xi32>
    %44 = arith.addi %33, %43 : vector<256x1xi32>
    %45 = arith.select %42, %44, %33 : vector<256x1xi1>, vector<256x1xi32>
    %c0_i32_17 = arith.constant 0 : i32
    %46 = vector.broadcast %c0_i32_17 : i32 to vector<256x1xi32>
    %47 = arith.cmpi ne, %45, %46 : vector<256x1xi32>
    %48 = arith.extui %47 : vector<256x1xi1> to vector<256x1xi32>
    %49 = arith.sitofp %48 : vector<256x1xi32> to vector<256x1xf32>
    %50 = arith.truncf %8 : vector<256x512xf32> to vector<256x512xbf16>
    %c0_18 = arith.constant 0 : index
    %c0_19 = arith.constant 0 : index
    %51 = vector.load %arg4[%c0_18, %c0_19] : memref<512x128xbf16, #tpu.memory_space<vmem>>, vector<512x128xbf16>
    %cst_20 = arith.constant dense<0.000000e+00> : vector<256x128xf32>
    %52 = tpu.matmul %50, %51, %cst_20 {dimension_numbers = #tpu.dot_dimension_numbers<[1], [0], [0], [1], [0, 0, 1, 1], [], []>} : vector<256x512xbf16>, vector<512x128xbf16>, vector<256x128xf32> -> vector<256x128xf32>
    %53 = vector.extract_strided_slice %8 {offsets = [0, 256], sizes = [256, 256], strides = [1, 1]} : vector<256x512xf32> to vector<256x256xf32>
    %c16_i32_21 = arith.constant 16 : i32
    %54 = tpu.dynamic_rotate %53 by %c16_i32_21 dim 0 : vector<256x256xf32>, i32 -> vector<256x256xf32>
    %55 = vector.broadcast %29 : vector<256x1xf32> to vector<256x256xf32>
    %56 = arith.mulf %54, %55 : vector<256x256xf32>
    %57 = arith.truncf %56 : vector<256x256xf32> to vector<256x256xbf16>
    %c0_22 = arith.constant 0 : index
    %c0_23 = arith.constant 0 : index
    %58 = vector.load %arg5[%c0_22, %c0_23] : memref<256x128xbf16, #tpu.memory_space<vmem>>, vector<256x128xbf16>
    %cst_24 = arith.constant dense<0.000000e+00> : vector<256x128xf32>
    %59 = tpu.matmul %57, %58, %cst_24 {dimension_numbers = #tpu.dot_dimension_numbers<[1], [0], [0], [1], [0, 0, 1, 1], [], []>} : vector<256x256xbf16>, vector<256x128xbf16>, vector<256x128xf32> -> vector<256x128xf32>
    %60 = arith.addf %52, %59 : vector<256x128xf32>
    %61 = vector.extract_strided_slice %8 {offsets = [0, 128], sizes = [256, 128], strides = [1, 1]} : vector<256x512xf32> to vector<256x128xf32>
    %c1_i32_25 = arith.constant 1 : i32
    %62 = tpu.dynamic_rotate %61 by %c1_i32_25 dim 0 : vector<256x128xf32>, i32 -> vector<256x128xf32>
    %63 = vector.broadcast %49 : vector<256x1xf32> to vector<256x128xf32>
    %64 = arith.mulf %62, %63 : vector<256x128xf32>
    %65 = arith.truncf %64 : vector<256x128xf32> to vector<256x128xbf16>
    %c0_26 = arith.constant 0 : index
    %c0_27 = arith.constant 0 : index
    %c0_28 = arith.constant 0 : index
    %66 = vector.load %arg6[%c0_26, %c0_27, %c0_28] : memref<3x128x128xbf16, #tpu.memory_space<vmem>>, vector<1x128x128xbf16>
    %67 = vector.shape_cast %66 : vector<1x128x128xbf16> to vector<128x128xbf16>
    %cst_29 = arith.constant dense<0.000000e+00> : vector<256x128xf32>
    %68 = tpu.matmul %65, %67, %cst_29 {dimension_numbers = #tpu.dot_dimension_numbers<[1], [0], [0], [1], [0, 0, 1, 1], [], []>} : vector<256x128xbf16>, vector<128x128xbf16>, vector<256x128xf32> -> vector<256x128xf32>
    %69 = arith.addf %60, %68 : vector<256x128xf32>
    %70 = vector.extract_strided_slice %8 {offsets = [0, 384], sizes = [256, 128], strides = [1, 1]} : vector<256x512xf32> to vector<256x128xf32>
    %c1_i32_30 = arith.constant 1 : i32
    %71 = tpu.dynamic_rotate %70 by %c1_i32_30 dim 0 : vector<256x128xf32>, i32 -> vector<256x128xf32>
    %72 = vector.broadcast %49 : vector<256x1xf32> to vector<256x128xf32>
    %73 = arith.mulf %71, %72 : vector<256x128xf32>
    %74 = arith.truncf %73 : vector<256x128xf32> to vector<256x128xbf16>
    %c1 = arith.constant 1 : index
    %c0_31 = arith.constant 0 : index
    %c0_32 = arith.constant 0 : index
    %75 = vector.load %arg6[%c1, %c0_31, %c0_32] : memref<3x128x128xbf16, #tpu.memory_space<vmem>>, vector<1x128x128xbf16>
    %76 = vector.shape_cast %75 : vector<1x128x128xbf16> to vector<128x128xbf16>
    %cst_33 = arith.constant dense<0.000000e+00> : vector<256x128xf32>
    %77 = tpu.matmul %74, %76, %cst_33 {dimension_numbers = #tpu.dot_dimension_numbers<[1], [0], [0], [1], [0, 0, 1, 1], [], []>} : vector<256x128xbf16>, vector<128x128xbf16>, vector<256x128xf32> -> vector<256x128xf32>
    %78 = arith.addf %69, %77 : vector<256x128xf32>
    %79 = vector.extract_strided_slice %56 {offsets = [0, 128], sizes = [256, 128], strides = [1, 1]} : vector<256x256xf32> to vector<256x128xf32>
    %c1_i32_34 = arith.constant 1 : i32
    %80 = tpu.dynamic_rotate %79 by %c1_i32_34 dim 0 : vector<256x128xf32>, i32 -> vector<256x128xf32>
    %81 = vector.broadcast %49 : vector<256x1xf32> to vector<256x128xf32>
    %82 = arith.mulf %80, %81 : vector<256x128xf32>
    %83 = arith.truncf %82 : vector<256x128xf32> to vector<256x128xbf16>
    %c2 = arith.constant 2 : index
    %c0_35 = arith.constant 0 : index
    %c0_36 = arith.constant 0 : index
    %84 = vector.load %arg6[%c2, %c0_35, %c0_36] : memref<3x128x128xbf16, #tpu.memory_space<vmem>>, vector<1x128x128xbf16>
    %85 = vector.shape_cast %84 : vector<1x128x128xbf16> to vector<128x128xbf16>
    %cst_37 = arith.constant dense<0.000000e+00> : vector<256x128xf32>
    %86 = tpu.matmul %83, %85, %cst_37 {dimension_numbers = #tpu.dot_dimension_numbers<[1], [0], [0], [1], [0, 0, 1, 1], [], []>} : vector<256x128xbf16>, vector<128x128xbf16>, vector<256x128xf32> -> vector<256x128xf32>
    %87 = arith.addf %78, %86 : vector<256x128xf32>
    %c0_38 = arith.constant 0 : index
    %c0_39 = arith.constant 0 : index
    %88 = vector.load %arg7[%c0_38, %c0_39] : memref<1x128xf32, #tpu.memory_space<vmem>>, vector<1x128xf32>
    %89 = vector.broadcast %88 : vector<1x128xf32> to vector<256x128xf32>
    %90 = arith.addf %87, %89 : vector<256x128xf32>
    %cst_40 = arith.constant 0.000000e+00 : f32
    %91 = vector.broadcast %cst_40 : f32 to vector<256x128xf32>
    %92 = arith.maximumf %90, %91 : vector<256x128xf32>
    %93 = vector.shape_cast %92 : vector<256x128xf32> to vector<2x8x16x128xf32>
    %c0_41 = arith.constant 0 : index
    %c0_42 = arith.constant 0 : index
    %c0_43 = arith.constant 0 : index
    %c0_44 = arith.constant 0 : index
    %94 = vector.load %arg8[%c0_41, %c0_42, %c0_43, %c0_44] : memref<2x8x16x128xf32, #tpu.memory_space<vmem>>, vector<2x8x16x128xf32>
    tpu.vector_store %arg8[%c0_41, %c0_42, %c0_43, %c0_44], %93 {strides = array<i32>} : memref<2x8x16x128xf32, #tpu.memory_space<vmem>>, vector<2x8x16x128xf32>,
    return
  }
  func.func @transform_0(%arg0: i32) -> (i32, i32, i32, i32) {
    %c0_i32 = arith.constant 0 : i32
    %c0_i32_0 = arith.constant 0 : i32
    %c0_i32_1 = arith.constant 0 : i32
    %c0_i32_2 = arith.constant 0 : i32
    return %arg0, %c0_i32, %c0_i32_0, %c0_i32_1 : i32, i32, i32, i32
  }
  func.func @transform_1(%arg0: i32) -> (i32, i32) {
    %c0_i32 = arith.constant 0 : i32
    %c0_i32_0 = arith.constant 0 : i32
    %c0_i32_1 = arith.constant 0 : i32
    return %c0_i32, %c0_i32_0 : i32, i32
  }
  func.func @transform_2(%arg0: i32) -> (i32, i32) {
    %c0_i32 = arith.constant 0 : i32
    %c0_i32_0 = arith.constant 0 : i32
    %c0_i32_1 = arith.constant 0 : i32
    return %c0_i32, %c0_i32_0 : i32, i32
  }
  func.func @transform_3(%arg0: i32) -> (i32, i32) {
    %c0_i32 = arith.constant 0 : i32
    %c0_i32_0 = arith.constant 0 : i32
    %c0_i32_1 = arith.constant 0 : i32
    return %c0_i32, %c0_i32_0 : i32, i32
  }
  func.func @transform_4(%arg0: i32) -> (i32, i32) {
    %c0_i32 = arith.constant 0 : i32
    %c0_i32_0 = arith.constant 0 : i32
    %c0_i32_1 = arith.constant 0 : i32
    return %c0_i32, %c0_i32_0 : i32, i32
  }
  func.func @transform_5(%arg0: i32) -> (i32, i32, i32) {
    %c0_i32 = arith.constant 0 : i32
    %c0_i32_0 = arith.constant 0 : i32
    %c0_i32_1 = arith.constant 0 : i32
    %c0_i32_2 = arith.constant 0 : i32
    return %c0_i32, %c0_i32_0, %c0_i32_1 : i32, i32, i32
  }
  func.func @transform_6(%arg0: i32) -> (i32, i32) {
    %c0_i32 = arith.constant 0 : i32
    %c0_i32_0 = arith.constant 0 : i32
    %c0_i32_1 = arith.constant 0 : i32
    return %c0_i32, %c0_i32_0 : i32, i32
  }
  func.func @transform_7(%arg0: i32) -> (i32, i32, i32, i32) {
    %c0_i32 = arith.constant 0 : i32
    %c0_i32_0 = arith.constant 0 : i32
    %c0_i32_1 = arith.constant 0 : i32
    %c0_i32_2 = arith.constant 0 : i32
    return %arg0, %c0_i32, %c0_i32_0, %c0_i32_1 : i32, i32, i32, i32
  }
}

</mosaic_0001>

<llo_original>
// kernel: _lambda_.1
$region0: #{_lambda_.1}
  #allocation0 [shape = 'u32[]', space=smem, size = 0x4, offset = 0x4, fixed_abs, tag = 'smem constant byte address 0x4 - core index']
  #allocation1 [shape = 'u32[72,128]{1,0:T(1,128)}', space=vmem, size = 0x9000, scoped, tag = 'internal scratch']
  %s0 = inlined_call_operand.vmem [shape: bf16[4,8,16,128], index: 0, kind: input, shape index: {}]
  %s1 = inlined_call_operand.vmem [shape: bf16[128,512], index: 1, kind: input, shape index: {}]
  %s2 = inlined_call_operand.vmem [shape: f32[1,512], index: 2, kind: input, shape index: {}]
  %s3 = inlined_call_operand.vmem [shape: bf16[512,128], index: 3, kind: input, shape index: {}]
  %s4 = inlined_call_operand.hbm [shape: bf16[256,128], index: 4, kind: input, shape index: {}]
  %s5 = inlined_call_operand.vmem [shape: bf16[3,128,128], index: 5, kind: input, shape index: {}]
  %s6 = inlined_call_operand.vmem [shape: f32[1,128], index: 6, kind: input, shape index: {}]
  %s7 = inlined_call_operand.hbm [shape: f32[4,8,16,128], index: 7, kind: output, shape index: {}]
  %s8 = sld [smem:[#allocation0]]
  $region65: #{_lambda_.1} parent=0
    _
  %s10 = ssub.s32 1, %s8
  %s11 = scalar_select 0, %s10, %s8
  $region1: #{_lambda_.1} parent=0
    #allocation2 [shape = 'u8[65536]{0}', space=vmem, size = 0x10000, scoped, tag = 'input window, operand 4, single buffered']
    #allocation3 [shape = 's32[2]{0}', space=sflag, size = 0x8, scoped, tag = 'scoped memory for _lambda_.1']
    #allocation4 [shape = 's32[2]{0}', space=sflag, size = 0x8, scoped, tag = 'scoped memory for _lambda_.1']
    #allocation5 [shape = 'u8[262144]{0}', space=vmem, size = 0x40000, scoped, tag = 'output window, operand 0']
    %12 = vsyncpa [#allocation3], 0
    %13 = vsyncpa [#allocation4], 0
    %s14 = scalar_lea.sflag [#allocation4], 1
    %15 = vsyncpa %s14, 0
    loop: start=0, step=1, limit=4
    $region2: #{_lambda_.1} parent=1 // loop_pre_header
      _
    $region3: #{_lambda_.1} parent=1 // loop_header
      %s17 = sphi 0, %s21
      %p18 = scmp.ge.s32.totalorder %s17, 4
      %s27 = sphi 0, %s29
      %s30 = sphi 0, %s27
      %s31 = sphi 0, %s30
      %s47 = sphi 0, %s31
      %s51 = sphi 0, %s51
      %s53 = sphi 0, %s51
      %s54 = sphi 0, %s53
      %s68 = sphi 0, %s54
      %s72 = sphi 0, %s72
      %s74 = sphi 0, %s72
      %s75 = sphi 0, %s74
      %s89 = sphi 0, %s75
      %s93 = sphi 0, %s93
      %s95 = sphi 0, %s93
      %s96 = sphi 0, %s95
      %s110 = sphi 0, %s96
      %s114 = sphi 0, %s114
      %s116 = sphi 0, %s114
      %s117 = sphi 0, %s116
      %s131 = sphi 0, %s117
      %s135 = sphi 0, %s135
      %s137 = sphi 0, %s135
      %s138 = sphi 0, %s137
      %s152 = sphi 0, %s138
      %s156 = sphi 0, %s156
      %s158 = sphi 0, %s156
      %s159 = sphi 0, %s158
      %s173 = sphi 0, %s159
      %s179 = sphi 0, %s181
      %s182 = sphi 0, %s179
      %s183 = sphi 0, %s182
      %s199 = sphi 0, %s183
    $region4: #{_lambda_.1} parent=1 // loop_header_branch
      %20 = sbr.rel (%p18) target = $region8
    $region5: #{_lambda_.1} parent=1 // loop_body
      %s22 = ssub.s32 %s17, 1
      %s23 = ssub.s32 %s17, 2
      %s24 = sadd.s32 %s17, 1
      %s25 = ssub.s32 %s17, %s24
      %p26 = scmp.eq.s32.totalorder %s25, 0
      %s28 = sadd.s32 %s27, 1
      %s29 = scalar_select %p26, %s27, %s28
      %p32 = pneg %p26
      %p33 = scmp.eq.s32.totalorder %s17, 1
      %p34 = por %p32, %p33
      %p35 = scmp.ne.s32.totalorder %s27, %s30
      %p36 = scmp.eq.s32.totalorder %s17, 0
      %p37 = por %p35, %p36
      %p38 = scmp.ne.s32.totalorder %s27, %s30
      %p39 = scmp.eq.s32.totalorder %s22, 1
      %p40 = por %p38, %p39
      %p41 = scmp.ne.s32.totalorder %s30, %s31
      %p42 = scmp.eq.s32.totalorder %s22, 0
      %p43 = por %p41, %p42
      %p44 = scmp.ne.s32.totalorder %s30, %s31
      %p45 = scmp.eq.s32.totalorder %s23, 1
      %p46 = por %p44, %p45
      %p48 = scmp.ne.s32.totalorder %s31, %s47
      %p49 = scmp.eq.s32.totalorder %s23, 0
      %p50 = por %p48, %p49
      %s52 = sadd.s32 %s51, 1
      %p55 = scmp.eq.s32.totalorder %s17, 1
      %p56 = scmp.ne.s32.totalorder %s51, %s53
      %p57 = scmp.eq.s32.totalorder %s17, 0
      %p58 = por %p56, %p57
      %p59 = scmp.ne.s32.totalorder %s51, %s53
      %p60 = scmp.eq.s32.totalorder %s22, 1
      %p61 = por %p59, %p60
      %p62 = scmp.ne.s32.totalorder %s53, %s54
      %p63 = scmp.eq.s32.totalorder %s22, 0
      %p64 = por %p62, %p63
      %p65 = scmp.ne.s32.totalorder %s53, %s54
      %p66 = scmp.eq.s32.totalorder %s23, 1
      %p67 = por %p65, %p66
      %p69 = scmp.ne.s32.totalorder %s54, %s68
      %p70 = scmp.eq.s32.totalorder %s23, 0
      %p71 = por %p69, %p70
      %s73 = sadd.s32 %s72, 1
      %p76 = scmp.eq.s32.totalorder %s17, 1
      %p77 = scmp.ne.s32.totalorder %s72, %s74
      %p78 = scmp.eq.s32.totalorder %s17, 0
      %p79 = por %p77, %p78
      %p80 = scmp.ne.s32.totalorder %s72, %s74
      %p81 = scmp.eq.s32.totalorder %s22, 1
      %p82 = por %p80, %p81
      %p83 = scmp.ne.s32.totalorder %s74, %s75
      %p84 = scmp.eq.s32.totalorder %s22, 0
      %p85 = por %p83, %p84
      %p86 = scmp.ne.s32.totalorder %s74, %s75
      %p87 = scmp.eq.s32.totalorder %s23, 1
      %p88 = por %p86, %p87
      %p90 = scmp.ne.s32.totalorder %s75, %s89
      %p91 = scmp.eq.s32.totalorder %s23, 0
      %p92 = por %p90, %p91
      %s94 = sadd.s32 %s93, 1
      %p97 = scmp.eq.s32.totalorder %s17, 1
      %p98 = scmp.ne.s32.totalorder %s93, %s95
      %p99 = scmp.eq.s32.totalorder %s17, 0
      %p100 = por %p98, %p99
      %p101 = scmp.ne.s32.totalorder %s93, %s95
      %p102 = scmp.eq.s32.totalorder %s22, 1
      %p103 = por %p101, %p102
      %p104 = scmp.ne.s32.totalorder %s95, %s96
      %p105 = scmp.eq.s32.totalorder %s22, 0
      %p106 = por %p104, %p105
      %p107 = scmp.ne.s32.totalorder %s95, %s96
      %p108 = scmp.eq.s32.totalorder %s23, 1
      %p109 = por %p107, %p108
      %p111 = scmp.ne.s32.totalorder %s96, %s110
      %p112 = scmp.eq.s32.totalorder %s23, 0
      %p113 = por %p111, %p112
      %s115 = sadd.s32 %s114, 1
      %p118 = scmp.eq.s32.totalorder %s17, 1
      %p119 = scmp.ne.s32.totalorder %s114, %s116
      %p120 = scmp.eq.s32.totalorder %s17, 0
      %p121 = por %p119, %p120
      %p122 = scmp.ne.s32.totalorder %s114, %s116
      %p123 = scmp.eq.s32.totalorder %s22, 1
      %p124 = por %p122, %p123
      %p125 = scmp.ne.s32.totalorder %s116, %s117
      %p126 = scmp.eq.s32.totalorder %s22, 0
      %p127 = por %p125, %p126
      %p128 = scmp.ne.s32.totalorder %s116, %s117
      %p129 = scmp.eq.s32.totalorder %s23, 1
      %p130 = por %p128, %p129
      %p132 = scmp.ne.s32.totalorder %s117, %s131
      %p133 = scmp.eq.s32.totalorder %s23, 0
      %p134 = por %p132, %p133
      %s136 = sadd.s32 %s135, 1
      %p139 = scmp.eq.s32.totalorder %s17, 1
      %p140 = scmp.ne.s32.totalorder %s135, %s137
      %p141 = scmp.eq.s32.totalorder %s17, 0
      %p142 = por %p140, %p141
      %p143 = scmp.ne.s32.totalorder %s135, %s137
      %p144 = scmp.eq.s32.totalorder %s22, 1
      %p145 = por %p143, %p144
      %p146 = scmp.ne.s32.totalorder %s137, %s138
      %p147 = scmp.eq.s32.totalorder %s22, 0
      %p148 = por %p146, %p147
      %p149 = scmp.ne.s32.totalorder %s137, %s138
      %p150 = scmp.eq.s32.totalorder %s23, 1
      %p151 = por %p149, %p150
      %p153 = scmp.ne.s32.totalorder %s138, %s152
      %p154 = scmp.eq.s32.totalorder %s23, 0
      %p155 = por %p153, %p154
      %s157 = sadd.s32 %s156, 1
      %p160 = scmp.eq.s32.totalorder %s17, 1
      %p161 = scmp.ne.s32.totalorder %s156, %s158
      %p162 = scmp.eq.s32.totalorder %s17, 0
      %p163 = por %p161, %p162
      %p164 = scmp.ne.s32.totalorder %s156, %s158
      %p165 = scmp.eq.s32.totalorder %s22, 1
      %p166 = por %p164, %p165
      %p167 = scmp.ne.s32.totalorder %s158, %s159
      %p168 = scmp.eq.s32.totalorder %s22, 0
      %p169 = por %p167, %p168
      %p170 = scmp.ne.s32.totalorder %s158, %s159
      %p171 = scmp.eq.s32.totalorder %s23, 1
      %p172 = por %p170, %p171
      %p174 = scmp.ne.s32.totalorder %s159, %s173
      %p175 = scmp.eq.s32.totalorder %s23, 0
      %p176 = por %p174, %p175
      %s177 = ssub.s32 %s17, %s24
      %p178 = scmp.eq.s32.totalorder %s177, 0
      %s180 = sadd.s32 %s179, 1
      %s181 = scalar_select %p178, %s179, %s180
      %p184 = pneg %p178
      %p185 = scmp.eq.s32.totalorder %s17, 1
      %p186 = por %p184, %p185
      %p187 = scmp.ne.s32.totalorder %s179, %s182
      %p188 = scmp.eq.s32.totalorder %s17, 0
      %p189 = por %p187, %p188
      %p190 = scmp.ne.s32.totalorder %s179, %s182
      %p191 = scmp.eq.s32.totalorder %s22, 1
      %p192 = por %p190, %p191
      %p193 = scmp.ne.s32.totalorder %s182, %s183
      %p194 = scmp.eq.s32.totalorder %s22, 0
      %p195 = por %p193, %p194
      %p196 = scmp.ne.s32.totalorder %s182, %s183
      %p197 = scmp.eq.s32.totalorder %s23, 1
      %p198 = por %p196, %p197
      %p200 = scmp.ne.s32.totalorder %s183, %s199
      %p201 = scmp.eq.s32.totalorder %s23, 0
      %p202 = por %p200, %p201
      %p203 = scmp.le.s32.totalorder 1, %s17
      %p204 = scmp.lt.s32.totalorder %s17, 3
      %p205 = pnand %p203, %p204
      %p206 = pneg %p205
      // Predicated region
      $region9: #{_lambda_.1} parent=5 // pred_check
        _
      $region10: #{_lambda_.1} parent=5 // pred_check_branch
        %208 = sbr.rel (%p205) target = $region12
      $region11: #{_lambda_.1} parent=5 // pred_region
        %s209 = ssub.s32 %s17, 1
        // Predicated region
        $region13: #{_lambda_.1} parent=11 // pred_check
          %p210 = pneg %p64
        $region14: #{_lambda_.1} parent=11 // pred_check_branch
          %212 = sbr.rel (%p210) target = $region16
        $region15: #{_lambda_.1} parent=11 // pred_region
          _
        $region16: #{_lambda_.1} parent=11 // pred_fallthru
          _
        // Predicated region
        $region17: #{_lambda_.1} parent=11 // pred_check
          %p213 = pneg %p85
        $region18: #{_lambda_.1} parent=11 // pred_check_branch
          %215 = sbr.rel (%p213) target = $region20
        $region19: #{_lambda_.1} parent=11 // pred_region
          _
        $region20: #{_lambda_.1} parent=11 // pred_fallthru
          _
        // Predicated region
        $region21: #{_lambda_.1} parent=11 // pred_check
          %p216 = pneg %p106
        $region22: #{_lambda_.1} parent=11 // pred_check_branch
          %218 = sbr.rel (%p216) target = $region24
        $region23: #{_lambda_.1} parent=11 // pred_region
          _
        $region24: #{_lambda_.1} parent=11 // pred_fallthru
          _
        // Predicated region
        $region25: #{_lambda_.1} parent=11 // pred_check
          %p219 = pneg %p127
        $region26: #{_lambda_.1} parent=11 // pred_check_branch
          %221 = sbr.rel (%p219) target = $region28
        $region27: #{_lambda_.1} parent=11 // pred_region
          %223 = vsyncadd [#allocation3], 0
          %s224 = sshll.u32 %s4, 4
          %s225 = int_to_ptr.hbm [resolvable:$true] %s224
          %s226 = sshll.u32 [#allocation2], 4
          %s227 = int_to_ptr.vmem [resolvable:$true] %s226
          %232 = dma.hbm_to_vmem [thread:$0]  %s225, 2048, %s227, [#allocation3], 64, 64, 4
        $region28: #{_lambda_.1} parent=11 // pred_fallthru
          _
        // Predicated region
        $region29: #{_lambda_.1} parent=11 // pred_check
          %p233 = pneg %p148
        $region30: #{_lambda_.1} parent=11 // pred_check_branch
          %235 = sbr.rel (%p233) target = $region32
        $region31: #{_lambda_.1} parent=11 // pred_region
          _
        $region32: #{_lambda_.1} parent=11 // pred_fallthru
          _
        // Predicated region
        $region33: #{_lambda_.1} parent=11 // pred_check
          %p236 = pneg %p169
        $region34: #{_lambda_.1} parent=11 // pred_check_branch
          %238 = sbr.rel (%p236) target = $region36
        $region35: #{_lambda_.1} parent=11 // pred_region
          _
        $region36: #{_lambda_.1} parent=11 // pred_fallthru
          _
      $region12: #{_lambda_.1} parent=5 // pred_fallthru
        _
      %p239 = scmp.lt.s32.totalorder %s17, 2
      // Predicated region
      $region37: #{_lambda_.1} parent=5 // pred_check
        %p240 = pneg %p239
      $region38: #{_lambda_.1} parent=5 // pred_check_branch
        %242 = sbr.rel (%p240) target = $region40
      $region39: #{_lambda_.1} parent=5 // pred_region
        // Predicated region
        $region41: #{_lambda_.1} parent=39 // pred_check
          %p243 = pneg %p37
        $region42: #{_lambda_.1} parent=39 // pred_check_branch
          %245 = sbr.rel (%p243) target = $region44
        $region43: #{_lambda_.1} parent=39 // pred_region
          %s246 = smul.u32 2, %s17
          %p247 = scmp.lt.s32.totalorder %s246, 3
          %s248 = scalar_select %p247, %s246, 3
          %s249 = smul.addr %s248, 16
          %s250 = smul.addr %s249, 4
          %s251 = scalar_lea.vmem %s0, %s250
          %s252 = smul.u32 2, %s17
        $region44: #{_lambda_.1} parent=39 // pred_fallthru
          _
      $region40: #{_lambda_.1} parent=5 // pred_fallthru
        _
      %p253 = scmp.le.s32.totalorder 1, %s17
      %p254 = scmp.lt.s32.totalorder %s17, 3
      %p255 = pnand %p253, %p254
      %p256 = pneg %p255
      // Predicated region
      $region45: #{_lambda_.1} parent=5 // pred_check
        _
      $region46: #{_lambda_.1} parent=5 // pred_check_branch
        %258 = sbr.rel (%p255) target = $region48
      $region47: #{_lambda_.1} parent=5 // pred_region
        %s259 = ssub.s32 %s17, 1
        // Predicated region
        $region49: #{_lambda_.1} parent=47 // pred_check
          %p260 = pneg %p127
        $region50: #{_lambda_.1} parent=47 // pred_check_branch
          %262 = sbr.rel (%p260) target = $region52
        $region51: #{_lambda_.1} parent=47 // pred_region
          %264 = dma.done [#allocation3], 2048
        $region52: #{_lambda_.1} parent=47 // pred_fallthru
          _
        %s265 = smul.u32 2, %s22
        %p266 = scmp.lt.s32.totalorder %s265, 3
        %s267 = scalar_select %p266, %s265, 3
        %s268 = smul.addr %s267, 16
        %s269 = smul.addr %s268, 4
        %s270 = scalar_lea.vmem %s0, %s269
        %p271 = pneg %p43
        %p272 = pneg %p40
        %p273 = pneg %p64
        %p274 = pneg %p61
        %p275 = pneg %p85
        %p276 = pneg %p82
        %p277 = pneg %p106
        %p278 = pneg %p103
        %p279 = pneg %p127
        %p280 = pneg %p124
        %p281 = pneg %p148
        %p282 = pneg %p145
        %p283 = pneg %p169
        %p284 = pneg %p166
        %p285 = pneg %p195
        %p286 = pneg %p192
        %s287 = sand.u32 %s182, 1
        %s288 = scalar_lea.sflag [#allocation4], %s287
        %s289 = sand.u32 %s182, 1
        %s290 = smul.addr %s289, 256
        %s291 = scalar_lea.vmem [#allocation5], %s290
        %s292 = smul.u32 2, %s22
        %p293 = scmp.lt.s32.totalorder %s292, 3
        %s294 = scalar_select %p293, %s292, 3
        %s295 = smul.addr %s294, 16
        %s296 = smul.addr %s295, 4
        %s297 = scalar_lea.vmem %s0, %s296
        %s298 = smul.u32 2, %s22
        %s299 = smul.u32 2, %s22
        %v300 = vld [vmem:[%s297] sm:$0xf]
        %v301 = vld [vmem:[%s297 + $0x4] sm:$0xf]
        %v302 = vld [vmem:[%s297 + $0x8] sm:$0xf]
        %v303 = vld [vmem:[%s297 + $0xc] sm:$0xf]
        %v304 = vld [vmem:[%s297 + $0x10] sm:$0xf]
        %v305 = vld [vmem:[%s297 + $0x14] sm:$0xf]
        %v306 = vld [vmem:[%s297 + $0x18] sm:$0xf]
        %v307 = vld [vmem:[%s297 + $0x1c] sm:$0xf]
        %v308 = vld [vmem:[%s297 + $0x20] sm:$0xf]
        %v309 = vld [vmem:[%s297 + $0x24] sm:$0xf]
        %v310 = vld [vmem:[%s297 + $0x28] sm:$0xf]
        %v311 = vld [vmem:[%s297 + $0x2c] sm:$0xf]
        %v312 = vld [vmem:[%s297 + $0x30] sm:$0xf]
        %v313 = vld [vmem:[%s297 + $0x34] sm:$0xf]
        %v314 = vld [vmem:[%s297 + $0x38] sm:$0xf]
        %v315 = vld [vmem:[%s297 + $0x3c] sm:$0xf]
        %v316 = vld [vmem:[%s297 + $0x40] sm:$0xf]
        %v317 = vld [vmem:[%s297 + $0x44] sm:$0xf]
        %v318 = vld [vmem:[%s297 + $0x48] sm:$0xf]
        %v319 = vld [vmem:[%s297 + $0x4c] sm:$0xf]
        %v320 = vld [vmem:[%s297 + $0x50] sm:$0xf]
        %v321 = vld [vmem:[%s297 + $0x54] sm:$0xf]
        %v322 = vld [vmem:[%s297 + $0x58] sm:$0xf]
        %v323 = vld [vmem:[%s297 + $0x5c] sm:$0xf]
        %v324 = vld [vmem:[%s297 + $0x60] sm:$0xf]
        %v325 = vld [vmem:[%s297 + $0x64] sm:$0xf]
        %v326 = vld [vmem:[%s297 + $0x68] sm:$0xf]
        %v327 = vld [vmem:[%s297 + $0x6c] sm:$0xf]
        %v328 = vld [vmem:[%s297 + $0x70] sm:$0xf]
        %v329 = vld [vmem:[%s297 + $0x74] sm:$0xf]
        %v330 = vld [vmem:[%s297 + $0x78] sm:$0xf]
        %v331 = vld [vmem:[%s297 + $0x7c] sm:$0xf]
        %v332 = vld [vmem:[%s1] sm:$0xff]
        %v333 = vld [vmem:[%s1 + $0x8] sm:$0xff]
        %v334 = vld [vmem:[%s1 + $0x10] sm:$0xff]
        %v335 = vld [vmem:[%s1 + $0x18] sm:$0xff]
        %v336 = vld [vmem:[%s1 + $0x20] sm:$0xff]
        %v337 = vld [vmem:[%s1 + $0x28] sm:$0xff]
        %v338 = vld [vmem:[%s1 + $0x30] sm:$0xff]
        %v339 = vld [vmem:[%s1 + $0x38] sm:$0xff]
        %v340 = vld [vmem:[%s1 + $0x40] sm:$0xff]
        %v341 = vld [vmem:[%s1 + $0x48] sm:$0xff]
        %v342 = vld [vmem:[%s1 + $0x50] sm:$0xff]
        %v343 = vld [vmem:[%s1 + $0x58] sm:$0xff]
        %v344 = vld [vmem:[%s1 + $0x60] sm:$0xff]
        %v345 = vld [vmem:[%s1 + $0x68] sm:$0xff]
        %v346 = vld [vmem:[%s1 + $0x70] sm:$0xff]
        %v347 = vld [vmem:[%s1 + $0x78] sm:$0xff]
        %v348 = vld [vmem:[%s1 + $0x80] sm:$0xff]
        %v349 = vld [vmem:[%s1 + $0x88] sm:$0xff]
        %v350 = vld [vmem:[%s1 + $0x90] sm:$0xff]
        %v351 = vld [vmem:[%s1 + $0x98] sm:$0xff]
        %v352 = vld [vmem:[%s1 + $0xa0] sm:$0xff]
        %v353 = vld [vmem:[%s1 + $0xa8] sm:$0xff]
        %v354 = vld [vmem:[%s1 + $0xb0] sm:$0xff]
        %v355 = vld [vmem:[%s1 + $0xb8] sm:$0xff]
        %v356 = vld [vmem:[%s1 + $0xc0] sm:$0xff]
        %v357 = vld [vmem:[%s1 + $0xc8] sm:$0xff]
        %v358 = vld [vmem:[%s1 + $0xd0] sm:$0xff]
        %v359 = vld [vmem:[%s1 + $0xd8] sm:$0xff]
        %v360 = vld [vmem:[%s1 + $0xe0] sm:$0xff]
        %v361 = vld [vmem:[%s1 + $0xe8] sm:$0xff]
        %v362 = vld [vmem:[%s1 + $0xf0] sm:$0xff]
        %v363 = vld [vmem:[%s1 + $0xf8] sm:$0xff]
        %v364 = vld [vmem:[%s2] sm:$0xf]
        %v366 = vperm.slane %v364, 0
        %v367 = vperm.slane %v364, 1
        %v368 = vperm.slane %v364, 2
        %v369 = vperm.slane %v364, 3
        %v406 = vunpack.c.l.b16 %v300
        %v407 = vunpack.c.l.b16 %v301
        %v408 = vunpack.c.l.b16 %v302
        %v409 = vunpack.c.l.b16 %v303
        %v410 = vunpack.c.l.b16 %v304
        %v411 = vunpack.c.l.b16 %v305
        %v412 = vunpack.c.l.b16 %v306
        %v413 = vunpack.c.l.b16 %v307
        %v414 = vunpack.c.l.b16 %v308
        %v415 = vunpack.c.l.b16 %v309
        %v416 = vunpack.c.l.b16 %v310
        %v417 = vunpack.c.l.b16 %v311
        %v418 = vunpack.c.l.b16 %v312
        %v419 = vunpack.c.l.b16 %v313
        %v420 = vunpack.c.l.b16 %v314
        %v421 = vunpack.c.l.b16 %v315
        %v422 = vunpack.c.l.b16 %v316
        %v423 = vunpack.c.l.b16 %v317
        %v424 = vunpack.c.l.b16 %v318
        %v425 = vunpack.c.l.b16 %v319
        %v426 = vunpack.c.l.b16 %v320
        %v427 = vunpack.c.l.b16 %v321
        %v428 = vunpack.c.l.b16 %v322
        %v429 = vunpack.c.l.b16 %v323
        %v430 = vunpack.c.l.b16 %v324
        %v431 = vunpack.c.l.b16 %v325
        %v432 = vunpack.c.l.b16 %v326
        %v433 = vunpack.c.l.b16 %v327
        %v434 = vunpack.c.l.b16 %v328
        %v435 = vunpack.c.l.b16 %v329
        %v436 = vunpack.c.l.b16 %v330
        %v437 = vunpack.c.l.b16 %v331
        %v438 = vpack.c.b16 %v407, %v406
        %v439 = vpack.c.b16 %v409, %v408
        %v440 = vpack.c.b16 %v411, %v410
        %v441 = vpack.c.b16 %v413, %v412
        %v442 = vpack.c.b16 %v415, %v414
        %v443 = vpack.c.b16 %v417, %v416
        %v444 = vpack.c.b16 %v419, %v418
        %v445 = vpack.c.b16 %v421, %v420
        %v446 = vpack.c.b16 %v423, %v422
        %v447 = vpack.c.b16 %v425, %v424
        %v448 = vpack.c.b16 %v427, %v426
        %v449 = vpack.c.b16 %v429, %v428
        %v450 = vpack.c.b16 %v431, %v430
        %v451 = vpack.c.b16 %v433, %v432
        %v452 = vpack.c.b16 %v435, %v434
        %v453 = vpack.c.b16 %v437, %v436
        %v502 = vunpack.c.l.b16 %v332
        %v503 = vunpack.c.h.b16 %v332
        %v504 = vunpack.c.l.b16 %v333
        %v505 = vunpack.c.h.b16 %v333
        %v506 = vunpack.c.l.b16 %v334
        %v507 = vunpack.c.h.b16 %v334
        %v508 = vunpack.c.l.b16 %v335
        %v509 = vunpack.c.h.b16 %v335
        %v510 = vunpack.c.l.b16 %v336
        %v511 = vunpack.c.h.b16 %v336
        %v512 = vunpack.c.l.b16 %v337
        %v513 = vunpack.c.h.b16 %v337
        %v514 = vunpack.c.l.b16 %v338
        %v515 = vunpack.c.h.b16 %v338
        %v516 = vunpack.c.l.b16 %v339
        %v517 = vunpack.c.h.b16 %v339
        %v518 = vunpack.c.l.b16 %v340
        %v519 = vunpack.c.h.b16 %v340
        %v520 = vunpack.c.l.b16 %v341
        %v521 = vunpack.c.h.b16 %v341
        %v522 = vunpack.c.l.b16 %v342
        %v523 = vunpack.c.h.b16 %v342
        %v524 = vunpack.c.l.b16 %v343
        %v525 = vunpack.c.h.b16 %v343
        %v526 = vunpack.c.l.b16 %v344
        %v527 = vunpack.c.h.b16 %v344
        %v528 = vunpack.c.l.b16 %v345
        %v529 = vunpack.c.h.b16 %v345
        %v530 = vunpack.c.l.b16 %v346
        %v531 = vunpack.c.h.b16 %v346
        %v532 = vunpack.c.l.b16 %v347
        %v533 = vunpack.c.h.b16 %v347
        %v534 = vunpack.c.l.b16 %v348
        %v535 = vunpack.c.h.b16 %v348
        %v536 = vunpack.c.l.b16 %v349
        %v537 = vunpack.c.h.b16 %v349
        %v538 = vunpack.c.l.b16 %v350
        %v539 = vunpack.c.h.b16 %v350
        %v540 = vunpack.c.l.b16 %v351
        %v541 = vunpack.c.h.b16 %v351
        %v542 = vunpack.c.l.b16 %v352
        %v543 = vunpack.c.h.b16 %v352
        %v544 = vunpack.c.l.b16 %v353
        %v545 = vunpack.c.h.b16 %v353
        %v546 = vunpack.c.l.b16 %v354
        %v547 = vunpack.c.h.b16 %v354
        %v548 = vunpack.c.l.b16 %v355
        %v549 = vunpack.c.h.b16 %v355
        %v550 = vunpack.c.l.b16 %v356
        %v551 = vunpack.c.h.b16 %v356
        %v552 = vunpack.c.l.b16 %v357
        %v553 = vunpack.c.h.b16 %v357
        %v554 = vunpack.c.l.b16 %v358
        %v555 = vunpack.c.h.b16 %v358
        %v556 = vunpack.c.l.b16 %v359
        %v557 = vunpack.c.h.b16 %v359
        %v558 = vunpack.c.l.b16 %v360
        %v559 = vunpack.c.h.b16 %v360
        %v560 = vunpack.c.l.b16 %v361
        %v561 = vunpack.c.h.b16 %v361
        %v562 = vunpack.c.l.b16 %v362
        %v563 = vunpack.c.h.b16 %v362
        %v564 = vunpack.c.l.b16 %v363
        %v565 = vunpack.c.h.b16 %v363
        %v566 = vpack.c.b16 %v506, %v502
        %v567 = vpack.c.b16 %v507, %v503
        %v568 = vpack.c.b16 %v508, %v504
        %v569 = vpack.c.b16 %v509, %v505
        %v570 = vpack.c.b16 %v514, %v510
        %v571 = vpack.c.b16 %v515, %v511
        %v572 = vpack.c.b16 %v516, %v512
        %v573 = vpack.c.b16 %v517, %v513
        %v574 = vpack.c.b16 %v522, %v518
        %v575 = vpack.c.b16 %v523, %v519
        %v576 = vpack.c.b16 %v524, %v520
        %v577 = vpack.c.b16 %v525, %v521
        %v578 = vpack.c.b16 %v530, %v526
        %v579 = vpack.c.b16 %v531, %v527
        %v580 = vpack.c.b16 %v532, %v528
        %v581 = vpack.c.b16 %v533, %v529
        %v582 = vpack.c.b16 %v538, %v534
        %v583 = vpack.c.b16 %v539, %v535
        %v584 = vpack.c.b16 %v540, %v536
        %v585 = vpack.c.b16 %v541, %v537
        %v586 = vpack.c.b16 %v546, %v542
        %v587 = vpack.c.b16 %v547, %v543
        %v588 = vpack.c.b16 %v548, %v544
        %v589 = vpack.c.b16 %v549, %v545
        %v590 = vpack.c.b16 %v554, %v550
        %v591 = vpack.c.b16 %v555, %v551
        %v592 = vpack.c.b16 %v556, %v552
        %v593 = vpack.c.b16 %v557, %v553
        %v594 = vpack.c.b16 %v562, %v558
        %v595 = vpack.c.b16 %v563, %v559
        %v596 = vpack.c.b16 %v564, %v560
        %v597 = vpack.c.b16 %v565, %v561
        %630 = vmatpush.bf16.msra.mxu0 %v594
        %631 = vmatpush.bf16.msra.mxu0 %v590
        %632 = vmatpush.bf16.msra.mxu0 %v586
        %633 = vmatpush.bf16.msra.mxu0 %v582
        %634 = vmatpush.bf16.msra.mxu0 %v578
        %635 = vmatpush.bf16.msra.mxu0 %v574
        %636 = vmatpush.bf16.msra.mxu0 %v570
        %637 = vmatpush.bf16.msra.mxu0 %v566
        %638 = vmatmul.bf16.gmra.mxu0 %v438
        %v639 = vpop.f32.mrf.mxu0
        %v640 = vadd.f32 %v366, %v639
        %v641 = vpop.f32.mrf.mxu0
        %v642 = vadd.f32 %v366, %v641
        %643 = vmatmul.bf16.gmra.mxu0 %v439
        %v644 = vpop.f32.mrf.mxu0
        %v645 = vadd.f32 %v366, %v644
        %v646 = vpop.f32.mrf.mxu0
        %v647 = vadd.f32 %v366, %v646
        %648 = vmatmul.bf16.gmra.mxu0 %v440
        %v649 = vpop.f32.mrf.mxu0
        %v650 = vadd.f32 %v366, %v649
        %v651 = vpop.f32.mrf.mxu0
        %v652 = vadd.f32 %v366, %v651
        %653 = vmatmul.bf16.gmra.mxu0 %v441
        %v654 = vpop.f32.mrf.mxu0
        %v655 = vadd.f32 %v366, %v654
        %v656 = vpop.f32.mrf.mxu0
        %v657 = vadd.f32 %v366, %v656
        %658 = vmatmul.bf16.gmra.mxu0 %v442
        %v659 = vpop.f32.mrf.mxu0
        %v660 = vadd.f32 %v366, %v659
        %v661 = vpop.f32.mrf.mxu0
        %v662 = vadd.f32 %v366, %v661
        %663 = vmatmul.bf16.gmra.mxu0 %v443
        %v664 = vpop.f32.mrf.mxu0
        %v665 = vadd.f32 %v366, %v664
        %v666 = vpop.f32.mrf.mxu0
        %v667 = vadd.f32 %v366, %v666
        %668 = vmatmul.bf16.gmra.mxu0 %v444
        %v669 = vpop.f32.mrf.mxu0
        %v670 = vadd.f32 %v366, %v669
        %v671 = vpop.f32.mrf.mxu0
        %v672 = vadd.f32 %v366, %v671
        %673 = vmatmul.bf16.gmra.mxu0 %v445
        %v674 = vpop.f32.mrf.mxu0
        %v675 = vadd.f32 %v366, %v674
        %v676 = vpop.f32.mrf.mxu0
        %v677 = vadd.f32 %v366, %v676
        %678 = vmatmul.bf16.gmra.mxu0 %v446
        %v679 = vpop.f32.mrf.mxu0
        %v680 = vadd.f32 %v366, %v679
        %v681 = vpop.f32.mrf.mxu0
        %v682 = vadd.f32 %v366, %v681
        %683 = vmatmul.bf16.gmra.mxu0 %v447
        %v684 = vpop.f32.mrf.mxu0
        %v685 = vadd.f32 %v366, %v684
        %v686 = vpop.f32.mrf.mxu0
        %v687 = vadd.f32 %v366, %v686
        %688 = vmatmul.bf16.gmra.mxu0 %v448
        %v689 = vpop.f32.mrf.mxu0
        %v690 = vadd.f32 %v366, %v689
        %v691 = vpop.f32.mrf.mxu0
        %v692 = vadd.f32 %v366, %v691
        %693 = vmatmul.bf16.gmra.mxu0 %v449
        %v694 = vpop.f32.mrf.mxu0
        %v695 = vadd.f32 %v366, %v694
        %v696 = vpop.f32.mrf.mxu0
        %v697 = vadd.f32 %v366, %v696
        %698 = vmatmul.bf16.gmra.mxu0 %v450
        %v699 = vpop.f32.mrf.mxu0
        %v700 = vadd.f32 %v366, %v699
        %v701 = vpop.f32.mrf.mxu0
        %v702 = vadd.f32 %v366, %v701
        %703 = vmatmul.bf16.gmra.mxu0 %v451
        %v704 = vpop.f32.mrf.mxu0
        %v705 = vadd.f32 %v366, %v704
        %v706 = vpop.f32.mrf.mxu0
        %v707 = vadd.f32 %v366, %v706
        %708 = vmatmul.bf16.gmra.mxu0 %v452
        %v709 = vpop.f32.mrf.mxu0
        %v710 = vadd.f32 %v366, %v709
        %v711 = vpop.f32.mrf.mxu0
        %v712 = vadd.f32 %v366, %v711
        %713 = vmatmul.bf16.gmra.mxu0 %v453
        %v714 = vpop.f32.mrf.mxu0
        %v715 = vadd.f32 %v366, %v714
        %v716 = vpop.f32.mrf.mxu0
        %v717 = vadd.f32 %v366, %v716
        %718 = vdwg.mxu0
        %719 = vmatpush.bf16.msra.mxu0 %v595
        %720 = vmatpush.bf16.msra.mxu0 %v591
        %721 = vmatpush.bf16.msra.mxu0 %v587
        %722 = vmatpush.bf16.msra.mxu0 %v583
        %723 = vmatpush.bf16.msra.mxu0 %v579
        %724 = vmatpush.bf16.msra.mxu0 %v575
        %725 = vmatpush.bf16.msra.mxu0 %v571
        %726 = vmatpush.bf16.msra.mxu0 %v567
        %727 = vmatmul.bf16.gmra.mxu0 %v438
        %v728 = vpop.f32.mrf.mxu0
        %v729 = vadd.f32 %v367, %v728
        %v730 = vpop.f32.mrf.mxu0
        %v731 = vadd.f32 %v367, %v730
        %732 = vmatmul.bf16.gmra.mxu0 %v439
        %v733 = vpop.f32.mrf.mxu0
        %v734 = vadd.f32 %v367, %v733
        %v735 = vpop.f32.mrf.mxu0
        %v736 = vadd.f32 %v367, %v735
        %737 = vmatmul.bf16.gmra.mxu0 %v440
        %v738 = vpop.f32.mrf.mxu0
        %v739 = vadd.f32 %v367, %v738
        %v740 = vpop.f32.mrf.mxu0
        %v741 = vadd.f32 %v367, %v740
        %742 = vmatmul.bf16.gmra.mxu0 %v441
        %v743 = vpop.f32.mrf.mxu0
        %v744 = vadd.f32 %v367, %v743
        %v745 = vpop.f32.mrf.mxu0
        %v746 = vadd.f32 %v367, %v745
        %747 = vmatmul.bf16.gmra.mxu0 %v442
        %v748 = vpop.f32.mrf.mxu0
        %v749 = vadd.f32 %v367, %v748
        %v750 = vpop.f32.mrf.mxu0
        %v751 = vadd.f32 %v367, %v750
        %752 = vmatmul.bf16.gmra.mxu0 %v443
        %v753 = vpop.f32.mrf.mxu0
        %v754 = vadd.f32 %v367, %v753
        %v755 = vpop.f32.mrf.mxu0
        %v756 = vadd.f32 %v367, %v755
        %757 = vmatmul.bf16.gmra.mxu0 %v444
        %v758 = vpop.f32.mrf.mxu0
        %v759 = vadd.f32 %v367, %v758
        %v760 = vpop.f32.mrf.mxu0
        %v761 = vadd.f32 %v367, %v760
        %762 = vmatmul.bf16.gmra.mxu0 %v445
        %v763 = vpop.f32.mrf.mxu0
        %v764 = vadd.f32 %v367, %v763
        %v765 = vpop.f32.mrf.mxu0
        %v766 = vadd.f32 %v367, %v765
        %767 = vmatmul.bf16.gmra.mxu0 %v446
        %v768 = vpop.f32.mrf.mxu0
        %v769 = vadd.f32 %v367, %v768
        %v770 = vpop.f32.mrf.mxu0
        %v771 = vadd.f32 %v367, %v770
        %772 = vmatmul.bf16.gmra.mxu0 %v447
        %v773 = vpop.f32.mrf.mxu0
        %v774 = vadd.f32 %v367, %v773
        %v775 = vpop.f32.mrf.mxu0
        %v776 = vadd.f32 %v367, %v775
        %777 = vmatmul.bf16.gmra.mxu0 %v448
        %v778 = vpop.f32.mrf.mxu0
        %v779 = vadd.f32 %v367, %v778
        %v780 = vpop.f32.mrf.mxu0
        %v781 = vadd.f32 %v367, %v780
        %782 = vmatmul.bf16.gmra.mxu0 %v449
        %v783 = vpop.f32.mrf.mxu0
        %v784 = vadd.f32 %v367, %v783
        %v785 = vpop.f32.mrf.mxu0
        %v786 = vadd.f32 %v367, %v785
        %787 = vmatmul.bf16.gmra.mxu0 %v450
        %v788 = vpop.f32.mrf.mxu0
        %v789 = vadd.f32 %v367, %v788
        %v790 = vpop.f32.mrf.mxu0
        %v791 = vadd.f32 %v367, %v790
        %792 = vmatmul.bf16.gmra.mxu0 %v451
        %v793 = vpop.f32.mrf.mxu0
        %v794 = vadd.f32 %v367, %v793
        %v795 = vpop.f32.mrf.mxu0
        %v796 = vadd.f32 %v367, %v795
        %797 = vmatmul.bf16.gmra.mxu0 %v452
        %v798 = vpop.f32.mrf.mxu0
        %v799 = vadd.f32 %v367, %v798
        %v800 = vpop.f32.mrf.mxu0
        %v801 = vadd.f32 %v367, %v800
        %802 = vmatmul.bf16.gmra.mxu0 %v453
        %v803 = vpop.f32.mrf.mxu0
        %v804 = vadd.f32 %v367, %v803
        %v805 = vpop.f32.mrf.mxu0
        %v806 = vadd.f32 %v367, %v805
        %807 = vdwg.mxu0
        %808 = vmatpush.bf16.msra.mxu0 %v596
        %809 = vmatpush.bf16.msra.mxu0 %v592
        %810 = vmatpush.bf16.msra.mxu0 %v588
        %811 = vmatpush.bf16.msra.mxu0 %v584
        %812 = vmatpush.bf16.msra.mxu0 %v580
        %813 = vmatpush.bf16.msra.mxu0 %v576
        %814 = vmatpush.bf16.msra.mxu0 %v572
        %815 = vmatpush.bf16.msra.mxu0 %v568
        %816 = vmatmul.bf16.gmra.mxu0 %v438
        %v817 = vpop.f32.mrf.mxu0
        %v818 = vadd.f32 %v368, %v817
        %v819 = vpop.f32.mrf.mxu0
        %v820 = vadd.f32 %v368, %v819
        %821 = vmatmul.bf16.gmra.mxu0 %v439
        %v822 = vpop.f32.mrf.mxu0
        %v823 = vadd.f32 %v368, %v822
        %v824 = vpop.f32.mrf.mxu0
        %v825 = vadd.f32 %v368, %v824
        %826 = vmatmul.bf16.gmra.mxu0 %v440
        %v827 = vpop.f32.mrf.mxu0
        %v828 = vadd.f32 %v368, %v827
        %v829 = vpop.f32.mrf.mxu0
        %v830 = vadd.f32 %v368, %v829
        %831 = vmatmul.bf16.gmra.mxu0 %v441
        %v832 = vpop.f32.mrf.mxu0
        %v833 = vadd.f32 %v368, %v832
        %v834 = vpop.f32.mrf.mxu0
        %v835 = vadd.f32 %v368, %v834
        %836 = vmatmul.bf16.gmra.mxu0 %v442
        %v837 = vpop.f32.mrf.mxu0
        %v838 = vadd.f32 %v368, %v837
        %v839 = vpop.f32.mrf.mxu0
        %v840 = vadd.f32 %v368, %v839
        %841 = vmatmul.bf16.gmra.mxu0 %v443
        %v842 = vpop.f32.mrf.mxu0
        %v843 = vadd.f32 %v368, %v842
        %v844 = vpop.f32.mrf.mxu0
        %v845 = vadd.f32 %v368, %v844
        %846 = vmatmul.bf16.gmra.mxu0 %v444
        %v847 = vpop.f32.mrf.mxu0
        %v848 = vadd.f32 %v368, %v847
        %v849 = vpop.f32.mrf.mxu0
        %v850 = vadd.f32 %v368, %v849
        %851 = vmatmul.bf16.gmra.mxu0 %v445
        %v852 = vpop.f32.mrf.mxu0
        %v853 = vadd.f32 %v368, %v852
        %v854 = vpop.f32.mrf.mxu0
        %v855 = vadd.f32 %v368, %v854
        %856 = vmatmul.bf16.gmra.mxu0 %v446
        %v857 = vpop.f32.mrf.mxu0
        %v858 = vadd.f32 %v368, %v857
        %v859 = vpop.f32.mrf.mxu0
        %v860 = vadd.f32 %v368, %v859
        %861 = vmatmul.bf16.gmra.mxu0 %v447
        %v862 = vpop.f32.mrf.mxu0
        %v863 = vadd.f32 %v368, %v862
        %v864 = vpop.f32.mrf.mxu0
        %v865 = vadd.f32 %v368, %v864
        %866 = vmatmul.bf16.gmra.mxu0 %v448
        %v867 = vpop.f32.mrf.mxu0
        %v868 = vadd.f32 %v368, %v867
        %v869 = vpop.f32.mrf.mxu0
        %v870 = vadd.f32 %v368, %v869
        %871 = vmatmul.bf16.gmra.mxu0 %v449
        %v872 = vpop.f32.mrf.mxu0
        %v873 = vadd.f32 %v368, %v872
        %v874 = vpop.f32.mrf.mxu0
        %v875 = vadd.f32 %v368, %v874
        %876 = vmatmul.bf16.gmra.mxu0 %v450
        %v877 = vpop.f32.mrf.mxu0
        %v878 = vadd.f32 %v368, %v877
        %v879 = vpop.f32.mrf.mxu0
        %v880 = vadd.f32 %v368, %v879
        %881 = vmatmul.bf16.gmra.mxu0 %v451
        %v882 = vpop.f32.mrf.mxu0
        %v883 = vadd.f32 %v368, %v882
        %v884 = vpop.f32.mrf.mxu0
        %v885 = vadd.f32 %v368, %v884
        %886 = vmatmul.bf16.gmra.mxu0 %v452
        %v887 = vpop.f32.mrf.mxu0
        %v888 = vadd.f32 %v368, %v887
        %v889 = vpop.f32.mrf.mxu0
        %v890 = vadd.f32 %v368, %v889
        %891 = vmatmul.bf16.gmra.mxu0 %v453
        %v892 = vpop.f32.mrf.mxu0
        %v893 = vadd.f32 %v368, %v892
        %v894 = vpop.f32.mrf.mxu0
        %v895 = vadd.f32 %v368, %v894
        %896 = vdwg.mxu0
        %897 = vmatpush.bf16.msra.mxu0 %v597
        %898 = vmatpush.bf16.msra.mxu0 %v593
        %899 = vmatpush.bf16.msra.mxu0 %v589
        %900 = vmatpush.bf16.msra.mxu0 %v585
        %901 = vmatpush.bf16.msra.mxu0 %v581
        %902 = vmatpush.bf16.msra.mxu0 %v577
        %903 = vmatpush.bf16.msra.mxu0 %v573
        %904 = vmatpush.bf16.msra.mxu0 %v569
        %905 = vmatmul.bf16.gmra.mxu0 %v438
        %v906 = vpop.f32.mrf.mxu0
        %v907 = vadd.f32 %v369, %v906
        %v908 = vpop.f32.mrf.mxu0
        %v909 = vadd.f32 %v369, %v908
        %910 = vmatmul.bf16.gmra.mxu0 %v439
        %v911 = vpop.f32.mrf.mxu0
        %v912 = vadd.f32 %v369, %v911
        %v913 = vpop.f32.mrf.mxu0
        %v914 = vadd.f32 %v369, %v913
        %915 = vmatmul.bf16.gmra.mxu0 %v440
        %v916 = vpop.f32.mrf.mxu0
        %v917 = vadd.f32 %v369, %v916
        %v918 = vpop.f32.mrf.mxu0
        %v919 = vadd.f32 %v369, %v918
        %920 = vmatmul.bf16.gmra.mxu0 %v441
        %v921 = vpop.f32.mrf.mxu0
        %v922 = vadd.f32 %v369, %v921
        %v923 = vpop.f32.mrf.mxu0
        %v924 = vadd.f32 %v369, %v923
        %925 = vmatmul.bf16.gmra.mxu0 %v442
        %v926 = vpop.f32.mrf.mxu0
        %v927 = vadd.f32 %v369, %v926
        %v928 = vpop.f32.mrf.mxu0
        %v929 = vadd.f32 %v369, %v928
        %930 = vmatmul.bf16.gmra.mxu0 %v443
        %v931 = vpop.f32.mrf.mxu0
        %v932 = vadd.f32 %v369, %v931
        %v933 = vpop.f32.mrf.mxu0
        %v934 = vadd.f32 %v369, %v933
        %935 = vmatmul.bf16.gmra.mxu0 %v444
        %v936 = vpop.f32.mrf.mxu0
        %v937 = vadd.f32 %v369, %v936
        %v938 = vpop.f32.mrf.mxu0
        %v939 = vadd.f32 %v369, %v938
        %940 = vmatmul.bf16.gmra.mxu0 %v445
        %v941 = vpop.f32.mrf.mxu0
        %v942 = vadd.f32 %v369, %v941
        %v943 = vpop.f32.mrf.mxu0
        %v944 = vadd.f32 %v369, %v943
        %945 = vmatmul.bf16.gmra.mxu0 %v446
        %v946 = vpop.f32.mrf.mxu0
        %v947 = vadd.f32 %v369, %v946
        %v948 = vpop.f32.mrf.mxu0
        %v949 = vadd.f32 %v369, %v948
        %950 = vmatmul.bf16.gmra.mxu0 %v447
        %v951 = vpop.f32.mrf.mxu0
        %v952 = vadd.f32 %v369, %v951
        %v953 = vpop.f32.mrf.mxu0
        %v954 = vadd.f32 %v369, %v953
        %955 = vmatmul.bf16.gmra.mxu0 %v448
        %v956 = vpop.f32.mrf.mxu0
        %v957 = vadd.f32 %v369, %v956
        %v958 = vpop.f32.mrf.mxu0
        %v959 = vadd.f32 %v369, %v958
        %960 = vmatmul.bf16.gmra.mxu0 %v449
        %v961 = vpop.f32.mrf.mxu0
        %v962 = vadd.f32 %v369, %v961
        %v963 = vpop.f32.mrf.mxu0
        %v964 = vadd.f32 %v369, %v963
        %965 = vmatmul.bf16.gmra.mxu0 %v450
        %v966 = vpop.f32.mrf.mxu0
        %v967 = vadd.f32 %v369, %v966
        %v968 = vpop.f32.mrf.mxu0
        %v969 = vadd.f32 %v369, %v968
        %970 = vmatmul.bf16.gmra.mxu0 %v451
        %v971 = vpop.f32.mrf.mxu0
        %v972 = vadd.f32 %v369, %v971
        %v973 = vpop.f32.mrf.mxu0
        %v974 = vadd.f32 %v369, %v973
        %975 = vmatmul.bf16.gmra.mxu0 %v452
        %v976 = vpop.f32.mrf.mxu0
        %v977 = vadd.f32 %v369, %v976
        %v978 = vpop.f32.mrf.mxu0
        %v979 = vadd.f32 %v369, %v978
        %980 = vmatmul.bf16.gmra.mxu0 %v453
        %v981 = vpop.f32.mrf.mxu0
        %v982 = vadd.f32 %v369, %v981
        %v983 = vpop.f32.mrf.mxu0
        %v984 = vadd.f32 %v369, %v983
        %985 = vdwg.mxu0
        %v986 = vmax.f32 %v640, 0.0
        %v987 = vmax.f32 %v729, 0.0
        %v988 = vmax.f32 %v818, 0.0
        %v989 = vmax.f32 %v907, 0.0
        %v990 = vmax.f32 %v642, 0.0
        %v991 = vmax.f32 %v731, 0.0
        %v992 = vmax.f32 %v820, 0.0
        %v993 = vmax.f32 %v909, 0.0
        %v994 = vmax.f32 %v645, 0.0
        %v995 = vmax.f32 %v734, 0.0
        %v996 = vmax.f32 %v823, 0.0
        %v997 = vmax.f32 %v912, 0.0
        %v998 = vmax.f32 %v647, 0.0
        %v999 = vmax.f32 %v736, 0.0
        %v1000 = vmax.f32 %v825, 0.0
        %v1001 = vmax.f32 %v914, 0.0
        %v1002 = vmax.f32 %v650, 0.0
        %v1003 = vmax.f32 %v739, 0.0
        %v1004 = vmax.f32 %v828, 0.0
        %v1005 = vmax.f32 %v917, 0.0
        %v1006 = vmax.f32 %v652, 0.0
        %v1007 = vmax.f32 %v741, 0.0
        %v1008 = vmax.f32 %v830, 0.0
        %v1009 = vmax.f32 %v919, 0.0
        %v1010 = vmax.f32 %v655, 0.0
        %v1011 = vmax.f32 %v744, 0.0
        %v1012 = vmax.f32 %v833, 0.0
        %v1013 = vmax.f32 %v922, 0.0
        %v1014 = vmax.f32 %v657, 0.0
        %v1015 = vmax.f32 %v746, 0.0
        %v1016 = vmax.f32 %v835, 0.0
        %v1017 = vmax.f32 %v924, 0.0
        %v1018 = vmax.f32 %v660, 0.0
        %v1019 = vmax.f32 %v749, 0.0
        %v1020 = vmax.f32 %v838, 0.0
        %v1021 = vmax.f32 %v927, 0.0
        %v1022 = vmax.f32 %v662, 0.0
        %v1023 = vmax.f32 %v751, 0.0
        %v1024 = vmax.f32 %v840, 0.0
        %v1025 = vmax.f32 %v929, 0.0
        %v1026 = vmax.f32 %v665, 0.0
        %v1027 = vmax.f32 %v754, 0.0
        %v1028 = vmax.f32 %v843, 0.0
        %v1029 = vmax.f32 %v932, 0.0
        %v1030 = vmax.f32 %v667, 0.0
        %v1031 = vmax.f32 %v756, 0.0
        %v1032 = vmax.f32 %v845, 0.0
        %v1033 = vmax.f32 %v934, 0.0
        %v1034 = vmax.f32 %v670, 0.0
        %v1035 = vmax.f32 %v759, 0.0
        %v1036 = vmax.f32 %v848, 0.0
        %v1037 = vmax.f32 %v937, 0.0
        %v1038 = vmax.f32 %v672, 0.0
        %v1039 = vmax.f32 %v761, 0.0
        %v1040 = vmax.f32 %v850, 0.0
        %v1041 = vmax.f32 %v939, 0.0
        %v1042 = vmax.f32 %v675, 0.0
        %v1043 = vmax.f32 %v764, 0.0
        %v1044 = vmax.f32 %v853, 0.0
        %v1045 = vmax.f32 %v942, 0.0
        %v1046 = vmax.f32 %v677, 0.0
        %v1047 = vmax.f32 %v766, 0.0
        %v1048 = vmax.f32 %v855, 0.0
        %v1049 = vmax.f32 %v944, 0.0
        %v1050 = vmax.f32 %v680, 0.0
        %v1051 = vmax.f32 %v769, 0.0
        %v1052 = vmax.f32 %v858, 0.0
        %v1053 = vmax.f32 %v947, 0.0
        %v1054 = vmax.f32 %v682, 0.0
        %v1055 = vmax.f32 %v771, 0.0
        %v1056 = vmax.f32 %v860, 0.0
        %v1057 = vmax.f32 %v949, 0.0
        %v1058 = vmax.f32 %v685, 0.0
        %v1059 = vmax.f32 %v774, 0.0
        %v1060 = vmax.f32 %v863, 0.0
        %v1061 = vmax.f32 %v952, 0.0
        %v1062 = vmax.f32 %v687, 0.0
        %v1063 = vmax.f32 %v776, 0.0
        %v1064 = vmax.f32 %v865, 0.0
        %v1065 = vmax.f32 %v954, 0.0
        %v1066 = vmax.f32 %v690, 0.0
        %v1067 = vmax.f32 %v779, 0.0
        %v1068 = vmax.f32 %v868, 0.0
        %v1069 = vmax.f32 %v957, 0.0
        %v1070 = vmax.f32 %v692, 0.0
        %v1071 = vmax.f32 %v781, 0.0
        %v1072 = vmax.f32 %v870, 0.0
        %v1073 = vmax.f32 %v959, 0.0
        %v1074 = vmax.f32 %v695, 0.0
        %v1075 = vmax.f32 %v784, 0.0
        %v1076 = vmax.f32 %v873, 0.0
        %v1077 = vmax.f32 %v962, 0.0
        %v1078 = vmax.f32 %v697, 0.0
        %v1079 = vmax.f32 %v786, 0.0
        %v1080 = vmax.f32 %v875, 0.0
        %v1081 = vmax.f32 %v964, 0.0
        %v1082 = vmax.f32 %v700, 0.0
        %v1083 = vmax.f32 %v789, 0.0
        %v1084 = vmax.f32 %v878, 0.0
        %v1085 = vmax.f32 %v967, 0.0
        %v1086 = vmax.f32 %v702, 0.0
        %v1087 = vmax.f32 %v791, 0.0
        %v1088 = vmax.f32 %v880, 0.0
        %v1089 = vmax.f32 %v969, 0.0
        %v1090 = vmax.f32 %v705, 0.0
        %v1091 = vmax.f32 %v794, 0.0
        %v1092 = vmax.f32 %v883, 0.0
        %v1093 = vmax.f32 %v972, 0.0
        %v1094 = vmax.f32 %v707, 0.0
        %v1095 = vmax.f32 %v796, 0.0
        %v1096 = vmax.f32 %v885, 0.0
        %v1097 = vmax.f32 %v974, 0.0
        %v1098 = vmax.f32 %v710, 0.0
        %v1099 = vmax.f32 %v799, 0.0
        %v1100 = vmax.f32 %v888, 0.0
        %v1101 = vmax.f32 %v977, 0.0
        %v1102 = vmax.f32 %v712, 0.0
        %v1103 = vmax.f32 %v801, 0.0
        %v1104 = vmax.f32 %v890, 0.0
        %v1105 = vmax.f32 %v979, 0.0
        %v1106 = vmax.f32 %v715, 0.0
        %v1107 = vmax.f32 %v804, 0.0
        %v1108 = vmax.f32 %v893, 0.0
        %v1109 = vmax.f32 %v982, 0.0
        %v1110 = vmax.f32 %v717, 0.0
        %v1111 = vmax.f32 %v806, 0.0
        %v1112 = vmax.f32 %v895, 0.0
        %v1113 = vmax.f32 %v984, 0.0
        %v1114 = vlaneseq
        %v1115 = vshrl.u32 %v1114, 7
        %v1116 = vadd.s32 %v1115, 8
        %v1117 = vadd.s32 %v1115, 16
        %v1118 = vadd.s32 %v1115, 24
        %v1119 = vadd.s32 %v1115, 32
        %v1120 = vadd.s32 %v1115, 40
        %v1121 = vadd.s32 %v1115, 48
        %v1122 = vadd.s32 %v1115, 56
        %v1123 = vadd.s32 %v1115, 64
        %v1124 = vadd.s32 %v1115, 72
        %v1125 = vadd.s32 %v1115, 80
        %v1126 = vadd.s32 %v1115, 88
        %v1127 = vadd.s32 %v1115, 96
        %v1128 = vadd.s32 %v1115, 104
        %v1129 = vadd.s32 %v1115, 112
        %v1130 = vadd.s32 %v1115, 120
        %v1131 = vadd.s32 %v1115, 128
        %v1132 = vadd.s32 %v1115, 136
        %v1133 = vadd.s32 %v1115, 144
        %v1134 = vadd.s32 %v1115, 152
        %v1135 = vadd.s32 %v1115, 160
        %v1136 = vadd.s32 %v1115, 168
        %v1137 = vadd.s32 %v1115, 176
        %v1138 = vadd.s32 %v1115, 184
        %v1139 = vadd.s32 %v1115, 192
        %v1140 = vadd.s32 %v1115, 200
        %v1141 = vadd.s32 %v1115, 208
        %v1142 = vadd.s32 %v1115, 216
        %v1143 = vadd.s32 %v1115, 224
        %v1144 = vadd.s32 %v1115, 232
        %v1145 = vadd.s32 %v1115, 240
        %v1146 = vadd.s32 %v1115, 248
        %vm1147 = vcmp.lt.s32.totalorder %v1115, 0
        %v1148 = vsub.s32 0, %v1115
        %v1149 = vsel %vm1147, %v1148, %v1115
        %v1150 = vshrl.u32 %v1149, 7
        %v1151 = vand.u32 %v1149, 127
        %v1152 = vsub.s32 0, %v1151
        %v1153 = vsel %vm1147, %v1152, %v1151
        %vm1154 = vcmp.lt.s32.totalorder %v1116, 0
        %v1155 = vsub.s32 0, %v1116
        %v1156 = vsel %vm1154, %v1155, %v1116
        %v1157 = vshrl.u32 %v1156, 7
        %v1158 = vand.u32 %v1156, 127
        %v1159 = vsub.s32 0, %v1158
        %v1160 = vsel %vm1154, %v1159, %v1158
        %vm1161 = vcmp.lt.s32.totalorder %v1117, 0
        %v1162 = vsub.s32 0, %v1117
        %v1163 = vsel %vm1161, %v1162, %v1117
        %v1164 = vshrl.u32 %v1163, 7
        %v1165 = vand.u32 %v1163, 127
        %v1166 = vsub.s32 0, %v1165
        %v1167 = vsel %vm1161, %v1166, %v1165
        %vm1168 = vcmp.lt.s32.totalorder %v1118, 0
        %v1169 = vsub.s32 0, %v1118
        %v1170 = vsel %vm1168, %v1169, %v1118
        %v1171 = vshrl.u32 %v1170, 7
        %v1172 = vand.u32 %v1170, 127
        %v1173 = vsub.s32 0, %v1172
        %v1174 = vsel %vm1168, %v1173, %v1172
        %vm1175 = vcmp.lt.s32.totalorder %v1119, 0
        %v1176 = vsub.s32 0, %v1119
        %v1177 = vsel %vm1175, %v1176, %v1119
        %v1178 = vshrl.u32 %v1177, 7
        %v1179 = vand.u32 %v1177, 127
        %v1180 = vsub.s32 0, %v1179
        %v1181 = vsel %vm1175, %v1180, %v1179
        %vm1182 = vcmp.lt.s32.totalorder %v1120, 0
        %v1183 = vsub.s32 0, %v1120
        %v1184 = vsel %vm1182, %v1183, %v1120
        %v1185 = vshrl.u32 %v1184, 7
        %v1186 = vand.u32 %v1184, 127
        %v1187 = vsub.s32 0, %v1186
        %v1188 = vsel %vm1182, %v1187, %v1186
        %vm1189 = vcmp.lt.s32.totalorder %v1121, 0
        %v1190 = vsub.s32 0, %v1121
        %v1191 = vsel %vm1189, %v1190, %v1121
        %v1192 = vshrl.u32 %v1191, 7
        %v1193 = vand.u32 %v1191, 127
        %v1194 = vsub.s32 0, %v1193
        %v1195 = vsel %vm1189, %v1194, %v1193
        %vm1196 = vcmp.lt.s32.totalorder %v1122, 0
        %v1197 = vsub.s32 0, %v1122
        %v1198 = vsel %vm1196, %v1197, %v1122
        %v1199 = vshrl.u32 %v1198, 7
        %v1200 = vand.u32 %v1198, 127
        %v1201 = vsub.s32 0, %v1200
        %v1202 = vsel %vm1196, %v1201, %v1200
        %vm1203 = vcmp.lt.s32.totalorder %v1123, 0
        %v1204 = vsub.s32 0, %v1123
        %v1205 = vsel %vm1203, %v1204, %v1123
        %v1206 = vshrl.u32 %v1205, 7
        %v1207 = vand.u32 %v1205, 127
        %v1208 = vsub.s32 0, %v1207
        %v1209 = vsel %vm1203, %v1208, %v1207
        %vm1210 = vcmp.lt.s32.totalorder %v1124, 0
        %v1211 = vsub.s32 0, %v1124
        %v1212 = vsel %vm1210, %v1211, %v1124
        %v1213 = vshrl.u32 %v1212, 7
        %v1214 = vand.u32 %v1212, 127
        %v1215 = vsub.s32 0, %v1214
        %v1216 = vsel %vm1210, %v1215, %v1214
        %vm1217 = vcmp.lt.s32.totalorder %v1125, 0
        %v1218 = vsub.s32 0, %v1125
        %v1219 = vsel %vm1217, %v1218, %v1125
        %v1220 = vshrl.u32 %v1219, 7
        %v1221 = vand.u32 %v1219, 127
        %v1222 = vsub.s32 0, %v1221
        %v1223 = vsel %vm1217, %v1222, %v1221
        %vm1224 = vcmp.lt.s32.totalorder %v1126, 0
        %v1225 = vsub.s32 0, %v1126
        %v1226 = vsel %vm1224, %v1225, %v1126
        %v1227 = vshrl.u32 %v1226, 7
        %v1228 = vand.u32 %v1226, 127
        %v1229 = vsub.s32 0, %v1228
        %v1230 = vsel %vm1224, %v1229, %v1228
        %vm1231 = vcmp.lt.s32.totalorder %v1127, 0
        %v1232 = vsub.s32 0, %v1127
        %v1233 = vsel %vm1231, %v1232, %v1127
        %v1234 = vshrl.u32 %v1233, 7
        %v1235 = vand.u32 %v1233, 127
        %v1236 = vsub.s32 0, %v1235
        %v1237 = vsel %vm1231, %v1236, %v1235
        %vm1238 = vcmp.lt.s32.totalorder %v1128, 0
        %v1239 = vsub.s32 0, %v1128
        %v1240 = vsel %vm1238, %v1239, %v1128
        %v1241 = vshrl.u32 %v1240, 7
        %v1242 = vand.u32 %v1240, 127
        %v1243 = vsub.s32 0, %v1242
        %v1244 = vsel %vm1238, %v1243, %v1242
        %vm1245 = vcmp.lt.s32.totalorder %v1129, 0
        %v1246 = vsub.s32 0, %v1129
        %v1247 = vsel %vm1245, %v1246, %v1129
        %v1248 = vshrl.u32 %v1247, 7
        %v1249 = vand.u32 %v1247, 127
        %v1250 = vsub.s32 0, %v1249
        %v1251 = vsel %vm1245, %v1250, %v1249
        %vm1252 = vcmp.lt.s32.totalorder %v1130, 0
        %v1253 = vsub.s32 0, %v1130
        %v1254 = vsel %vm1252, %v1253, %v1130
        %v1255 = vshrl.u32 %v1254, 7
        %v1256 = vand.u32 %v1254, 127
        %v1257 = vsub.s32 0, %v1256
        %v1258 = vsel %vm1252, %v1257, %v1256
        %vm1259 = vcmp.lt.s32.totalorder %v1131, 0
        %v1260 = vsub.s32 0, %v1131
        %v1261 = vsel %vm1259, %v1260, %v1131
        %v1262 = vshrl.u32 %v1261, 7
        %v1263 = vand.u32 %v1261, 127
        %v1264 = vsub.s32 0, %v1263
        %v1265 = vsel %vm1259, %v1264, %v1263
        %vm1266 = vcmp.lt.s32.totalorder %v1132, 0
        %v1267 = vsub.s32 0, %v1132
        %v1268 = vsel %vm1266, %v1267, %v1132
        %v1269 = vshrl.u32 %v1268, 7
        %v1270 = vand.u32 %v1268, 127
        %v1271 = vsub.s32 0, %v1270
        %v1272 = vsel %vm1266, %v1271, %v1270
        %vm1273 = vcmp.lt.s32.totalorder %v1133, 0
        %v1274 = vsub.s32 0, %v1133
        %v1275 = vsel %vm1273, %v1274, %v1133
        %v1276 = vshrl.u32 %v1275, 7
        %v1277 = vand.u32 %v1275, 127
        %v1278 = vsub.s32 0, %v1277
        %v1279 = vsel %vm1273, %v1278, %v1277
        %vm1280 = vcmp.lt.s32.totalorder %v1134, 0
        %v1281 = vsub.s32 0, %v1134
        %v1282 = vsel %vm1280, %v1281, %v1134
        %v1283 = vshrl.u32 %v1282, 7
        %v1284 = vand.u32 %v1282, 127
        %v1285 = vsub.s32 0, %v1284
        %v1286 = vsel %vm1280, %v1285, %v1284
        %vm1287 = vcmp.lt.s32.totalorder %v1135, 0
        %v1288 = vsub.s32 0, %v1135
        %v1289 = vsel %vm1287, %v1288, %v1135
        %v1290 = vshrl.u32 %v1289, 7
        %v1291 = vand.u32 %v1289, 127
        %v1292 = vsub.s32 0, %v1291
        %v1293 = vsel %vm1287, %v1292, %v1291
        %vm1294 = vcmp.lt.s32.totalorder %v1136, 0
        %v1295 = vsub.s32 0, %v1136
        %v1296 = vsel %vm1294, %v1295, %v1136
        %v1297 = vshrl.u32 %v1296, 7
        %v1298 = vand.u32 %v1296, 127
        %v1299 = vsub.s32 0, %v1298
        %v1300 = vsel %vm1294, %v1299, %v1298
        %vm1301 = vcmp.lt.s32.totalorder %v1137, 0
        %v1302 = vsub.s32 0, %v1137
        %v1303 = vsel %vm1301, %v1302, %v1137
        %v1304 = vshrl.u32 %v1303, 7
        %v1305 = vand.u32 %v1303, 127
        %v1306 = vsub.s32 0, %v1305
        %v1307 = vsel %vm1301, %v1306, %v1305
        %vm1308 = vcmp.lt.s32.totalorder %v1138, 0
        %v1309 = vsub.s32 0, %v1138
        %v1310 = vsel %vm1308, %v1309, %v1138
        %v1311 = vshrl.u32 %v1310, 7
        %v1312 = vand.u32 %v1310, 127
        %v1313 = vsub.s32 0, %v1312
        %v1314 = vsel %vm1308, %v1313, %v1312
        %vm1315 = vcmp.lt.s32.totalorder %v1139, 0
        %v1316 = vsub.s32 0, %v1139
        %v1317 = vsel %vm1315, %v1316, %v1139
        %v1318 = vshrl.u32 %v1317, 7
        %v1319 = vand.u32 %v1317, 127
        %v1320 = vsub.s32 0, %v1319
        %v1321 = vsel %vm1315, %v1320, %v1319
        %vm1322 = vcmp.lt.s32.totalorder %v1140, 0
        %v1323 = vsub.s32 0, %v1140
        %v1324 = vsel %vm1322, %v1323, %v1140
        %v1325 = vshrl.u32 %v1324, 7
        %v1326 = vand.u32 %v1324, 127
        %v1327 = vsub.s32 0, %v1326
        %v1328 = vsel %vm1322, %v1327, %v1326
        %vm1329 = vcmp.lt.s32.totalorder %v1141, 0
        %v1330 = vsub.s32 0, %v1141
        %v1331 = vsel %vm1329, %v1330, %v1141
        %v1332 = vshrl.u32 %v1331, 7
        %v1333 = vand.u32 %v1331, 127
        %v1334 = vsub.s32 0, %v1333
        %v1335 = vsel %vm1329, %v1334, %v1333
        %vm1336 = vcmp.lt.s32.totalorder %v1142, 0
        %v1337 = vsub.s32 0, %v1142
        %v1338 = vsel %vm1336, %v1337, %v1142
        %v1339 = vshrl.u32 %v1338, 7
        %v1340 = vand.u32 %v1338, 127
        %v1341 = vsub.s32 0, %v1340
        %v1342 = vsel %vm1336, %v1341, %v1340
        %vm1343 = vcmp.lt.s32.totalorder %v1143, 0
        %v1344 = vsub.s32 0, %v1143
        %v1345 = vsel %vm1343, %v1344, %v1143
        %v1346 = vshrl.u32 %v1345, 7
        %v1347 = vand.u32 %v1345, 127
        %v1348 = vsub.s32 0, %v1347
        %v1349 = vsel %vm1343, %v1348, %v1347
        %vm1350 = vcmp.lt.s32.totalorder %v1144, 0
        %v1351 = vsub.s32 0, %v1144
        %v1352 = vsel %vm1350, %v1351, %v1144
        %v1353 = vshrl.u32 %v1352, 7
        %v1354 = vand.u32 %v1352, 127
        %v1355 = vsub.s32 0, %v1354
        %v1356 = vsel %vm1350, %v1355, %v1354
        %vm1357 = vcmp.lt.s32.totalorder %v1145, 0
        %v1358 = vsub.s32 0, %v1145
        %v1359 = vsel %vm1357, %v1358, %v1145
        %v1360 = vshrl.u32 %v1359, 7
        %v1361 = vand.u32 %v1359, 127
        %v1362 = vsub.s32 0, %v1361
        %v1363 = vsel %vm1357, %v1362, %v1361
        %vm1364 = vcmp.lt.s32.totalorder %v1146, 0
        %v1365 = vsub.s32 0, %v1146
        %v1366 = vsel %vm1364, %v1365, %v1146
        %v1367 = vshrl.u32 %v1366, 7
        %v1368 = vand.u32 %v1366, 127
        %v1369 = vsub.s32 0, %v1368
        %v1370 = vsel %vm1364, %v1369, %v1368
        %vm1371 = vcmp.ne.s32.totalorder %v1153, 0
        %vm1372 = vcmp.ne.s32.totalorder %v1160, 0
        %vm1373 = vcmp.ne.s32.totalorder %v1167, 0
        %vm1374 = vcmp.ne.s32.totalorder %v1174, 0
        %vm1375 = vcmp.ne.s32.totalorder %v1181, 0
        %vm1376 = vcmp.ne.s32.totalorder %v1188, 0
        %vm1377 = vcmp.ne.s32.totalorder %v1195, 0
        %vm1378 = vcmp.ne.s32.totalorder %v1202, 0
        %vm1379 = vcmp.ne.s32.totalorder %v1209, 0
        %vm1380 = vcmp.ne.s32.totalorder %v1216, 0
        %vm1381 = vcmp.ne.s32.totalorder %v1223, 0
        %vm1382 = vcmp.ne.s32.totalorder %v1230, 0
        %vm1383 = vcmp.ne.s32.totalorder %v1237, 0
        %vm1384 = vcmp.ne.s32.totalorder %v1244, 0
        %vm1385 = vcmp.ne.s32.totalorder %v1251, 0
        %vm1386 = vcmp.ne.s32.totalorder %v1258, 0
        %vm1387 = vcmp.ne.s32.totalorder %v1265, 0
        %vm1388 = vcmp.ne.s32.totalorder %v1272, 0
        %vm1389 = vcmp.ne.s32.totalorder %v1279, 0
        %vm1390 = vcmp.ne.s32.totalorder %v1286, 0
        %vm1391 = vcmp.ne.s32.totalorder %v1293, 0
        %vm1392 = vcmp.ne.s32.totalorder %v1300, 0
        %vm1393 = vcmp.ne.s32.totalorder %v1307, 0
        %vm1394 = vcmp.ne.s32.totalorder %v1314, 0
        %vm1395 = vcmp.ne.s32.totalorder %v1321, 0
        %vm1396 = vcmp.ne.s32.totalorder %v1328, 0
        %vm1397 = vcmp.ne.s32.totalorder %v1335, 0
        %vm1398 = vcmp.ne.s32.totalorder %v1342, 0
        %vm1399 = vcmp.ne.s32.totalorder %v1349, 0
        %vm1400 = vcmp.ne.s32.totalorder %v1356, 0
        %vm1401 = vcmp.ne.s32.totalorder %v1363, 0
        %vm1402 = vcmp.ne.s32.totalorder %v1370, 0
        %vm1403 = vcmp.lt.s32.totalorder %v1153, 0
        %vm1404 = vcmp.lt.s32.totalorder %v1160, 0
        %vm1405 = vcmp.lt.s32.totalorder %v1167, 0
        %vm1406 = vcmp.lt.s32.totalorder %v1174, 0
        %vm1407 = vcmp.lt.s32.totalorder %v1181, 0
        %vm1408 = vcmp.lt.s32.totalorder %v1188, 0
        %vm1409 = vcmp.lt.s32.totalorder %v1195, 0
        %vm1410 = vcmp.lt.s32.totalorder %v1202, 0
        %vm1411 = vcmp.lt.s32.totalorder %v1209, 0
        %vm1412 = vcmp.lt.s32.totalorder %v1216, 0
        %vm1413 = vcmp.lt.s32.totalorder %v1223, 0
        %vm1414 = vcmp.lt.s32.totalorder %v1230, 0
        %vm1415 = vcmp.lt.s32.totalorder %v1237, 0
        %vm1416 = vcmp.lt.s32.totalorder %v1244, 0
        %vm1417 = vcmp.lt.s32.totalorder %v1251, 0
        %vm1418 = vcmp.lt.s32.totalorder %v1258, 0
        %vm1419 = vcmp.lt.s32.totalorder %v1265, 0
        %vm1420 = vcmp.lt.s32.totalorder %v1272, 0
        %vm1421 = vcmp.lt.s32.totalorder %v1279, 0
        %vm1422 = vcmp.lt.s32.totalorder %v1286, 0
        %vm1423 = vcmp.lt.s32.totalorder %v1293, 0
        %vm1424 = vcmp.lt.s32.totalorder %v1300, 0
        %vm1425 = vcmp.lt.s32.totalorder %v1307, 0
        %vm1426 = vcmp.lt.s32.totalorder %v1314, 0
        %vm1427 = vcmp.lt.s32.totalorder %v1321, 0
        %vm1428 = vcmp.lt.s32.totalorder %v1328, 0
        %vm1429 = vcmp.lt.s32.totalorder %v1335, 0
        %vm1430 = vcmp.lt.s32.totalorder %v1342, 0
        %vm1431 = vcmp.lt.s32.totalorder %v1349, 0
        %vm1432 = vcmp.lt.s32.totalorder %v1356, 0
        %vm1433 = vcmp.lt.s32.totalorder %v1363, 0
        %vm1434 = vcmp.lt.s32.totalorder %v1370, 0
        %vm1435 = vmand %vm1403, %vm1371
        %vm1436 = vmand %vm1404, %vm1372
        %vm1437 = vmand %vm1405, %vm1373
        %vm1438 = vmand %vm1406, %vm1374
        %vm1439 = vmand %vm1407, %vm1375
        %vm1440 = vmand %vm1408, %vm1376
        %vm1441 = vmand %vm1409, %vm1377
        %vm1442 = vmand %vm1410, %vm1378
        %vm1443 = vmand %vm1411, %vm1379
        %vm1444 = vmand %vm1412, %vm1380
        %vm1445 = vmand %vm1413, %vm1381
        %vm1446 = vmand %vm1414, %vm1382
        %vm1447 = vmand %vm1415, %vm1383
        %vm1448 = vmand %vm1416, %vm1384
        %vm1449 = vmand %vm1417, %vm1385
        %vm1450 = vmand %vm1418, %vm1386
        %vm1451 = vmand %vm1419, %vm1387
        %vm1452 = vmand %vm1420, %vm1388
        %vm1453 = vmand %vm1421, %vm1389
        %vm1454 = vmand %vm1422, %vm1390
        %vm1455 = vmand %vm1423, %vm1391
        %vm1456 = vmand %vm1424, %vm1392
        %vm1457 = vmand %vm1425, %vm1393
        %vm1458 = vmand %vm1426, %vm1394
        %vm1459 = vmand %vm1427, %vm1395
        %vm1460 = vmand %vm1428, %vm1396
        %vm1461 = vmand %vm1429, %vm1397
        %vm1462 = vmand %vm1430, %vm1398
        %vm1463 = vmand %vm1431, %vm1399
        %vm1464 = vmand %vm1432, %vm1400
        %vm1465 = vmand %vm1433, %vm1401
        %vm1466 = vmand %vm1434, %vm1402
        %v1467 = vadd.s32 %v1153, 128
        %v1468 = vadd.s32 %v1160, 128
        %v1469 = vadd.s32 %v1167, 128
        %v1470 = vadd.s32 %v1174, 128
        %v1471 = vadd.s32 %v1181, 128
        %v1472 = vadd.s32 %v1188, 128
        %v1473 = vadd.s32 %v1195, 128
        %v1474 = vadd.s32 %v1202, 128
        %v1475 = vadd.s32 %v1209, 128
        %v1476 = vadd.s32 %v1216, 128
        %v1477 = vadd.s32 %v1223, 128
        %v1478 = vadd.s32 %v1230, 128
        %v1479 = vadd.s32 %v1237, 128
        %v1480 = vadd.s32 %v1244, 128
        %v1481 = vadd.s32 %v1251, 128
        %v1482 = vadd.s32 %v1258, 128
        %v1483 = vadd.s32 %v1265, 128
        %v1484 = vadd.s32 %v1272, 128
        %v1485 = vadd.s32 %v1279, 128
        %v1486 = vadd.s32 %v1286, 128
        %v1487 = vadd.s32 %v1293, 128
        %v1488 = vadd.s32 %v1300, 128
        %v1489 = vadd.s32 %v1307, 128
        %v1490 = vadd.s32 %v1314, 128
        %v1491 = vadd.s32 %v1321, 128
        %v1492 = vadd.s32 %v1328, 128
        %v1493 = vadd.s32 %v1335, 128
        %v1494 = vadd.s32 %v1342, 128
        %v1495 = vadd.s32 %v1349, 128
        %v1496 = vadd.s32 %v1356, 128
        %v1497 = vadd.s32 %v1363, 128
        %v1498 = vadd.s32 %v1370, 128
        %v1499 = vsel %vm1435, %v1467, %v1153
        %v1500 = vsel %vm1436, %v1468, %v1160
        %v1501 = vsel %vm1437, %v1469, %v1167
        %v1502 = vsel %vm1438, %v1470, %v1174
        %v1503 = vsel %vm1439, %v1471, %v1181
        %v1504 = vsel %vm1440, %v1472, %v1188
        %v1505 = vsel %vm1441, %v1473, %v1195
        %v1506 = vsel %vm1442, %v1474, %v1202
        %v1507 = vsel %vm1443, %v1475, %v1209
        %v1508 = vsel %vm1444, %v1476, %v1216
        %v1509 = vsel %vm1445, %v1477, %v1223
        %v1510 = vsel %vm1446, %v1478, %v1230
        %v1511 = vsel %vm1447, %v1479, %v1237
        %v1512 = vsel %vm1448, %v1480, %v1244
        %v1513 = vsel %vm1449, %v1481, %v1251
        %v1514 = vsel %vm1450, %v1482, %v1258
        %v1515 = vsel %vm1451, %v1483, %v1265
        %v1516 = vsel %vm1452, %v1484, %v1272
        %v1517 = vsel %vm1453, %v1485, %v1279
        %v1518 = vsel %vm1454, %v1486, %v1286
        %v1519 = vsel %vm1455, %v1487, %v1293
        %v1520 = vsel %vm1456, %v1488, %v1300
        %v1521 = vsel %vm1457, %v1489, %v1307
        %v1522 = vsel %vm1458, %v1490, %v1314
        %v1523 = vsel %vm1459, %v1491, %v1321
        %v1524 = vsel %vm1460, %v1492, %v1328
        %v1525 = vsel %vm1461, %v1493, %v1335
        %v1526 = vsel %vm1462, %v1494, %v1342
        %v1527 = vsel %vm1463, %v1495, %v1349
        %v1528 = vsel %vm1464, %v1496, %v1356
        %v1529 = vsel %vm1465, %v1497, %v1363
        %v1530 = vsel %vm1466, %v1498, %v1370
        %vm1531 = vcmp.ge.s32.totalorder %v1499, 16
        %vm1532 = vcmp.ge.s32.totalorder %v1500, 16
        %vm1533 = vcmp.ge.s32.totalorder %v1501, 16
        %vm1534 = vcmp.ge.s32.totalorder %v1502, 16
        %vm1535 = vcmp.ge.s32.totalorder %v1503, 16
        %vm1536 = vcmp.ge.s32.totalorder %v1504, 16
        %vm1537 = vcmp.ge.s32.totalorder %v1505, 16
        %vm1538 = vcmp.ge.s32.totalorder %v1506, 16
        %vm1539 = vcmp.ge.s32.totalorder %v1507, 16
        %vm1540 = vcmp.ge.s32.totalorder %v1508, 16
        %vm1541 = vcmp.ge.s32.totalorder %v1509, 16
        %vm1542 = vcmp.ge.s32.totalorder %v1510, 16
        %vm1543 = vcmp.ge.s32.totalorder %v1511, 16
        %vm1544 = vcmp.ge.s32.totalorder %v1512, 16
        %vm1545 = vcmp.ge.s32.totalorder %v1513, 16
        %vm1546 = vcmp.ge.s32.totalorder %v1514, 16
        %vm1547 = vcmp.ge.s32.totalorder %v1515, 16
        %vm1548 = vcmp.ge.s32.totalorder %v1516, 16
        %vm1549 = vcmp.ge.s32.totalorder %v1517, 16
        %vm1550 = vcmp.ge.s32.totalorder %v1518, 16
        %vm1551 = vcmp.ge.s32.totalorder %v1519, 16
        %vm1552 = vcmp.ge.s32.totalorder %v1520, 16
        %vm1553 = vcmp.ge.s32.totalorder %v1521, 16
        %vm1554 = vcmp.ge.s32.totalorder %v1522, 16
        %vm1555 = vcmp.ge.s32.totalorder %v1523, 16
        %vm1556 = vcmp.ge.s32.totalorder %v1524, 16
        %vm1557 = vcmp.ge.s32.totalorder %v1525, 16
        %vm1558 = vcmp.ge.s32.totalorder %v1526, 16
        %vm1559 = vcmp.ge.s32.totalorder %v1527, 16
        %vm1560 = vcmp.ge.s32.totalorder %v1528, 16
        %vm1561 = vcmp.ge.s32.totalorder %v1529, 16
        %vm1562 = vcmp.ge.s32.totalorder %v1530, 16
        %v1563 = vsel %vm1531, 1, 0
        %v1564 = vsel %vm1532, 1, 0
        %v1565 = vsel %vm1533, 1, 0
        %v1566 = vsel %vm1534, 1, 0
        %v1567 = vsel %vm1535, 1, 0
        %v1568 = vsel %vm1536, 1, 0
        %v1569 = vsel %vm1537, 1, 0
        %v1570 = vsel %vm1538, 1, 0
        %v1571 = vsel %vm1539, 1, 0
        %v1572 = vsel %vm1540, 1, 0
        %v1573 = vsel %vm1541, 1, 0
        %v1574 = vsel %vm1542, 1, 0
        %v1575 = vsel %vm1543, 1, 0
        %v1576 = vsel %vm1544, 1, 0
        %v1577 = vsel %vm1545, 1, 0
        %v1578 = vsel %vm1546, 1, 0
        %v1579 = vsel %vm1547, 1, 0
        %v1580 = vsel %vm1548, 1, 0
        %v1581 = vsel %vm1549, 1, 0
        %v1582 = vsel %vm1550, 1, 0
        %v1583 = vsel %vm1551, 1, 0
        %v1584 = vsel %vm1552, 1, 0
        %v1585 = vsel %vm1553, 1, 0
        %v1586 = vsel %vm1554, 1, 0
        %v1587 = vsel %vm1555, 1, 0
        %v1588 = vsel %vm1556, 1, 0
        %v1589 = vsel %vm1557, 1, 0
        %v1590 = vsel %vm1558, 1, 0
        %v1591 = vsel %vm1559, 1, 0
        %v1592 = vsel %vm1560, 1, 0
        %v1593 = vsel %vm1561, 1, 0
        %v1594 = vsel %vm1562, 1, 0
        %v1595 = vcvt.s32.f32 %v1563
        %v1596 = vcvt.s32.f32 %v1564
        %v1597 = vcvt.s32.f32 %v1565
        %v1598 = vcvt.s32.f32 %v1566
        %v1599 = vcvt.s32.f32 %v1567
        %v1600 = vcvt.s32.f32 %v1568
        %v1601 = vcvt.s32.f32 %v1569
        %v1602 = vcvt.s32.f32 %v1570
        %v1603 = vcvt.s32.f32 %v1571
        %v1604 = vcvt.s32.f32 %v1572
        %v1605 = vcvt.s32.f32 %v1573
        %v1606 = vcvt.s32.f32 %v1574
        %v1607 = vcvt.s32.f32 %v1575
        %v1608 = vcvt.s32.f32 %v1576
        %v1609 = vcvt.s32.f32 %v1577
        %v1610 = vcvt.s32.f32 %v1578
        %v1611 = vcvt.s32.f32 %v1579
        %v1612 = vcvt.s32.f32 %v1580
        %v1613 = vcvt.s32.f32 %v1581
        %v1614 = vcvt.s32.f32 %v1582
        %v1615 = vcvt.s32.f32 %v1583
        %v1616 = vcvt.s32.f32 %v1584
        %v1617 = vcvt.s32.f32 %v1585
        %v1618 = vcvt.s32.f32 %v1586
        %v1619 = vcvt.s32.f32 %v1587
        %v1620 = vcvt.s32.f32 %v1588
        %v1621 = vcvt.s32.f32 %v1589
        %v1622 = vcvt.s32.f32 %v1590
        %v1623 = vcvt.s32.f32 %v1591
        %v1624 = vcvt.s32.f32 %v1592
        %v1625 = vcvt.s32.f32 %v1593
        %v1626 = vcvt.s32.f32 %v1594
        %vm1627 = vcmp.lt.s32.totalorder %v1115, 0
        %v1628 = vsub.s32 0, %v1115
        %v1629 = vsel %vm1627, %v1628, %v1115
        %v1630 = vshrl.u32 %v1629, 4
        %v1631 = vand.u32 %v1629, 15
        %v1632 = vsub.s32 0, %v1631
        %v1633 = vsel %vm1627, %v1632, %v1631
        %vm1634 = vcmp.lt.s32.totalorder %v1116, 0
        %v1635 = vsub.s32 0, %v1116
        %v1636 = vsel %vm1634, %v1635, %v1116
        %v1637 = vshrl.u32 %v1636, 4
        %v1638 = vand.u32 %v1636, 15
        %v1639 = vsub.s32 0, %v1638
        %v1640 = vsel %vm1634, %v1639, %v1638
        %vm1641 = vcmp.lt.s32.totalorder %v1117, 0
        %v1642 = vsub.s32 0, %v1117
        %v1643 = vsel %vm1641, %v1642, %v1117
        %v1644 = vshrl.u32 %v1643, 4
        %v1645 = vand.u32 %v1643, 15
        %v1646 = vsub.s32 0, %v1645
        %v1647 = vsel %vm1641, %v1646, %v1645
        %vm1648 = vcmp.lt.s32.totalorder %v1118, 0
        %v1649 = vsub.s32 0, %v1118
        %v1650 = vsel %vm1648, %v1649, %v1118
        %v1651 = vshrl.u32 %v1650, 4
        %v1652 = vand.u32 %v1650, 15
        %v1653 = vsub.s32 0, %v1652
        %v1654 = vsel %vm1648, %v1653, %v1652
        %vm1655 = vcmp.lt.s32.totalorder %v1119, 0
        %v1656 = vsub.s32 0, %v1119
        %v1657 = vsel %vm1655, %v1656, %v1119
        %v1658 = vshrl.u32 %v1657, 4
        %v1659 = vand.u32 %v1657, 15
        %v1660 = vsub.s32 0, %v1659
        %v1661 = vsel %vm1655, %v1660, %v1659
        %vm1662 = vcmp.lt.s32.totalorder %v1120, 0
        %v1663 = vsub.s32 0, %v1120
        %v1664 = vsel %vm1662, %v1663, %v1120
        %v1665 = vshrl.u32 %v1664, 4
        %v1666 = vand.u32 %v1664, 15
        %v1667 = vsub.s32 0, %v1666
        %v1668 = vsel %vm1662, %v1667, %v1666
        %vm1669 = vcmp.lt.s32.totalorder %v1121, 0
        %v1670 = vsub.s32 0, %v1121
        %v1671 = vsel %vm1669, %v1670, %v1121
        %v1672 = vshrl.u32 %v1671, 4
        %v1673 = vand.u32 %v1671, 15
        %v1674 = vsub.s32 0, %v1673
        %v1675 = vsel %vm1669, %v1674, %v1673
        %vm1676 = vcmp.lt.s32.totalorder %v1122, 0
        %v1677 = vsub.s32 0, %v1122
        %v1678 = vsel %vm1676, %v1677, %v1122
        %v1679 = vshrl.u32 %v1678, 4
        %v1680 = vand.u32 %v1678, 15
        %v1681 = vsub.s32 0, %v1680
        %v1682 = vsel %vm1676, %v1681, %v1680
        %vm1683 = vcmp.lt.s32.totalorder %v1123, 0
        %v1684 = vsub.s32 0, %v1123
        %v1685 = vsel %vm1683, %v1684, %v1123
        %v1686 = vshrl.u32 %v1685, 4
        %v1687 = vand.u32 %v1685, 15
        %v1688 = vsub.s32 0, %v1687
        %v1689 = vsel %vm1683, %v1688, %v1687
        %vm1690 = vcmp.lt.s32.totalorder %v1124, 0
        %v1691 = vsub.s32 0, %v1124
        %v1692 = vsel %vm1690, %v1691, %v1124
        %v1693 = vshrl.u32 %v1692, 4
        %v1694 = vand.u32 %v1692, 15
        %v1695 = vsub.s32 0, %v1694
        %v1696 = vsel %vm1690, %v1695, %v1694
        %vm1697 = vcmp.lt.s32.totalorder %v1125, 0
        %v1698 = vsub.s32 0, %v1125
        %v1699 = vsel %vm1697, %v1698, %v1125
        %v1700 = vshrl.u32 %v1699, 4
        %v1701 = vand.u32 %v1699, 15
        %v1702 = vsub.s32 0, %v1701
        %v1703 = vsel %vm1697, %v1702, %v1701
        %vm1704 = vcmp.lt.s32.totalorder %v1126, 0
        %v1705 = vsub.s32 0, %v1126
        %v1706 = vsel %vm1704, %v1705, %v1126
        %v1707 = vshrl.u32 %v1706, 4
        %v1708 = vand.u32 %v1706, 15
        %v1709 = vsub.s32 0, %v1708
        %v1710 = vsel %vm1704, %v1709, %v1708
        %vm1711 = vcmp.lt.s32.totalorder %v1127, 0
        %v1712 = vsub.s32 0, %v1127
        %v1713 = vsel %vm1711, %v1712, %v1127
        %v1714 = vshrl.u32 %v1713, 4
        %v1715 = vand.u32 %v1713, 15
        %v1716 = vsub.s32 0, %v1715
        %v1717 = vsel %vm1711, %v1716, %v1715
        %vm1718 = vcmp.lt.s32.totalorder %v1128, 0
        %v1719 = vsub.s32 0, %v1128
        %v1720 = vsel %vm1718, %v1719, %v1128
        %v1721 = vshrl.u32 %v1720, 4
        %v1722 = vand.u32 %v1720, 15
        %v1723 = vsub.s32 0, %v1722
        %v1724 = vsel %vm1718, %v1723, %v1722
        %vm1725 = vcmp.lt.s32.totalorder %v1129, 0
        %v1726 = vsub.s32 0, %v1129
        %v1727 = vsel %vm1725, %v1726, %v1129
        %v1728 = vshrl.u32 %v1727, 4
        %v1729 = vand.u32 %v1727, 15
        %v1730 = vsub.s32 0, %v1729
        %v1731 = vsel %vm1725, %v1730, %v1729
        %vm1732 = vcmp.lt.s32.totalorder %v1130, 0
        %v1733 = vsub.s32 0, %v1130
        %v1734 = vsel %vm1732, %v1733, %v1130
        %v1735 = vshrl.u32 %v1734, 4
        %v1736 = vand.u32 %v1734, 15
        %v1737 = vsub.s32 0, %v1736
        %v1738 = vsel %vm1732, %v1737, %v1736
        %vm1739 = vcmp.lt.s32.totalorder %v1131, 0
        %v1740 = vsub.s32 0, %v1131
        %v1741 = vsel %vm1739, %v1740, %v1131
        %v1742 = vshrl.u32 %v1741, 4
        %v1743 = vand.u32 %v1741, 15
        %v1744 = vsub.s32 0, %v1743
        %v1745 = vsel %vm1739, %v1744, %v1743
        %vm1746 = vcmp.lt.s32.totalorder %v1132, 0
        %v1747 = vsub.s32 0, %v1132
        %v1748 = vsel %vm1746, %v1747, %v1132
        %v1749 = vshrl.u32 %v1748, 4
        %v1750 = vand.u32 %v1748, 15
        %v1751 = vsub.s32 0, %v1750
        %v1752 = vsel %vm1746, %v1751, %v1750
        %vm1753 = vcmp.lt.s32.totalorder %v1133, 0
        %v1754 = vsub.s32 0, %v1133
        %v1755 = vsel %vm1753, %v1754, %v1133
        %v1756 = vshrl.u32 %v1755, 4
        %v1757 = vand.u32 %v1755, 15
        %v1758 = vsub.s32 0, %v1757
        %v1759 = vsel %vm1753, %v1758, %v1757
        %vm1760 = vcmp.lt.s32.totalorder %v1134, 0
        %v1761 = vsub.s32 0, %v1134
        %v1762 = vsel %vm1760, %v1761, %v1134
        %v1763 = vshrl.u32 %v1762, 4
        %v1764 = vand.u32 %v1762, 15
        %v1765 = vsub.s32 0, %v1764
        %v1766 = vsel %vm1760, %v1765, %v1764
        %vm1767 = vcmp.lt.s32.totalorder %v1135, 0
        %v1768 = vsub.s32 0, %v1135
        %v1769 = vsel %vm1767, %v1768, %v1135
        %v1770 = vshrl.u32 %v1769, 4
        %v1771 = vand.u32 %v1769, 15
        %v1772 = vsub.s32 0, %v1771
        %v1773 = vsel %vm1767, %v1772, %v1771
        %vm1774 = vcmp.lt.s32.totalorder %v1136, 0
        %v1775 = vsub.s32 0, %v1136
        %v1776 = vsel %vm1774, %v1775, %v1136
        %v1777 = vshrl.u32 %v1776, 4
        %v1778 = vand.u32 %v1776, 15
        %v1779 = vsub.s32 0, %v1778
        %v1780 = vsel %vm1774, %v1779, %v1778
        %vm1781 = vcmp.lt.s32.totalorder %v1137, 0
        %v1782 = vsub.s32 0, %v1137
        %v1783 = vsel %vm1781, %v1782, %v1137
        %v1784 = vshrl.u32 %v1783, 4
        %v1785 = vand.u32 %v1783, 15
        %v1786 = vsub.s32 0, %v1785
        %v1787 = vsel %vm1781, %v1786, %v1785
        %vm1788 = vcmp.lt.s32.totalorder %v1138, 0
        %v1789 = vsub.s32 0, %v1138
        %v1790 = vsel %vm1788, %v1789, %v1138
        %v1791 = vshrl.u32 %v1790, 4
        %v1792 = vand.u32 %v1790, 15
        %v1793 = vsub.s32 0, %v1792
        %v1794 = vsel %vm1788, %v1793, %v1792
        %vm1795 = vcmp.lt.s32.totalorder %v1139, 0
        %v1796 = vsub.s32 0, %v1139
        %v1797 = vsel %vm1795, %v1796, %v1139
        %v1798 = vshrl.u32 %v1797, 4
        %v1799 = vand.u32 %v1797, 15
        %v1800 = vsub.s32 0, %v1799
        %v1801 = vsel %vm1795, %v1800, %v1799
        %vm1802 = vcmp.lt.s32.totalorder %v1140, 0
        %v1803 = vsub.s32 0, %v1140
        %v1804 = vsel %vm1802, %v1803, %v1140
        %v1805 = vshrl.u32 %v1804, 4
        %v1806 = vand.u32 %v1804, 15
        %v1807 = vsub.s32 0, %v1806
        %v1808 = vsel %vm1802, %v1807, %v1806
        %vm1809 = vcmp.lt.s32.totalorder %v1141, 0
        %v1810 = vsub.s32 0, %v1141
        %v1811 = vsel %vm1809, %v1810, %v1141
        %v1812 = vshrl.u32 %v1811, 4
        %v1813 = vand.u32 %v1811, 15
        %v1814 = vsub.s32 0, %v1813
        %v1815 = vsel %vm1809, %v1814, %v1813
        %vm1816 = vcmp.lt.s32.totalorder %v1142, 0
        %v1817 = vsub.s32 0, %v1142
        %v1818 = vsel %vm1816, %v1817, %v1142
        %v1819 = vshrl.u32 %v1818, 4
        %v1820 = vand.u32 %v1818, 15
        %v1821 = vsub.s32 0, %v1820
        %v1822 = vsel %vm1816, %v1821, %v1820
        %vm1823 = vcmp.lt.s32.totalorder %v1143, 0
        %v1824 = vsub.s32 0, %v1143
        %v1825 = vsel %vm1823, %v1824, %v1143
        %v1826 = vshrl.u32 %v1825, 4
        %v1827 = vand.u32 %v1825, 15
        %v1828 = vsub.s32 0, %v1827
        %v1829 = vsel %vm1823, %v1828, %v1827
        %vm1830 = vcmp.lt.s32.totalorder %v1144, 0
        %v1831 = vsub.s32 0, %v1144
        %v1832 = vsel %vm1830, %v1831, %v1144
        %v1833 = vshrl.u32 %v1832, 4
        %v1834 = vand.u32 %v1832, 15
        %v1835 = vsub.s32 0, %v1834
        %v1836 = vsel %vm1830, %v1835, %v1834
        %vm1837 = vcmp.lt.s32.totalorder %v1145, 0
        %v1838 = vsub.s32 0, %v1145
        %v1839 = vsel %vm1837, %v1838, %v1145
        %v1840 = vshrl.u32 %v1839, 4
        %v1841 = vand.u32 %v1839, 15
        %v1842 = vsub.s32 0, %v1841
        %v1843 = vsel %vm1837, %v1842, %v1841
        %vm1844 = vcmp.lt.s32.totalorder %v1146, 0
        %v1845 = vsub.s32 0, %v1146
        %v1846 = vsel %vm1844, %v1845, %v1146
        %v1847 = vshrl.u32 %v1846, 4
        %v1848 = vand.u32 %v1846, 15
        %v1849 = vsub.s32 0, %v1848
        %v1850 = vsel %vm1844, %v1849, %v1848
        %vm1851 = vcmp.ne.s32.totalorder %v1633, 0
        %vm1852 = vcmp.ne.s32.totalorder %v1640, 0
        %vm1853 = vcmp.ne.s32.totalorder %v1647, 0
        %vm1854 = vcmp.ne.s32.totalorder %v1654, 0
        %vm1855 = vcmp.ne.s32.totalorder %v1661, 0
        %vm1856 = vcmp.ne.s32.totalorder %v1668, 0
        %vm1857 = vcmp.ne.s32.totalorder %v1675, 0
        %vm1858 = vcmp.ne.s32.totalorder %v1682, 0
        %vm1859 = vcmp.ne.s32.totalorder %v1689, 0
        %vm1860 = vcmp.ne.s32.totalorder %v1696, 0
        %vm1861 = vcmp.ne.s32.totalorder %v1703, 0
        %vm1862 = vcmp.ne.s32.totalorder %v1710, 0
        %vm1863 = vcmp.ne.s32.totalorder %v1717, 0
        %vm1864 = vcmp.ne.s32.totalorder %v1724, 0
        %vm1865 = vcmp.ne.s32.totalorder %v1731, 0
        %vm1866 = vcmp.ne.s32.totalorder %v1738, 0
        %vm1867 = vcmp.ne.s32.totalorder %v1745, 0
        %vm1868 = vcmp.ne.s32.totalorder %v1752, 0
        %vm1869 = vcmp.ne.s32.totalorder %v1759, 0
        %vm1870 = vcmp.ne.s32.totalorder %v1766, 0
        %vm1871 = vcmp.ne.s32.totalorder %v1773, 0
        %vm1872 = vcmp.ne.s32.totalorder %v1780, 0
        %vm1873 = vcmp.ne.s32.totalorder %v1787, 0
        %vm1874 = vcmp.ne.s32.totalorder %v1794, 0
        %vm1875 = vcmp.ne.s32.totalorder %v1801, 0
        %vm1876 = vcmp.ne.s32.totalorder %v1808, 0
        %vm1877 = vcmp.ne.s32.totalorder %v1815, 0
        %vm1878 = vcmp.ne.s32.totalorder %v1822, 0
        %vm1879 = vcmp.ne.s32.totalorder %v1829, 0
        %vm1880 = vcmp.ne.s32.totalorder %v1836, 0
        %vm1881 = vcmp.ne.s32.totalorder %v1843, 0
        %vm1882 = vcmp.ne.s32.totalorder %v1850, 0
        %vm1883 = vcmp.lt.s32.totalorder %v1633, 0
        %vm1884 = vcmp.lt.s32.totalorder %v1640, 0
        %vm1885 = vcmp.lt.s32.totalorder %v1647, 0
        %vm1886 = vcmp.lt.s32.totalorder %v1654, 0
        %vm1887 = vcmp.lt.s32.totalorder %v1661, 0
        %vm1888 = vcmp.lt.s32.totalorder %v1668, 0
        %vm1889 = vcmp.lt.s32.totalorder %v1675, 0
        %vm1890 = vcmp.lt.s32.totalorder %v1682, 0
        %vm1891 = vcmp.lt.s32.totalorder %v1689, 0
        %vm1892 = vcmp.lt.s32.totalorder %v1696, 0
        %vm1893 = vcmp.lt.s32.totalorder %v1703, 0
        %vm1894 = vcmp.lt.s32.totalorder %v1710, 0
        %vm1895 = vcmp.lt.s32.totalorder %v1717, 0
        %vm1896 = vcmp.lt.s32.totalorder %v1724, 0
        %vm1897 = vcmp.lt.s32.totalorder %v1731, 0
        %vm1898 = vcmp.lt.s32.totalorder %v1738, 0
        %vm1899 = vcmp.lt.s32.totalorder %v1745, 0
        %vm1900 = vcmp.lt.s32.totalorder %v1752, 0
        %vm1901 = vcmp.lt.s32.totalorder %v1759, 0
        %vm1902 = vcmp.lt.s32.totalorder %v1766, 0
        %vm1903 = vcmp.lt.s32.totalorder %v1773, 0
        %vm1904 = vcmp.lt.s32.totalorder %v1780, 0
        %vm1905 = vcmp.lt.s32.totalorder %v1787, 0
        %vm1906 = vcmp.lt.s32.totalorder %v1794, 0
        %vm1907 = vcmp.lt.s32.totalorder %v1801, 0
        %vm1908 = vcmp.lt.s32.totalorder %v1808, 0
        %vm1909 = vcmp.lt.s32.totalorder %v1815, 0
        %vm1910 = vcmp.lt.s32.totalorder %v1822, 0
        %vm1911 = vcmp.lt.s32.totalorder %v1829, 0
        %vm1912 = vcmp.lt.s32.totalorder %v1836, 0
        %vm1913 = vcmp.lt.s32.totalorder %v1843, 0
        %vm1914 = vcmp.lt.s32.totalorder %v1850, 0
        %vm1915 = vmand %vm1883, %vm1851
        %vm1916 = vmand %vm1884, %vm1852
        %vm1917 = vmand %vm1885, %vm1853
        %vm1918 = vmand %vm1886, %vm1854
        %vm1919 = vmand %vm1887, %vm1855
        %vm1920 = vmand %vm1888, %vm1856
        %vm1921 = vmand %vm1889, %vm1857
        %vm1922 = vmand %vm1890, %vm1858
        %vm1923 = vmand %vm1891, %vm1859
        %vm1924 = vmand %vm1892, %vm1860
        %vm1925 = vmand %vm1893, %vm1861
        %vm1926 = vmand %vm1894, %vm1862
        %vm1927 = vmand %vm1895, %vm1863
        %vm1928 = vmand %vm1896, %vm1864
        %vm1929 = vmand %vm1897, %vm1865
        %vm1930 = vmand %vm1898, %vm1866
        %vm1931 = vmand %vm1899, %vm1867
        %vm1932 = vmand %vm1900, %vm1868
        %vm1933 = vmand %vm1901, %vm1869
        %vm1934 = vmand %vm1902, %vm1870
        %vm1935 = vmand %vm1903, %vm1871
        %vm1936 = vmand %vm1904, %vm1872
        %vm1937 = vmand %vm1905, %vm1873
        %vm1938 = vmand %vm1906, %vm1874
        %vm1939 = vmand %vm1907, %vm1875
        %vm1940 = vmand %vm1908, %vm1876
        %vm1941 = vmand %vm1909, %vm1877
        %vm1942 = vmand %vm1910, %vm1878
        %vm1943 = vmand %vm1911, %vm1879
        %vm1944 = vmand %vm1912, %vm1880
        %vm1945 = vmand %vm1913, %vm1881
        %vm1946 = vmand %vm1914, %vm1882
        %v1947 = vadd.s32 %v1633, 16
        %v1948 = vadd.s32 %v1640, 16
        %v1949 = vadd.s32 %v1647, 16
        %v1950 = vadd.s32 %v1654, 16
        %v1951 = vadd.s32 %v1661, 16
        %v1952 = vadd.s32 %v1668, 16
        %v1953 = vadd.s32 %v1675, 16
        %v1954 = vadd.s32 %v1682, 16
        %v1955 = vadd.s32 %v1689, 16
        %v1956 = vadd.s32 %v1696, 16
        %v1957 = vadd.s32 %v1703, 16
        %v1958 = vadd.s32 %v1710, 16
        %v1959 = vadd.s32 %v1717, 16
        %v1960 = vadd.s32 %v1724, 16
        %v1961 = vadd.s32 %v1731, 16
        %v1962 = vadd.s32 %v1738, 16
        %v1963 = vadd.s32 %v1745, 16
        %v1964 = vadd.s32 %v1752, 16
        %v1965 = vadd.s32 %v1759, 16
        %v1966 = vadd.s32 %v1766, 16
        %v1967 = vadd.s32 %v1773, 16
        %v1968 = vadd.s32 %v1780, 16
        %v1969 = vadd.s32 %v1787, 16
        %v1970 = vadd.s32 %v1794, 16
        %v1971 = vadd.s32 %v1801, 16
        %v1972 = vadd.s32 %v1808, 16
        %v1973 = vadd.s32 %v1815, 16
        %v1974 = vadd.s32 %v1822, 16
        %v1975 = vadd.s32 %v1829, 16
        %v1976 = vadd.s32 %v1836, 16
        %v1977 = vadd.s32 %v1843, 16
        %v1978 = vadd.s32 %v1850, 16
        %v1979 = vsel %vm1915, %v1947, %v1633
        %v1980 = vsel %vm1916, %v1948, %v1640
        %v1981 = vsel %vm1917, %v1949, %v1647
        %v1982 = vsel %vm1918, %v1950, %v1654
        %v1983 = vsel %vm1919, %v1951, %v1661
        %v1984 = vsel %vm1920, %v1952, %v1668
        %v1985 = vsel %vm1921, %v1953, %v1675
        %v1986 = vsel %vm1922, %v1954, %v1682
        %v1987 = vsel %vm1923, %v1955, %v1689
        %v1988 = vsel %vm1924, %v1956, %v1696
        %v1989 = vsel %vm1925, %v1957, %v1703
        %v1990 = vsel %vm1926, %v1958, %v1710
        %v1991 = vsel %vm1927, %v1959, %v1717
        %v1992 = vsel %vm1928, %v1960, %v1724
        %v1993 = vsel %vm1929, %v1961, %v1731
        %v1994 = vsel %vm1930, %v1962, %v1738
        %v1995 = vsel %vm1931, %v1963, %v1745
        %v1996 = vsel %vm1932, %v1964, %v1752
        %v1997 = vsel %vm1933, %v1965, %v1759
        %v1998 = vsel %vm1934, %v1966, %v1766
        %v1999 = vsel %vm1935, %v1967, %v1773
        %v2000 = vsel %vm1936, %v1968, %v1780
        %v2001 = vsel %vm1937, %v1969, %v1787
        %v2002 = vsel %vm1938, %v1970, %v1794
        %v2003 = vsel %vm1939, %v1971, %v1801
        %v2004 = vsel %vm1940, %v1972, %v1808
        %v2005 = vsel %vm1941, %v1973, %v1815
        %v2006 = vsel %vm1942, %v1974, %v1822
        %v2007 = vsel %vm1943, %v1975, %v1829
        %v2008 = vsel %vm1944, %v1976, %v1836
        %v2009 = vsel %vm1945, %v1977, %v1843
        %v2010 = vsel %vm1946, %v1978, %v1850
        %vm2011 = vcmp.ne.s32.totalorder %v1979, 0
        %vm2012 = vcmp.ne.s32.totalorder %v1980, 0
        %vm2013 = vcmp.ne.s32.totalorder %v1981, 0
        %vm2014 = vcmp.ne.s32.totalorder %v1982, 0
        %vm2015 = vcmp.ne.s32.totalorder %v1983, 0
        %vm2016 = vcmp.ne.s32.totalorder %v1984, 0
        %vm2017 = vcmp.ne.s32.totalorder %v1985, 0
        %vm2018 = vcmp.ne.s32.totalorder %v1986, 0
        %vm2019 = vcmp.ne.s32.totalorder %v1987, 0
        %vm2020 = vcmp.ne.s32.totalorder %v1988, 0
        %vm2021 = vcmp.ne.s32.totalorder %v1989, 0
        %vm2022 = vcmp.ne.s32.totalorder %v1990, 0
        %vm2023 = vcmp.ne.s32.totalorder %v1991, 0
        %vm2024 = vcmp.ne.s32.totalorder %v1992, 0
        %vm2025 = vcmp.ne.s32.totalorder %v1993, 0
        %vm2026 = vcmp.ne.s32.totalorder %v1994, 0
        %vm2027 = vcmp.ne.s32.totalorder %v1995, 0
        %vm2028 = vcmp.ne.s32.totalorder %v1996, 0
        %vm2029 = vcmp.ne.s32.totalorder %v1997, 0
        %vm2030 = vcmp.ne.s32.totalorder %v1998, 0
        %vm2031 = vcmp.ne.s32.totalorder %v1999, 0
        %vm2032 = vcmp.ne.s32.totalorder %v2000, 0
        %vm2033 = vcmp.ne.s32.totalorder %v2001, 0
        %vm2034 = vcmp.ne.s32.totalorder %v2002, 0
        %vm2035 = vcmp.ne.s32.totalorder %v2003, 0
        %vm2036 = vcmp.ne.s32.totalorder %v2004, 0
        %vm2037 = vcmp.ne.s32.totalorder %v2005, 0
        %vm2038 = vcmp.ne.s32.totalorder %v2006, 0
        %vm2039 = vcmp.ne.s32.totalorder %v2007, 0
        %vm2040 = vcmp.ne.s32.totalorder %v2008, 0
        %vm2041 = vcmp.ne.s32.totalorder %v2009, 0
        %vm2042 = vcmp.ne.s32.totalorder %v2010, 0
        %v2043 = vsel %vm2011, 1, 0
        %v2044 = vsel %vm2012, 1, 0
        %v2045 = vsel %vm2013, 1, 0
        %v2046 = vsel %vm2014, 1, 0
        %v2047 = vsel %vm2015, 1, 0
        %v2048 = vsel %vm2016, 1, 0
        %v2049 = vsel %vm2017, 1, 0
        %v2050 = vsel %vm2018, 1, 0
        %v2051 = vsel %vm2019, 1, 0
        %v2052 = vsel %vm2020, 1, 0
        %v2053 = vsel %vm2021, 1, 0
        %v2054 = vsel %vm2022, 1, 0
        %v2055 = vsel %vm2023, 1, 0
        %v2056 = vsel %vm2024, 1, 0
        %v2057 = vsel %vm2025, 1, 0
        %v2058 = vsel %vm2026, 1, 0
        %v2059 = vsel %vm2027, 1, 0
        %v2060 = vsel %vm2028, 1, 0
        %v2061 = vsel %vm2029, 1, 0
        %v2062 = vsel %vm2030, 1, 0
        %v2063 = vsel %vm2031, 1, 0
        %v2064 = vsel %vm2032, 1, 0
        %v2065 = vsel %vm2033, 1, 0
        %v2066 = vsel %vm2034, 1, 0
        %v2067 = vsel %vm2035, 1, 0
        %v2068 = vsel %vm2036, 1, 0
        %v2069 = vsel %vm2037, 1, 0
        %v2070 = vsel %vm2038, 1, 0
        %v2071 = vsel %vm2039, 1, 0
        %v2072 = vsel %vm2040, 1, 0
        %v2073 = vsel %vm2041, 1, 0
        %v2074 = vsel %vm2042, 1, 0
        %v2075 = vcvt.s32.f32 %v2043
        %v2076 = vcvt.s32.f32 %v2044
        %v2077 = vcvt.s32.f32 %v2045
        %v2078 = vcvt.s32.f32 %v2046
        %v2079 = vcvt.s32.f32 %v2047
        %v2080 = vcvt.s32.f32 %v2048
        %v2081 = vcvt.s32.f32 %v2049
        %v2082 = vcvt.s32.f32 %v2050
        %v2083 = vcvt.s32.f32 %v2051
        %v2084 = vcvt.s32.f32 %v2052
        %v2085 = vcvt.s32.f32 %v2053
        %v2086 = vcvt.s32.f32 %v2054
        %v2087 = vcvt.s32.f32 %v2055
        %v2088 = vcvt.s32.f32 %v2056
        %v2089 = vcvt.s32.f32 %v2057
        %v2090 = vcvt.s32.f32 %v2058
        %v2091 = vcvt.s32.f32 %v2059
        %v2092 = vcvt.s32.f32 %v2060
        %v2093 = vcvt.s32.f32 %v2061
        %v2094 = vcvt.s32.f32 %v2062
        %v2095 = vcvt.s32.f32 %v2063
        %v2096 = vcvt.s32.f32 %v2064
        %v2097 = vcvt.s32.f32 %v2065
        %v2098 = vcvt.s32.f32 %v2066
        %v2099 = vcvt.s32.f32 %v2067
        %v2100 = vcvt.s32.f32 %v2068
        %v2101 = vcvt.s32.f32 %v2069
        %v2102 = vcvt.s32.f32 %v2070
        %v2103 = vcvt.s32.f32 %v2071
        %v2104 = vcvt.s32.f32 %v2072
        %v2105 = vcvt.s32.f32 %v2073
        %v2106 = vcvt.s32.f32 %v2074
        %v2107 = vpack.c.bf16 %v990, %v986
        %v2108 = vpack.c.bf16 %v991, %v987
        %v2109 = vpack.c.bf16 %v992, %v988
        %v2110 = vpack.c.bf16 %v993, %v989
        %v2111 = vpack.c.bf16 %v998, %v994
        %v2112 = vpack.c.bf16 %v999, %v995
        %v2113 = vpack.c.bf16 %v1000, %v996
        %v2114 = vpack.c.bf16 %v1001, %v997
        %v2115 = vpack.c.bf16 %v1006, %v1002
        %v2116 = vpack.c.bf16 %v1007, %v1003
        %v2117 = vpack.c.bf16 %v1008, %v1004
        %v2118 = vpack.c.bf16 %v1009, %v1005
        %v2119 = vpack.c.bf16 %v1014, %v1010
        %v2120 = vpack.c.bf16 %v1015, %v1011
        %v2121 = vpack.c.bf16 %v1016, %v1012
        %v2122 = vpack.c.bf16 %v1017, %v1013
        %v2123 = vpack.c.bf16 %v1022, %v1018
        %v2124 = vpack.c.bf16 %v1023, %v1019
        %v2125 = vpack.c.bf16 %v1024, %v1020
        %v2126 = vpack.c.bf16 %v1025, %v1021
        %v2127 = vpack.c.bf16 %v1030, %v1026
        %v2128 = vpack.c.bf16 %v1031, %v1027
        %v2129 = vpack.c.bf16 %v1032, %v1028
        %v2130 = vpack.c.bf16 %v1033, %v1029
        %v2131 = vpack.c.bf16 %v1038, %v1034
        %v2132 = vpack.c.bf16 %v1039, %v1035
        %v2133 = vpack.c.bf16 %v1040, %v1036
        %v2134 = vpack.c.bf16 %v1041, %v1037
        %v2135 = vpack.c.bf16 %v1046, %v1042
        %v2136 = vpack.c.bf16 %v1047, %v1043
        %v2137 = vpack.c.bf16 %v1048, %v1044
        %v2138 = vpack.c.bf16 %v1049, %v1045
        %v2139 = vpack.c.bf16 %v1054, %v1050
        %v2140 = vpack.c.bf16 %v1055, %v1051
        %v2141 = vpack.c.bf16 %v1056, %v1052
        %v2142 = vpack.c.bf16 %v1057, %v1053
        %v2143 = vpack.c.bf16 %v1062, %v1058
        %v2144 = vpack.c.bf16 %v1063, %v1059
        %v2145 = vpack.c.bf16 %v1064, %v1060
        %v2146 = vpack.c.bf16 %v1065, %v1061
        %v2147 = vpack.c.bf16 %v1070, %v1066
        %v2148 = vpack.c.bf16 %v1071, %v1067
        %v2149 = vpack.c.bf16 %v1072, %v1068
        %v2150 = vpack.c.bf16 %v1073, %v1069
        %v2151 = vpack.c.bf16 %v1078, %v1074
        %v2152 = vpack.c.bf16 %v1079, %v1075
        %v2153 = vpack.c.bf16 %v1080, %v1076
        %v2154 = vpack.c.bf16 %v1081, %v1077
        %v2155 = vpack.c.bf16 %v1086, %v1082
        %v2156 = vpack.c.bf16 %v1087, %v1083
        %v2157 = vpack.c.bf16 %v1088, %v1084
        %v2158 = vpack.c.bf16 %v1089, %v1085
        %v2159 = vpack.c.bf16 %v1094, %v1090
        %v2160 = vpack.c.bf16 %v1095, %v1091
        %v2161 = vpack.c.bf16 %v1096, %v1092
        %v2162 = vpack.c.bf16 %v1097, %v1093
        %v2163 = vpack.c.bf16 %v1102, %v1098
        %v2164 = vpack.c.bf16 %v1103, %v1099
        %v2165 = vpack.c.bf16 %v1104, %v1100
        %v2166 = vpack.c.bf16 %v1105, %v1101
        %v2167 = vpack.c.bf16 %v1110, %v1106
        %v2168 = vpack.c.bf16 %v1111, %v1107
        %v2169 = vpack.c.bf16 %v1112, %v1108
        %v2170 = vpack.c.bf16 %v1113, %v1109
        %v2171 = vld [vmem:[%s3] sm:$0xf]
        %v2172 = vld [vmem:[%s3 + $0x4] sm:$0xf]
        %v2173 = vld [vmem:[%s3 + $0x8] sm:$0xf]
        %v2174 = vld [vmem:[%s3 + $0xc] sm:$0xf]
        %v2175 = vld [vmem:[%s3 + $0x10] sm:$0xf]
        %v2176 = vld [vmem:[%s3 + $0x14] sm:$0xf]
        %v2177 = vld [vmem:[%s3 + $0x18] sm:$0xf]
        %v2178 = vld [vmem:[%s3 + $0x1c] sm:$0xf]
        %v2179 = vld [vmem:[%s3 + $0x20] sm:$0xf]
        %v2180 = vld [vmem:[%s3 + $0x24] sm:$0xf]
        %v2181 = vld [vmem:[%s3 + $0x28] sm:$0xf]
        %v2182 = vld [vmem:[%s3 + $0x2c] sm:$0xf]
        %v2183 = vld [vmem:[%s3 + $0x30] sm:$0xf]
        %v2184 = vld [vmem:[%s3 + $0x34] sm:$0xf]
        %v2185 = vld [vmem:[%s3 + $0x38] sm:$0xf]
        %v2186 = vld [vmem:[%s3 + $0x3c] sm:$0xf]
        %v2187 = vld [vmem:[%s3 + $0x40] sm:$0xf]
        %v2188 = vld [vmem:[%s3 + $0x44] sm:$0xf]
        %v2189 = vld [vmem:[%s3 + $0x48] sm:$0xf]
        %v2190 = vld [vmem:[%s3 + $0x4c] sm:$0xf]
        %v2191 = vld [vmem:[%s3 + $0x50] sm:$0xf]
        %v2192 = vld [vmem:[%s3 + $0x54] sm:$0xf]
        %v2193 = vld [vmem:[%s3 + $0x58] sm:$0xf]
        %v2194 = vld [vmem:[%s3 + $0x5c] sm:$0xf]
        %v2195 = vld [vmem:[%s3 + $0x60] sm:$0xf]
        %v2196 = vld [vmem:[%s3 + $0x64] sm:$0xf]
        %v2197 = vld [vmem:[%s3 + $0x68] sm:$0xf]
        %v2198 = vld [vmem:[%s3 + $0x6c] sm:$0xf]
        %v2199 = vld [vmem:[%s3 + $0x70] sm:$0xf]
        %v2200 = vld [vmem:[%s3 + $0x74] sm:$0xf]
        %v2201 = vld [vmem:[%s3 + $0x78] sm:$0xf]
        %v2202 = vld [vmem:[%s3 + $0x7c] sm:$0xf]
        %v2203 = vld [vmem:[%s3 + $0x80] sm:$0xf]
        %v2204 = vld [vmem:[%s3 + $0x84] sm:$0xf]
        %v2205 = vld [vmem:[%s3 + $0x88] sm:$0xf]
        %v2206 = vld [vmem:[%s3 + $0x8c] sm:$0xf]
        %v2207 = vld [vmem:[%s3 + $0x90] sm:$0xf]
        %v2208 = vld [vmem:[%s3 + $0x94] sm:$0xf]
        %v2209 = vld [vmem:[%s3 + $0x98] sm:$0xf]
        %v2210 = vld [vmem:[%s3 + $0x9c] sm:$0xf]
        %v2211 = vld [vmem:[%s3 + $0xa0] sm:$0xf]
        %v2212 = vld [vmem:[%s3 + $0xa4] sm:$0xf]
        %v2213 = vld [vmem:[%s3 + $0xa8] sm:$0xf]
        %v2214 = vld [vmem:[%s3 + $0xac] sm:$0xf]
        %v2215 = vld [vmem:[%s3 + $0xb0] sm:$0xf]
        %v2216 = vld [vmem:[%s3 + $0xb4] sm:$0xf]
        %v2217 = vld [vmem:[%s3 + $0xb8] sm:$0xf]
        %v2218 = vld [vmem:[%s3 + $0xbc] sm:$0xf]
        %v2219 = vld [vmem:[%s3 + $0xc0] sm:$0xf]
        %v2220 = vld [vmem:[%s3 + $0xc4] sm:$0xf]
        %v2221 = vld [vmem:[%s3 + $0xc8] sm:$0xf]
        %v2222 = vld [vmem:[%s3 + $0xcc] sm:$0xf]
        %v2223 = vld [vmem:[%s3 + $0xd0] sm:$0xf]
        %v2224 = vld [vmem:[%s3 + $0xd4] sm:$0xf]
        %v2225 = vld [vmem:[%s3 + $0xd8] sm:$0xf]
        %v2226 = vld [vmem:[%s3 + $0xdc] sm:$0xf]
        %v2227 = vld [vmem:[%s3 + $0xe0] sm:$0xf]
        %v2228 = vld [vmem:[%s3 + $0xe4] sm:$0xf]
        %v2229 = vld [vmem:[%s3 + $0xe8] sm:$0xf]
        %v2230 = vld [vmem:[%s3 + $0xec] sm:$0xf]
        %v2231 = vld [vmem:[%s3 + $0xf0] sm:$0xf]
        %v2232 = vld [vmem:[%s3 + $0xf4] sm:$0xf]
        %v2233 = vld [vmem:[%s3 + $0xf8] sm:$0xf]
        %v2234 = vld [vmem:[%s3 + $0xfc] sm:$0xf]
        %v2235 = vmul.f32 %v1108, %v1595
        %v2236 = vmul.f32 %v1109, %v1595
        %v2237 = vmul.f32 %v1112, %v1596
        %v2238 = vmul.f32 %v1113, %v1596
        %v2239 = vmul.f32 %v988, %v1597
        %v2240 = vmul.f32 %v989, %v1597
        %v2241 = vmul.f32 %v992, %v1598
        %v2242 = vmul.f32 %v993, %v1598
        %v2243 = vmul.f32 %v996, %v1599
        %v2244 = vmul.f32 %v997, %v1599
        %v2245 = vmul.f32 %v1000, %v1600
        %v2246 = vmul.f32 %v1001, %v1600
        %v2247 = vmul.f32 %v1004, %v1601
        %v2248 = vmul.f32 %v1005, %v1601
        %v2249 = vmul.f32 %v1008, %v1602
        %v2250 = vmul.f32 %v1009, %v1602
        %v2251 = vmul.f32 %v1012, %v1603
        %v2252 = vmul.f32 %v1013, %v1603
        %v2253 = vmul.f32 %v1016, %v1604
        %v2254 = vmul.f32 %v1017, %v1604
        %v2255 = vmul.f32 %v1020, %v1605
        %v2256 = vmul.f32 %v1021, %v1605
        %v2257 = vmul.f32 %v1024, %v1606
        %v2258 = vmul.f32 %v1025, %v1606
        %v2259 = vmul.f32 %v1028, %v1607
        %v2260 = vmul.f32 %v1029, %v1607
        %v2261 = vmul.f32 %v1032, %v1608
        %v2262 = vmul.f32 %v1033, %v1608
        %v2263 = vmul.f32 %v1036, %v1609
        %v2264 = vmul.f32 %v1037, %v1609
        %v2265 = vmul.f32 %v1040, %v1610
        %v2266 = vmul.f32 %v1041, %v1610
        %v2267 = vmul.f32 %v1044, %v1611
        %v2268 = vmul.f32 %v1045, %v1611
        %v2269 = vmul.f32 %v1048, %v1612
        %v2270 = vmul.f32 %v1049, %v1612
        %v2271 = vmul.f32 %v1052, %v1613
        %v2272 = vmul.f32 %v1053, %v1613
        %v2273 = vmul.f32 %v1056, %v1614
        %v2274 = vmul.f32 %v1057, %v1614
        %v2275 = vmul.f32 %v1060, %v1615
        %v2276 = vmul.f32 %v1061, %v1615
        %v2277 = vmul.f32 %v1064, %v1616
        %v2278 = vmul.f32 %v1065, %v1616
        %v2279 = vmul.f32 %v1068, %v1617
        %v2280 = vmul.f32 %v1069, %v1617
        %v2281 = vmul.f32 %v1072, %v1618
        %v2282 = vmul.f32 %v1073, %v1618
        %v2283 = vmul.f32 %v1076, %v1619
        %v2284 = vmul.f32 %v1077, %v1619
        %v2285 = vmul.f32 %v1080, %v1620
        %v2286 = vmul.f32 %v1081, %v1620
        %v2287 = vmul.f32 %v1084, %v1621
        %v2288 = vmul.f32 %v1085, %v1621
        %v2289 = vmul.f32 %v1088, %v1622
        %v2290 = vmul.f32 %v1089, %v1622
        %v2291 = vmul.f32 %v1092, %v1623
        %v2292 = vmul.f32 %v1093, %v1623
        %v2293 = vmul.f32 %v1096, %v1624
        %v2294 = vmul.f32 %v1097, %v1624
        %v2295 = vmul.f32 %v1100, %v1625
        %v2296 = vmul.f32 %v1101, %v1625
        %v2297 = vmul.f32 %v1104, %v1626
        %v2298 = vmul.f32 %v1105, %v1626
        %v2299 = vpack.c.bf16 %v2237, %v2235
        %v2300 = vpack.c.bf16 %v2238, %v2236
        %v2301 = vpack.c.bf16 %v2241, %v2239
        %v2302 = vpack.c.bf16 %v2242, %v2240
        %v2303 = vpack.c.bf16 %v2245, %v2243
        %v2304 = vpack.c.bf16 %v2246, %v2244
        %v2305 = vpack.c.bf16 %v2249, %v2247
        %v2306 = vpack.c.bf16 %v2250, %v2248
        %v2307 = vpack.c.bf16 %v2253, %v2251
        %v2308 = vpack.c.bf16 %v2254, %v2252
        %v2309 = vpack.c.bf16 %v2257, %v2255
        %v2310 = vpack.c.bf16 %v2258, %v2256
        %v2311 = vpack.c.bf16 %v2261, %v2259
        %v2312 = vpack.c.bf16 %v2262, %v2260
        %v2313 = vpack.c.bf16 %v2265, %v2263
        %v2314 = vpack.c.bf16 %v2266, %v2264
        %v2315 = vpack.c.bf16 %v2269, %v2267
        %v2316 = vpack.c.bf16 %v2270, %v2268
        %v2317 = vpack.c.bf16 %v2273, %v2271
        %v2318 = vpack.c.bf16 %v2274, %v2272
        %v2319 = vpack.c.bf16 %v2277, %v2275
        %v2320 = vpack.c.bf16 %v2278, %v2276
        %v2321 = vpack.c.bf16 %v2281, %v2279
        %v2322 = vpack.c.bf16 %v2282, %v2280
        %v2323 = vpack.c.bf16 %v2285, %v2283
        %v2324 = vpack.c.bf16 %v2286, %v2284
        %v2325 = vpack.c.bf16 %v2289, %v2287
        %v2326 = vpack.c.bf16 %v2290, %v2288
        %v2327 = vpack.c.bf16 %v2293, %v2291
        %v2328 = vpack.c.bf16 %v2294, %v2292
        %v2329 = vpack.c.bf16 %v2297, %v2295
        %v2330 = vpack.c.bf16 %v2298, %v2296
        %v2331 = vld [vmem:[#allocation2] sm:$0xf]
        %v2332 = vld [vmem:[#allocation2 + $0x4] sm:$0xf]
        %v2333 = vld [vmem:[#allocation2 + $0x8] sm:$0xf]
        %v2334 = vld [vmem:[#allocation2 + $0xc] sm:$0xf]
        %v2335 = vld [vmem:[#allocation2 + $0x10] sm:$0xf]
        %v2336 = vld [vmem:[#allocation2 + $0x14] sm:$0xf]
        %v2337 = vld [vmem:[#allocation2 + $0x18] sm:$0xf]
        %v2338 = vld [vmem:[#allocation2 + $0x1c] sm:$0xf]
        %v2339 = vld [vmem:[#allocation2 + $0x20] sm:$0xf]
        %v2340 = vld [vmem:[#allocation2 + $0x24] sm:$0xf]
        %v2341 = vld [vmem:[#allocation2 + $0x28] sm:$0xf]
        %v2342 = vld [vmem:[#allocation2 + $0x2c] sm:$0xf]
        %v2343 = vld [vmem:[#allocation2 + $0x30] sm:$0xf]
        %v2344 = vld [vmem:[#allocation2 + $0x34] sm:$0xf]
        %v2345 = vld [vmem:[#allocation2 + $0x38] sm:$0xf]
        %v2346 = vld [vmem:[#allocation2 + $0x3c] sm:$0xf]
        %v2347 = vld [vmem:[#allocation2 + $0x40] sm:$0xf]
        %v2348 = vld [vmem:[#allocation2 + $0x44] sm:$0xf]
        %v2349 = vld [vmem:[#allocation2 + $0x48] sm:$0xf]
        %v2350 = vld [vmem:[#allocation2 + $0x4c] sm:$0xf]
        %v2351 = vld [vmem:[#allocation2 + $0x50] sm:$0xf]
        %v2352 = vld [vmem:[#allocation2 + $0x54] sm:$0xf]
        %v2353 = vld [vmem:[#allocation2 + $0x58] sm:$0xf]
        %v2354 = vld [vmem:[#allocation2 + $0x5c] sm:$0xf]
        %v2355 = vld [vmem:[#allocation2 + $0x60] sm:$0xf]
        %v2356 = vld [vmem:[#allocation2 + $0x64] sm:$0xf]
        %v2357 = vld [vmem:[#allocation2 + $0x68] sm:$0xf]
        %v2358 = vld [vmem:[#allocation2 + $0x6c] sm:$0xf]
        %v2359 = vld [vmem:[#allocation2 + $0x70] sm:$0xf]
        %v2360 = vld [vmem:[#allocation2 + $0x74] sm:$0xf]
        %v2361 = vld [vmem:[#allocation2 + $0x78] sm:$0xf]
        %v2362 = vld [vmem:[#allocation2 + $0x7c] sm:$0xf]
        %v2395 = vunpack.c.l.b16 %v2331
        %v2396 = vunpack.c.l.b16 %v2332
        %v2397 = vunpack.c.l.b16 %v2333
        %v2398 = vunpack.c.l.b16 %v2334
        %v2399 = vunpack.c.l.b16 %v2335
        %v2400 = vunpack.c.l.b16 %v2336
        %v2401 = vunpack.c.l.b16 %v2337
        %v2402 = vunpack.c.l.b16 %v2338
        %v2403 = vunpack.c.l.b16 %v2339
        %v2404 = vunpack.c.l.b16 %v2340
        %v2405 = vunpack.c.l.b16 %v2341
        %v2406 = vunpack.c.l.b16 %v2342
        %v2407 = vunpack.c.l.b16 %v2343
        %v2408 = vunpack.c.l.b16 %v2344
        %v2409 = vunpack.c.l.b16 %v2345
        %v2410 = vunpack.c.l.b16 %v2346
        %v2411 = vunpack.c.l.b16 %v2347
        %v2412 = vunpack.c.l.b16 %v2348
        %v2413 = vunpack.c.l.b16 %v2349
        %v2414 = vunpack.c.l.b16 %v2350
        %v2415 = vunpack.c.l.b16 %v2351
        %v2416 = vunpack.c.l.b16 %v2352
        %v2417 = vunpack.c.l.b16 %v2353
        %v2418 = vunpack.c.l.b16 %v2354
        %v2419 = vunpack.c.l.b16 %v2355
        %v2420 = vunpack.c.l.b16 %v2356
        %v2421 = vunpack.c.l.b16 %v2357
        %v2422 = vunpack.c.l.b16 %v2358
        %v2423 = vunpack.c.l.b16 %v2359
        %v2424 = vunpack.c.l.b16 %v2360
        %v2425 = vunpack.c.l.b16 %v2361
        %v2426 = vunpack.c.l.b16 %v2362
        %v2427 = vpack.c.b16 %v2396, %v2395
        %v2428 = vpack.c.b16 %v2398, %v2397
        %v2429 = vpack.c.b16 %v2400, %v2399
        %v2430 = vpack.c.b16 %v2402, %v2401
        %v2431 = vpack.c.b16 %v2404, %v2403
        %v2432 = vpack.c.b16 %v2406, %v2405
        %v2433 = vpack.c.b16 %v2408, %v2407
        %v2434 = vpack.c.b16 %v2410, %v2409
        %v2435 = vpack.c.b16 %v2412, %v2411
        %v2436 = vpack.c.b16 %v2414, %v2413
        %v2437 = vpack.c.b16 %v2416, %v2415
        %v2438 = vpack.c.b16 %v2418, %v2417
        %v2439 = vpack.c.b16 %v2420, %v2419
        %v2440 = vpack.c.b16 %v2422, %v2421
        %v2441 = vpack.c.b16 %v2424, %v2423
        %v2442 = vpack.c.b16 %v2426, %v2425
        %2459 = vmatpush.bf16.msra.mxu0 %v2434
        %2460 = vmatpush.bf16.msra.mxu0 %v2433
        %2461 = vmatpush.bf16.msra.mxu0 %v2432
        %2462 = vmatpush.bf16.msra.mxu0 %v2431
        %2463 = vmatpush.bf16.msra.mxu0 %v2430
        %2464 = vmatpush.bf16.msra.mxu0 %v2429
        %2465 = vmatpush.bf16.msra.mxu0 %v2428
        %2466 = vmatpush.bf16.msra.mxu0 %v2427
        %2467 = vmatmul.bf16.gmra.mxu0 %v2299
        %v2468 = vpop.f32.mrf.mxu0
        %v2469 = vadd.f32 0.0, %v2468
        %v2470 = vpop.f32.mrf.mxu0
        %v2471 = vadd.f32 0.0, %v2470
        %2472 = vmatmul.bf16.gmra.mxu0 %v2301
        %v2473 = vpop.f32.mrf.mxu0
        %v2474 = vadd.f32 0.0, %v2473
        %v2475 = vpop.f32.mrf.mxu0
        %v2476 = vadd.f32 0.0, %v2475
        %2477 = vmatmul.bf16.gmra.mxu0 %v2303
        %v2478 = vpop.f32.mrf.mxu0
        %v2479 = vadd.f32 0.0, %v2478
        %v2480 = vpop.f32.mrf.mxu0
        %v2481 = vadd.f32 0.0, %v2480
        %2482 = vmatmul.bf16.gmra.mxu0 %v2305
        %v2483 = vpop.f32.mrf.mxu0
        %v2484 = vadd.f32 0.0, %v2483
        %v2485 = vpop.f32.mrf.mxu0
        %v2486 = vadd.f32 0.0, %v2485
        %2487 = vmatmul.bf16.gmra.mxu0 %v2307
        %v2488 = vpop.f32.mrf.mxu0
        %v2489 = vadd.f32 0.0, %v2488
        %v2490 = vpop.f32.mrf.mxu0
        %v2491 = vadd.f32 0.0, %v2490
        %2492 = vmatmul.bf16.gmra.mxu0 %v2309
        %v2493 = vpop.f32.mrf.mxu0
        %v2494 = vadd.f32 0.0, %v2493
        %v2495 = vpop.f32.mrf.mxu0
        %v2496 = vadd.f32 0.0, %v2495
        %2497 = vmatmul.bf16.gmra.mxu0 %v2311
        %v2498 = vpop.f32.mrf.mxu0
        %v2499 = vadd.f32 0.0, %v2498
        %v2500 = vpop.f32.mrf.mxu0
        %v2501 = vadd.f32 0.0, %v2500
        %2502 = vmatmul.bf16.gmra.mxu0 %v2313
        %v2503 = vpop.f32.mrf.mxu0
        %v2504 = vadd.f32 0.0, %v2503
        %v2505 = vpop.f32.mrf.mxu0
        %v2506 = vadd.f32 0.0, %v2505
        %2507 = vmatmul.bf16.gmra.mxu0 %v2315
        %v2508 = vpop.f32.mrf.mxu0
        %v2509 = vadd.f32 0.0, %v2508
        %v2510 = vpop.f32.mrf.mxu0
        %v2511 = vadd.f32 0.0, %v2510
        %2512 = vmatmul.bf16.gmra.mxu0 %v2317
        %v2513 = vpop.f32.mrf.mxu0
        %v2514 = vadd.f32 0.0, %v2513
        %v2515 = vpop.f32.mrf.mxu0
        %v2516 = vadd.f32 0.0, %v2515
        %2517 = vmatmul.bf16.gmra.mxu0 %v2319
        %v2518 = vpop.f32.mrf.mxu0
        %v2519 = vadd.f32 0.0, %v2518
        %v2520 = vpop.f32.mrf.mxu0
        %v2521 = vadd.f32 0.0, %v2520
        %2522 = vmatmul.bf16.gmra.mxu0 %v2321
        %v2523 = vpop.f32.mrf.mxu0
        %v2524 = vadd.f32 0.0, %v2523
        %v2525 = vpop.f32.mrf.mxu0
        %v2526 = vadd.f32 0.0, %v2525
        %2527 = vmatmul.bf16.gmra.mxu0 %v2323
        %v2528 = vpop.f32.mrf.mxu0
        %v2529 = vadd.f32 0.0, %v2528
        %v2530 = vpop.f32.mrf.mxu0
        %v2531 = vadd.f32 0.0, %v2530
        %2532 = vmatmul.bf16.gmra.mxu0 %v2325
        %v2533 = vpop.f32.mrf.mxu0
        %v2534 = vadd.f32 0.0, %v2533
        %v2535 = vpop.f32.mrf.mxu0
        %v2536 = vadd.f32 0.0, %v2535
        %2537 = vmatmul.bf16.gmra.mxu0 %v2327
        %v2538 = vpop.f32.mrf.mxu0
        %v2539 = vadd.f32 0.0, %v2538
        %v2540 = vpop.f32.mrf.mxu0
        %v2541 = vadd.f32 0.0, %v2540
        %2542 = vmatmul.bf16.gmra.mxu0 %v2329
        %v2543 = vpop.f32.mrf.mxu0
        %v2544 = vadd.f32 0.0, %v2543
        %v2545 = vpop.f32.mrf.mxu0
        %v2546 = vadd.f32 0.0, %v2545
        %2547 = vdwg.mxu0
        %2548 = vmatpush.bf16.msra.mxu0 %v2442
        %2549 = vmatpush.bf16.msra.mxu0 %v2441
        %2550 = vmatpush.bf16.msra.mxu0 %v2440
        %2551 = vmatpush.bf16.msra.mxu0 %v2439
        %2552 = vmatpush.bf16.msra.mxu0 %v2438
        %2553 = vmatpush.bf16.msra.mxu0 %v2437
        %2554 = vmatpush.bf16.msra.mxu0 %v2436
        %2555 = vmatpush.bf16.msra.mxu0 %v2435
        %2556 = vmatmul.bf16.gmra.mxu0 %v2300
        %v2557 = vpop.f32.mrf.mxu0
        %v2558 = vadd.f32 %v2469, %v2557
        %v2559 = vpop.f32.mrf.mxu0
        %v2560 = vadd.f32 %v2471, %v2559
        %2561 = vmatmul.bf16.gmra.mxu0 %v2302
        %v2562 = vpop.f32.mrf.mxu0
        %v2563 = vadd.f32 %v2474, %v2562
        %v2564 = vpop.f32.mrf.mxu0
        %v2565 = vadd.f32 %v2476, %v2564
        %2566 = vmatmul.bf16.gmra.mxu0 %v2304
        %v2567 = vpop.f32.mrf.mxu0
        %v2568 = vadd.f32 %v2479, %v2567
        %v2569 = vpop.f32.mrf.mxu0
        %v2570 = vadd.f32 %v2481, %v2569
        %2571 = vmatmul.bf16.gmra.mxu0 %v2306
        %v2572 = vpop.f32.mrf.mxu0
        %v2573 = vadd.f32 %v2484, %v2572
        %v2574 = vpop.f32.mrf.mxu0
        %v2575 = vadd.f32 %v2486, %v2574
        %2576 = vmatmul.bf16.gmra.mxu0 %v2308
        %v2577 = vpop.f32.mrf.mxu0
        %v2578 = vadd.f32 %v2489, %v2577
        %v2579 = vpop.f32.mrf.mxu0
        %v2580 = vadd.f32 %v2491, %v2579
        %2581 = vmatmul.bf16.gmra.mxu0 %v2310
        %v2582 = vpop.f32.mrf.mxu0
        %v2583 = vadd.f32 %v2494, %v2582
        %v2584 = vpop.f32.mrf.mxu0
        %v2585 = vadd.f32 %v2496, %v2584
        %2586 = vmatmul.bf16.gmra.mxu0 %v2312
        %v2587 = vpop.f32.mrf.mxu0
        %v2588 = vadd.f32 %v2499, %v2587
        %v2589 = vpop.f32.mrf.mxu0
        %v2590 = vadd.f32 %v2501, %v2589
        %2591 = vmatmul.bf16.gmra.mxu0 %v2314
        %v2592 = vpop.f32.mrf.mxu0
        %v2593 = vadd.f32 %v2504, %v2592
        %v2594 = vpop.f32.mrf.mxu0
        %v2595 = vadd.f32 %v2506, %v2594
        %2596 = vmatmul.bf16.gmra.mxu0 %v2316
        %v2597 = vpop.f32.mrf.mxu0
        %v2598 = vadd.f32 %v2509, %v2597
        %v2599 = vpop.f32.mrf.mxu0
        %v2600 = vadd.f32 %v2511, %v2599
        %2601 = vmatmul.bf16.gmra.mxu0 %v2318
        %v2602 = vpop.f32.mrf.mxu0
        %v2603 = vadd.f32 %v2514, %v2602
        %v2604 = vpop.f32.mrf.mxu0
        %v2605 = vadd.f32 %v2516, %v2604
        %2606 = vmatmul.bf16.gmra.mxu0 %v2320
        %v2607 = vpop.f32.mrf.mxu0
        %v2608 = vadd.f32 %v2519, %v2607
        %v2609 = vpop.f32.mrf.mxu0
        %v2610 = vadd.f32 %v2521, %v2609
        %2611 = vmatmul.bf16.gmra.mxu0 %v2322
        %v2612 = vpop.f32.mrf.mxu0
        %v2613 = vadd.f32 %v2524, %v2612
        %v2614 = vpop.f32.mrf.mxu0
        %v2615 = vadd.f32 %v2526, %v2614
        %2616 = vmatmul.bf16.gmra.mxu0 %v2324
        %v2617 = vpop.f32.mrf.mxu0
        %v2618 = vadd.f32 %v2529, %v2617
        %v2619 = vpop.f32.mrf.mxu0
        %v2620 = vadd.f32 %v2531, %v2619
        %2621 = vmatmul.bf16.gmra.mxu0 %v2326
        %v2622 = vpop.f32.mrf.mxu0
        %v2623 = vadd.f32 %v2534, %v2622
        %v2624 = vpop.f32.mrf.mxu0
        %v2625 = vadd.f32 %v2536, %v2624
        %2626 = vmatmul.bf16.gmra.mxu0 %v2328
        %v2627 = vpop.f32.mrf.mxu0
        %v2628 = vadd.f32 %v2539, %v2627
        %v2629 = vpop.f32.mrf.mxu0
        %v2630 = vadd.f32 %v2541, %v2629
        %2631 = vmatmul.bf16.gmra.mxu0 %v2330
        %v2632 = vpop.f32.mrf.mxu0
        %v2633 = vadd.f32 %v2544, %v2632
        %v2634 = vpop.f32.mrf.mxu0
        %v2635 = vadd.f32 %v2546, %v2634
        %2636 = vdwg.mxu0
        %v2701 = vunpack.c.l.b16 %v2171
        %v2702 = vunpack.c.l.b16 %v2172
        %v2703 = vunpack.c.l.b16 %v2173
        %v2704 = vunpack.c.l.b16 %v2174
        %v2705 = vunpack.c.l.b16 %v2175
        %v2706 = vunpack.c.l.b16 %v2176
        %v2707 = vunpack.c.l.b16 %v2177
        %v2708 = vunpack.c.l.b16 %v2178
        %v2709 = vunpack.c.l.b16 %v2179
        %v2710 = vunpack.c.l.b16 %v2180
        %v2711 = vunpack.c.l.b16 %v2181
        %v2712 = vunpack.c.l.b16 %v2182
        %v2713 = vunpack.c.l.b16 %v2183
        %v2714 = vunpack.c.l.b16 %v2184
        %v2715 = vunpack.c.l.b16 %v2185
        %v2716 = vunpack.c.l.b16 %v2186
        %v2717 = vunpack.c.l.b16 %v2187
        %v2718 = vunpack.c.l.b16 %v2188
        %v2719 = vunpack.c.l.b16 %v2189
        %v2720 = vunpack.c.l.b16 %v2190
        %v2721 = vunpack.c.l.b16 %v2191
        %v2722 = vunpack.c.l.b16 %v2192
        %v2723 = vunpack.c.l.b16 %v2193
        %v2724 = vunpack.c.l.b16 %v2194
        %v2725 = vunpack.c.l.b16 %v2195
        %v2726 = vunpack.c.l.b16 %v2196
        %v2727 = vunpack.c.l.b16 %v2197
        %v2728 = vunpack.c.l.b16 %v2198
        %v2729 = vunpack.c.l.b16 %v2199
        %v2730 = vunpack.c.l.b16 %v2200
        %v2731 = vunpack.c.l.b16 %v2201
        %v2732 = vunpack.c.l.b16 %v2202
        %v2733 = vunpack.c.l.b16 %v2203
        %v2734 = vunpack.c.l.b16 %v2204
        %v2735 = vunpack.c.l.b16 %v2205
        %v2736 = vunpack.c.l.b16 %v2206
        %v2737 = vunpack.c.l.b16 %v2207
        %v2738 = vunpack.c.l.b16 %v2208
        %v2739 = vunpack.c.l.b16 %v2209
        %v2740 = vunpack.c.l.b16 %v2210
        %v2741 = vunpack.c.l.b16 %v2211
        %v2742 = vunpack.c.l.b16 %v2212
        %v2743 = vunpack.c.l.b16 %v2213
        %v2744 = vunpack.c.l.b16 %v2214
        %v2745 = vunpack.c.l.b16 %v2215
        %v2746 = vunpack.c.l.b16 %v2216
        %v2747 = vunpack.c.l.b16 %v2217
        %v2748 = vunpack.c.l.b16 %v2218
        %v2749 = vunpack.c.l.b16 %v2219
        %v2750 = vunpack.c.l.b16 %v2220
        %v2751 = vunpack.c.l.b16 %v2221
        %v2752 = vunpack.c.l.b16 %v2222
        %v2753 = vunpack.c.l.b16 %v2223
        %v2754 = vunpack.c.l.b16 %v2224
        %v2755 = vunpack.c.l.b16 %v2225
        %v2756 = vunpack.c.l.b16 %v2226
        %v2757 = vunpack.c.l.b16 %v2227
        %v2758 = vunpack.c.l.b16 %v2228
        %v2759 = vunpack.c.l.b16 %v2229
        %v2760 = vunpack.c.l.b16 %v2230
        %v2761 = vunpack.c.l.b16 %v2231
        %v2762 = vunpack.c.l.b16 %v2232
        %v2763 = vunpack.c.l.b16 %v2233
        %v2764 = vunpack.c.l.b16 %v2234
        %v2765 = vpack.c.b16 %v2702, %v2701
        %v2766 = vpack.c.b16 %v2704, %v2703
        %v2767 = vpack.c.b16 %v2706, %v2705
        %v2768 = vpack.c.b16 %v2708, %v2707
        %v2769 = vpack.c.b16 %v2710, %v2709
        %v2770 = vpack.c.b16 %v2712, %v2711
        %v2771 = vpack.c.b16 %v2714, %v2713
        %v2772 = vpack.c.b16 %v2716, %v2715
        %v2773 = vpack.c.b16 %v2718, %v2717
        %v2774 = vpack.c.b16 %v2720, %v2719
        %v2775 = vpack.c.b16 %v2722, %v2721
        %v2776 = vpack.c.b16 %v2724, %v2723
        %v2777 = vpack.c.b16 %v2726, %v2725
        %v2778 = vpack.c.b16 %v2728, %v2727
        %v2779 = vpack.c.b16 %v2730, %v2729
        %v2780 = vpack.c.b16 %v2732, %v2731
        %v2781 = vpack.c.b16 %v2734, %v2733
        %v2782 = vpack.c.b16 %v2736, %v2735
        %v2783 = vpack.c.b16 %v2738, %v2737
        %v2784 = vpack.c.b16 %v2740, %v2739
        %v2785 = vpack.c.b16 %v2742, %v2741
        %v2786 = vpack.c.b16 %v2744, %v2743
        %v2787 = vpack.c.b16 %v2746, %v2745
        %v2788 = vpack.c.b16 %v2748, %v2747
        %v2789 = vpack.c.b16 %v2750, %v2749
        %v2790 = vpack.c.b16 %v2752, %v2751
        %v2791 = vpack.c.b16 %v2754, %v2753
        %v2792 = vpack.c.b16 %v2756, %v2755
        %v2793 = vpack.c.b16 %v2758, %v2757
        %v2794 = vpack.c.b16 %v2760, %v2759
        %v2795 = vpack.c.b16 %v2762, %v2761
        %v2796 = vpack.c.b16 %v2764, %v2763
        %2829 = vmatpush.bf16.msra.mxu0 %v2772
        %2830 = vmatpush.bf16.msra.mxu0 %v2771
        %2831 = vmatpush.bf16.msra.mxu0 %v2770
        %2832 = vmatpush.bf16.msra.mxu0 %v2769
        %2833 = vmatpush.bf16.msra.mxu0 %v2768
        %2834 = vmatpush.bf16.msra.mxu0 %v2767
        %2835 = vmatpush.bf16.msra.mxu0 %v2766
        %2836 = vmatpush.bf16.msra.mxu0 %v2765
        %2837 = vmatmul.bf16.gmra.mxu0 %v2107
        %v2838 = vpop.f32.mrf.mxu0
        %v2839 = vadd.f32 %v2558, %v2838
        %v2840 = vpop.f32.mrf.mxu0
        %v2841 = vadd.f32 %v2560, %v2840
        %2842 = vmatmul.bf16.gmra.mxu0 %v2111
        %v2843 = vpop.f32.mrf.mxu0
        %v2844 = vadd.f32 %v2563, %v2843
        %v2845 = vpop.f32.mrf.mxu0
        %v2846 = vadd.f32 %v2565, %v2845
        %2847 = vmatmul.bf16.gmra.mxu0 %v2115
        %v2848 = vpop.f32.mrf.mxu0
        %v2849 = vadd.f32 %v2568, %v2848
        %v2850 = vpop.f32.mrf.mxu0
        %v2851 = vadd.f32 %v2570, %v2850
        %2852 = vmatmul.bf16.gmra.mxu0 %v2119
        %v2853 = vpop.f32.mrf.mxu0
        %v2854 = vadd.f32 %v2573, %v2853
        %v2855 = vpop.f32.mrf.mxu0
        %v2856 = vadd.f32 %v2575, %v2855
        %2857 = vmatmul.bf16.gmra.mxu0 %v2123
        %v2858 = vpop.f32.mrf.mxu0
        %v2859 = vadd.f32 %v2578, %v2858
        %v2860 = vpop.f32.mrf.mxu0
        %v2861 = vadd.f32 %v2580, %v2860
        %2862 = vmatmul.bf16.gmra.mxu0 %v2127
        %v2863 = vpop.f32.mrf.mxu0
        %v2864 = vadd.f32 %v2583, %v2863
        %v2865 = vpop.f32.mrf.mxu0
        %v2866 = vadd.f32 %v2585, %v2865
        %2867 = vmatmul.bf16.gmra.mxu0 %v2131
        %v2868 = vpop.f32.mrf.mxu0
        %v2869 = vadd.f32 %v2588, %v2868
        %v2870 = vpop.f32.mrf.mxu0
        %v2871 = vadd.f32 %v2590, %v2870
        %2872 = vmatmul.bf16.gmra.mxu0 %v2135
        %v2873 = vpop.f32.mrf.mxu0
        %v2874 = vadd.f32 %v2593, %v2873
        %v2875 = vpop.f32.mrf.mxu0
        %v2876 = vadd.f32 %v2595, %v2875
        %2877 = vmatmul.bf16.gmra.mxu0 %v2139
        %v2878 = vpop.f32.mrf.mxu0
        %v2879 = vadd.f32 %v2598, %v2878
        %v2880 = vpop.f32.mrf.mxu0
        %v2881 = vadd.f32 %v2600, %v2880
        %2882 = vmatmul.bf16.gmra.mxu0 %v2143
        %v2883 = vpop.f32.mrf.mxu0
        %v2884 = vadd.f32 %v2603, %v2883
        %v2885 = vpop.f32.mrf.mxu0
        %v2886 = vadd.f32 %v2605, %v2885
        %2887 = vmatmul.bf16.gmra.mxu0 %v2147
        %v2888 = vpop.f32.mrf.mxu0
        %v2889 = vadd.f32 %v2608, %v2888
        %v2890 = vpop.f32.mrf.mxu0
        %v2891 = vadd.f32 %v2610, %v2890
        %2892 = vmatmul.bf16.gmra.mxu0 %v2151
        %v2893 = vpop.f32.mrf.mxu0
        %v2894 = vadd.f32 %v2613, %v2893
        %v2895 = vpop.f32.mrf.mxu0
        %v2896 = vadd.f32 %v2615, %v2895
        %2897 = vmatmul.bf16.gmra.mxu0 %v2155
        %v2898 = vpop.f32.mrf.mxu0
        %v2899 = vadd.f32 %v2618, %v2898
        %v2900 = vpop.f32.mrf.mxu0
        %v2901 = vadd.f32 %v2620, %v2900
        %2902 = vmatmul.bf16.gmra.mxu0 %v2159
        %v2903 = vpop.f32.mrf.mxu0
        %v2904 = vadd.f32 %v2623, %v2903
        %v2905 = vpop.f32.mrf.mxu0
        %v2906 = vadd.f32 %v2625, %v2905
        %2907 = vmatmul.bf16.gmra.mxu0 %v2163
        %v2908 = vpop.f32.mrf.mxu0
        %v2909 = vadd.f32 %v2628, %v2908
        %v2910 = vpop.f32.mrf.mxu0
        %v2911 = vadd.f32 %v2630, %v2910
        %2912 = vmatmul.bf16.gmra.mxu0 %v2167
        %v2913 = vpop.f32.mrf.mxu0
        %v2914 = vadd.f32 %v2633, %v2913
        %v2915 = vpop.f32.mrf.mxu0
        %v2916 = vadd.f32 %v2635, %v2915
        %2917 = vdwg.mxu0
        %2918 = vmatpush.bf16.msra.mxu0 %v2780
        %2919 = vmatpush.bf16.msra.mxu0 %v2779
        %2920 = vmatpush.bf16.msra.mxu0 %v2778
        %2921 = vmatpush.bf16.msra.mxu0 %v2777
        %2922 = vmatpush.bf16.msra.mxu0 %v2776
        %2923 = vmatpush.bf16.msra.mxu0 %v2775
        %2924 = vmatpush.bf16.msra.mxu0 %v2774
        %2925 = vmatpush.bf16.msra.mxu0 %v2773
        %2926 = vmatmul.bf16.gmra.mxu0 %v2108
        %v2927 = vpop.f32.mrf.mxu0
        %v2928 = vadd.f32 %v2839, %v2927
        %v2929 = vpop.f32.mrf.mxu0
        %v2930 = vadd.f32 %v2841, %v2929
        %2931 = vmatmul.bf16.gmra.mxu0 %v2112
        %v2932 = vpop.f32.mrf.mxu0
        %v2933 = vadd.f32 %v2844, %v2932
        %v2934 = vpop.f32.mrf.mxu0
        %v2935 = vadd.f32 %v2846, %v2934
        %2936 = vmatmul.bf16.gmra.mxu0 %v2116
        %v2937 = vpop.f32.mrf.mxu0
        %v2938 = vadd.f32 %v2849, %v2937
        %v2939 = vpop.f32.mrf.mxu0
        %v2940 = vadd.f32 %v2851, %v2939
        %2941 = vmatmul.bf16.gmra.mxu0 %v2120
        %v2942 = vpop.f32.mrf.mxu0
        %v2943 = vadd.f32 %v2854, %v2942
        %v2944 = vpop.f32.mrf.mxu0
        %v2945 = vadd.f32 %v2856, %v2944
        %2946 = vmatmul.bf16.gmra.mxu0 %v2124
        %v2947 = vpop.f32.mrf.mxu0
        %v2948 = vadd.f32 %v2859, %v2947
        %v2949 = vpop.f32.mrf.mxu0
        %v2950 = vadd.f32 %v2861, %v2949
        %2951 = vmatmul.bf16.gmra.mxu0 %v2128
        %v2952 = vpop.f32.mrf.mxu0
        %v2953 = vadd.f32 %v2864, %v2952
        %v2954 = vpop.f32.mrf.mxu0
        %v2955 = vadd.f32 %v2866, %v2954
        %2956 = vmatmul.bf16.gmra.mxu0 %v2132
        %v2957 = vpop.f32.mrf.mxu0
        %v2958 = vadd.f32 %v2869, %v2957
        %v2959 = vpop.f32.mrf.mxu0
        %v2960 = vadd.f32 %v2871, %v2959
        %2961 = vmatmul.bf16.gmra.mxu0 %v2136
        %v2962 = vpop.f32.mrf.mxu0
        %v2963 = vadd.f32 %v2874, %v2962
        %v2964 = vpop.f32.mrf.mxu0
        %v2965 = vadd.f32 %v2876, %v2964
        %2966 = vmatmul.bf16.gmra.mxu0 %v2140
        %v2967 = vpop.f32.mrf.mxu0
        %v2968 = vadd.f32 %v2879, %v2967
        %v2969 = vpop.f32.mrf.mxu0
        %v2970 = vadd.f32 %v2881, %v2969
        %2971 = vmatmul.bf16.gmra.mxu0 %v2144
        %v2972 = vpop.f32.mrf.mxu0
        %v2973 = vadd.f32 %v2884, %v2972
        %v2974 = vpop.f32.mrf.mxu0
        %v2975 = vadd.f32 %v2886, %v2974
        %2976 = vmatmul.bf16.gmra.mxu0 %v2148
        %v2977 = vpop.f32.mrf.mxu0
        %v2978 = vadd.f32 %v2889, %v2977
        %v2979 = vpop.f32.mrf.mxu0
        %v2980 = vadd.f32 %v2891, %v2979
        %2981 = vmatmul.bf16.gmra.mxu0 %v2152
        %v2982 = vpop.f32.mrf.mxu0
        %v2983 = vadd.f32 %v2894, %v2982
        %v2984 = vpop.f32.mrf.mxu0
        %v2985 = vadd.f32 %v2896, %v2984
        %2986 = vmatmul.bf16.gmra.mxu0 %v2156
        %v2987 = vpop.f32.mrf.mxu0
        %v2988 = vadd.f32 %v2899, %v2987
        %v2989 = vpop.f32.mrf.mxu0
        %v2990 = vadd.f32 %v2901, %v2989
        %2991 = vmatmul.bf16.gmra.mxu0 %v2160
        %v2992 = vpop.f32.mrf.mxu0
        %v2993 = vadd.f32 %v2904, %v2992
        %v2994 = vpop.f32.mrf.mxu0
        %v2995 = vadd.f32 %v2906, %v2994
        %2996 = vmatmul.bf16.gmra.mxu0 %v2164
        %v2997 = vpop.f32.mrf.mxu0
        %v2998 = vadd.f32 %v2909, %v2997
        %v2999 = vpop.f32.mrf.mxu0
        %v3000 = vadd.f32 %v2911, %v2999
        %3001 = vmatmul.bf16.gmra.mxu0 %v2168
        %v3002 = vpop.f32.mrf.mxu0
        %v3003 = vadd.f32 %v2914, %v3002
        %v3004 = vpop.f32.mrf.mxu0
        %v3005 = vadd.f32 %v2916, %v3004
        %3006 = vdwg.mxu0
        %3007 = vmatpush.bf16.msra.mxu0 %v2788
        %3008 = vmatpush.bf16.msra.mxu0 %v2787
        %3009 = vmatpush.bf16.msra.mxu0 %v2786
        %3010 = vmatpush.bf16.msra.mxu0 %v2785
        %3011 = vmatpush.bf16.msra.mxu0 %v2784
        %3012 = vmatpush.bf16.msra.mxu0 %v2783
        %3013 = vmatpush.bf16.msra.mxu0 %v2782
        %3014 = vmatpush.bf16.msra.mxu0 %v2781
        %3015 = vmatmul.bf16.gmra.mxu0 %v2109
        %v3016 = vpop.f32.mrf.mxu0
        %v3017 = vadd.f32 %v2928, %v3016
        %v3018 = vpop.f32.mrf.mxu0
        %v3019 = vadd.f32 %v2930, %v3018
        %3020 = vmatmul.bf16.gmra.mxu0 %v2113
        %v3021 = vpop.f32.mrf.mxu0
        %v3022 = vadd.f32 %v2933, %v3021
        %v3023 = vpop.f32.mrf.mxu0
        %v3024 = vadd.f32 %v2935, %v3023
        %3025 = vmatmul.bf16.gmra.mxu0 %v2117
        %v3026 = vpop.f32.mrf.mxu0
        %v3027 = vadd.f32 %v2938, %v3026
        %v3028 = vpop.f32.mrf.mxu0
        %v3029 = vadd.f32 %v2940, %v3028
        %3030 = vmatmul.bf16.gmra.mxu0 %v2121
        %v3031 = vpop.f32.mrf.mxu0
        %v3032 = vadd.f32 %v2943, %v3031
        %v3033 = vpop.f32.mrf.mxu0
        %v3034 = vadd.f32 %v2945, %v3033
        %3035 = vmatmul.bf16.gmra.mxu0 %v2125
        %v3036 = vpop.f32.mrf.mxu0
        %v3037 = vadd.f32 %v2948, %v3036
        %v3038 = vpop.f32.mrf.mxu0
        %v3039 = vadd.f32 %v2950, %v3038
        %3040 = vmatmul.bf16.gmra.mxu0 %v2129
        %v3041 = vpop.f32.mrf.mxu0
        %v3042 = vadd.f32 %v2953, %v3041
        %v3043 = vpop.f32.mrf.mxu0
        %v3044 = vadd.f32 %v2955, %v3043
        %3045 = vmatmul.bf16.gmra.mxu0 %v2133
        %v3046 = vpop.f32.mrf.mxu0
        %v3047 = vadd.f32 %v2958, %v3046
        %v3048 = vpop.f32.mrf.mxu0
        %v3049 = vadd.f32 %v2960, %v3048
        %3050 = vmatmul.bf16.gmra.mxu0 %v2137
        %v3051 = vpop.f32.mrf.mxu0
        %v3052 = vadd.f32 %v2963, %v3051
        %v3053 = vpop.f32.mrf.mxu0
        %v3054 = vadd.f32 %v2965, %v3053
        %3055 = vmatmul.bf16.gmra.mxu0 %v2141
        %v3056 = vpop.f32.mrf.mxu0
        %v3057 = vadd.f32 %v2968, %v3056
        %v3058 = vpop.f32.mrf.mxu0
        %v3059 = vadd.f32 %v2970, %v3058
        %3060 = vmatmul.bf16.gmra.mxu0 %v2145
        %v3061 = vpop.f32.mrf.mxu0
        %v3062 = vadd.f32 %v2973, %v3061
        %v3063 = vpop.f32.mrf.mxu0
        %v3064 = vadd.f32 %v2975, %v3063
        %3065 = vmatmul.bf16.gmra.mxu0 %v2149
        %v3066 = vpop.f32.mrf.mxu0
        %v3067 = vadd.f32 %v2978, %v3066
        %v3068 = vpop.f32.mrf.mxu0
        %v3069 = vadd.f32 %v2980, %v3068
        %3070 = vmatmul.bf16.gmra.mxu0 %v2153
        %v3071 = vpop.f32.mrf.mxu0
        %v3072 = vadd.f32 %v2983, %v3071
        %v3073 = vpop.f32.mrf.mxu0
        %v3074 = vadd.f32 %v2985, %v3073
        %3075 = vmatmul.bf16.gmra.mxu0 %v2157
        %v3076 = vpop.f32.mrf.mxu0
        %v3077 = vadd.f32 %v2988, %v3076
        %v3078 = vpop.f32.mrf.mxu0
        %v3079 = vadd.f32 %v2990, %v3078
        %3080 = vmatmul.bf16.gmra.mxu0 %v2161
        %v3081 = vpop.f32.mrf.mxu0
        %v3082 = vadd.f32 %v2993, %v3081
        %v3083 = vpop.f32.mrf.mxu0
        %v3084 = vadd.f32 %v2995, %v3083
        %3085 = vmatmul.bf16.gmra.mxu0 %v2165
        %v3086 = vpop.f32.mrf.mxu0
        %v3087 = vadd.f32 %v2998, %v3086
        %v3088 = vpop.f32.mrf.mxu0
        %v3089 = vadd.f32 %v3000, %v3088
        %3090 = vmatmul.bf16.gmra.mxu0 %v2169
        %v3091 = vpop.f32.mrf.mxu0
        %v3092 = vadd.f32 %v3003, %v3091
        %v3093 = vpop.f32.mrf.mxu0
        %v3094 = vadd.f32 %v3005, %v3093
        %3095 = vdwg.mxu0
        %3096 = vmatpush.bf16.msra.mxu0 %v2796
        %3097 = vmatpush.bf16.msra.mxu0 %v2795
        %3098 = vmatpush.bf16.msra.mxu0 %v2794
        %3099 = vmatpush.bf16.msra.mxu0 %v2793
        %3100 = vmatpush.bf16.msra.mxu0 %v2792
        %3101 = vmatpush.bf16.msra.mxu0 %v2791
        %3102 = vmatpush.bf16.msra.mxu0 %v2790
        %3103 = vmatpush.bf16.msra.mxu0 %v2789
        %3104 = vmatmul.bf16.gmra.mxu0 %v2110
        %v3105 = vpop.f32.mrf.mxu0
        %v3106 = vadd.f32 %v3017, %v3105
        %v3107 = vpop.f32.mrf.mxu0
        %v3108 = vadd.f32 %v3019, %v3107
        %3109 = vmatmul.bf16.gmra.mxu0 %v2114
        %v3110 = vpop.f32.mrf.mxu0
        %v3111 = vadd.f32 %v3022, %v3110
        %v3112 = vpop.f32.mrf.mxu0
        %v3113 = vadd.f32 %v3024, %v3112
        %3114 = vmatmul.bf16.gmra.mxu0 %v2118
        %v3115 = vpop.f32.mrf.mxu0
        %v3116 = vadd.f32 %v3027, %v3115
        %v3117 = vpop.f32.mrf.mxu0
        %v3118 = vadd.f32 %v3029, %v3117
        %3119 = vmatmul.bf16.gmra.mxu0 %v2122
        %v3120 = vpop.f32.mrf.mxu0
        %v3121 = vadd.f32 %v3032, %v3120
        %v3122 = vpop.f32.mrf.mxu0
        %v3123 = vadd.f32 %v3034, %v3122
        %3124 = vmatmul.bf16.gmra.mxu0 %v2126
        %v3125 = vpop.f32.mrf.mxu0
        %v3126 = vadd.f32 %v3037, %v3125
        %v3127 = vpop.f32.mrf.mxu0
        %v3128 = vadd.f32 %v3039, %v3127
        %3129 = vmatmul.bf16.gmra.mxu0 %v2130
        %v3130 = vpop.f32.mrf.mxu0
        %v3131 = vadd.f32 %v3042, %v3130
        %v3132 = vpop.f32.mrf.mxu0
        %v3133 = vadd.f32 %v3044, %v3132
        %3134 = vmatmul.bf16.gmra.mxu0 %v2134
        %v3135 = vpop.f32.mrf.mxu0
        %v3136 = vadd.f32 %v3047, %v3135
        %v3137 = vpop.f32.mrf.mxu0
        %v3138 = vadd.f32 %v3049, %v3137
        %3139 = vmatmul.bf16.gmra.mxu0 %v2138
        %v3140 = vpop.f32.mrf.mxu0
        %v3141 = vadd.f32 %v3052, %v3140
        %v3142 = vpop.f32.mrf.mxu0
        %v3143 = vadd.f32 %v3054, %v3142
        %3144 = vmatmul.bf16.gmra.mxu0 %v2142
        %v3145 = vpop.f32.mrf.mxu0
        %v3146 = vadd.f32 %v3057, %v3145
        %v3147 = vpop.f32.mrf.mxu0
        %v3148 = vadd.f32 %v3059, %v3147
        %3149 = vmatmul.bf16.gmra.mxu0 %v2146
        %v3150 = vpop.f32.mrf.mxu0
        %v3151 = vadd.f32 %v3062, %v3150
        %v3152 = vpop.f32.mrf.mxu0
        %v3153 = vadd.f32 %v3064, %v3152
        %3154 = vmatmul.bf16.gmra.mxu0 %v2150
        %v3155 = vpop.f32.mrf.mxu0
        %v3156 = vadd.f32 %v3067, %v3155
        %v3157 = vpop.f32.mrf.mxu0
        %v3158 = vadd.f32 %v3069, %v3157
        %3159 = vmatmul.bf16.gmra.mxu0 %v2154
        %v3160 = vpop.f32.mrf.mxu0
        %v3161 = vadd.f32 %v3072, %v3160
        %v3162 = vpop.f32.mrf.mxu0
        %v3163 = vadd.f32 %v3074, %v3162
        %3164 = vmatmul.bf16.gmra.mxu0 %v2158
        %v3165 = vpop.f32.mrf.mxu0
        %v3166 = vadd.f32 %v3077, %v3165
        %v3167 = vpop.f32.mrf.mxu0
        %v3168 = vadd.f32 %v3079, %v3167
        %3169 = vmatmul.bf16.gmra.mxu0 %v2162
        %v3170 = vpop.f32.mrf.mxu0
        %v3171 = vadd.f32 %v3082, %v3170
        %v3172 = vpop.f32.mrf.mxu0
        %v3173 = vadd.f32 %v3084, %v3172
        %3174 = vmatmul.bf16.gmra.mxu0 %v2166
        %v3175 = vpop.f32.mrf.mxu0
        %v3176 = vadd.f32 %v3087, %v3175
        %v3177 = vpop.f32.mrf.mxu0
        %v3178 = vadd.f32 %v3089, %v3177
        %3179 = vmatmul.bf16.gmra.mxu0 %v2170
        %v3180 = vpop.f32.mrf.mxu0
        %v3181 = vadd.f32 %v3092, %v3180
        %v3182 = vpop.f32.mrf.mxu0
        %v3183 = vadd.f32 %v3094, %v3182
        %3184 = vdwg.mxu0
        %v3185 = vrot.slane %v987, 7
        %v3186 = vrot.slane %v991, 7
        %v3187 = vrot.slane %v995, 7
        %v3188 = vrot.slane %v999, 7
        %v3189 = vrot.slane %v1003, 7
        %v3190 = vrot.slane %v1007, 7
        %v3191 = vrot.slane %v1011, 7
        %v3192 = vrot.slane %v1015, 7
        %v3193 = vrot.slane %v1019, 7
        %v3194 = vrot.slane %v1023, 7
        %v3195 = vrot.slane %v1027, 7
        %v3196 = vrot.slane %v1031, 7
        %v3197 = vrot.slane %v1035, 7
        %v3198 = vrot.slane %v1039, 7
        %v3199 = vrot.slane %v1043, 7
        %v3200 = vrot.slane %v1047, 7
        %v3201 = vrot.slane %v1051, 7
        %v3202 = vrot.slane %v1055, 7
        %v3203 = vrot.slane %v1059, 7
        %v3204 = vrot.slane %v1063, 7
        %v3205 = vrot.slane %v1067, 7
        %v3206 = vrot.slane %v1071, 7
        %v3207 = vrot.slane %v1075, 7
        %v3208 = vrot.slane %v1079, 7
        %v3209 = vrot.slane %v1083, 7
        %v3210 = vrot.slane %v1087, 7
        %v3211 = vrot.slane %v1091, 7
        %v3212 = vrot.slane %v1095, 7
        %v3213 = vrot.slane %v1099, 7
        %v3214 = vrot.slane %v1103, 7
        %v3215 = vrot.slane %v1107, 7
        %v3216 = vrot.slane %v1111, 7
        %vm3217 = vcmp.lt.s32.totalorder %v1115, 1
        %v3218 = vsel %vm3217, %v3215, %v3216
        %v3219 = vsel %vm3217, %v3214, %v3215
        %v3220 = vsel %vm3217, %v3213, %v3214
        %v3221 = vsel %vm3217, %v3212, %v3213
        %v3222 = vsel %vm3217, %v3211, %v3212
        %v3223 = vsel %vm3217, %v3210, %v3211
        %v3224 = vsel %vm3217, %v3209, %v3210
        %v3225 = vsel %vm3217, %v3208, %v3209
        %v3226 = vsel %vm3217, %v3207, %v3208
        %v3227 = vsel %vm3217, %v3206, %v3207
        %v3228 = vsel %vm3217, %v3205, %v3206
        %v3229 = vsel %vm3217, %v3204, %v3205
        %v3230 = vsel %vm3217, %v3203, %v3204
        %v3231 = vsel %vm3217, %v3202, %v3203
        %v3232 = vsel %vm3217, %v3201, %v3202
        %v3233 = vsel %vm3217, %v3200, %v3201
        %v3234 = vsel %vm3217, %v3199, %v3200
        %v3235 = vsel %vm3217, %v3198, %v3199
        %v3236 = vsel %vm3217, %v3197, %v3198
        %v3237 = vsel %vm3217, %v3196, %v3197
        %v3238 = vsel %vm3217, %v3195, %v3196
        %v3239 = vsel %vm3217, %v3194, %v3195
        %v3240 = vsel %vm3217, %v3193, %v3194
        %v3241 = vsel %vm3217, %v3192, %v3193
        %v3242 = vsel %vm3217, %v3191, %v3192
        %v3243 = vsel %vm3217, %v3190, %v3191
        %v3244 = vsel %vm3217, %v3189, %v3190
        %v3245 = vsel %vm3217, %v3188, %v3189
        %v3246 = vsel %vm3217, %v3187, %v3188
        %v3247 = vsel %vm3217, %v3186, %v3187
        %v3248 = vsel %vm3217, %v3185, %v3186
        %v3249 = vsel %vm3217, %v3216, %v3185
        %v3250 = vmul.f32 %v3249, %v2075
        %v3251 = vmul.f32 %v3248, %v2076
        %v3252 = vmul.f32 %v3247, %v2077
        %v3253 = vmul.f32 %v3246, %v2078
        %v3254 = vmul.f32 %v3245, %v2079
        %v3255 = vmul.f32 %v3244, %v2080
        %v3256 = vmul.f32 %v3243, %v2081
        %v3257 = vmul.f32 %v3242, %v2082
        %v3258 = vmul.f32 %v3241, %v2083
        %v3259 = vmul.f32 %v3240, %v2084
        %v3260 = vmul.f32 %v3239, %v2085
        %v3261 = vmul.f32 %v3238, %v2086
        %v3262 = vmul.f32 %v3237, %v2087
        %v3263 = vmul.f32 %v3236, %v2088
        %v3264 = vmul.f32 %v3235, %v2089
        %v3265 = vmul.f32 %v3234, %v2090
        %v3266 = vmul.f32 %v3233, %v2091
        %v3267 = vmul.f32 %v3232, %v2092
        %v3268 = vmul.f32 %v3231, %v2093
        %v3269 = vmul.f32 %v3230, %v2094
        %v3270 = vmul.f32 %v3229, %v2095
        %v3271 = vmul.f32 %v3228, %v2096
        %v3272 = vmul.f32 %v3227, %v2097
        %v3273 = vmul.f32 %v3226, %v2098
        %v3274 = vmul.f32 %v3225, %v2099
        %v3275 = vmul.f32 %v3224, %v2100
        %v3276 = vmul.f32 %v3223, %v2101
        %v3277 = vmul.f32 %v3222, %v2102
        %v3278 = vmul.f32 %v3221, %v2103
        %v3279 = vmul.f32 %v3220, %v2104
        %v3280 = vmul.f32 %v3219, %v2105
        %v3281 = vmul.f32 %v3218, %v2106
        %v3282 = vpack.c.bf16 %v3251, %v3250
        %v3283 = vpack.c.bf16 %v3253, %v3252
        %v3284 = vpack.c.bf16 %v3255, %v3254
        %v3285 = vpack.c.bf16 %v3257, %v3256
        %v3286 = vpack.c.bf16 %v3259, %v3258
        %v3287 = vpack.c.bf16 %v3261, %v3260
        %v3288 = vpack.c.bf16 %v3263, %v3262
        %v3289 = vpack.c.bf16 %v3265, %v3264
        %v3290 = vpack.c.bf16 %v3267, %v3266
        %v3291 = vpack.c.bf16 %v3269, %v3268
        %v3292 = vpack.c.bf16 %v3271, %v3270
        %v3293 = vpack.c.bf16 %v3273, %v3272
        %v3294 = vpack.c.bf16 %v3275, %v3274
        %v3295 = vpack.c.bf16 %v3277, %v3276
        %v3296 = vpack.c.bf16 %v3279, %v3278
        %v3297 = vpack.c.bf16 %v3281, %v3280
        %v3298 = vld [vmem:[%s5] sm:$0xf]
        %v3299 = vld [vmem:[%s5 + $0x4] sm:$0xf]
        %v3300 = vld [vmem:[%s5 + $0x8] sm:$0xf]
        %v3301 = vld [vmem:[%s5 + $0xc] sm:$0xf]
        %v3302 = vld [vmem:[%s5 + $0x10] sm:$0xf]
        %v3303 = vld [vmem:[%s5 + $0x14] sm:$0xf]
        %v3304 = vld [vmem:[%s5 + $0x18] sm:$0xf]
        %v3305 = vld [vmem:[%s5 + $0x1c] sm:$0xf]
        %v3306 = vld [vmem:[%s5 + $0x20] sm:$0xf]
        %v3307 = vld [vmem:[%s5 + $0x24] sm:$0xf]
        %v3308 = vld [vmem:[%s5 + $0x28] sm:$0xf]
        %v3309 = vld [vmem:[%s5 + $0x2c] sm:$0xf]
        %v3310 = vld [vmem:[%s5 + $0x30] sm:$0xf]
        %v3311 = vld [vmem:[%s5 + $0x34] sm:$0xf]
        %v3312 = vld [vmem:[%s5 + $0x38] sm:$0xf]
        %v3313 = vld [vmem:[%s5 + $0x3c] sm:$0xf]
        %v3330 = vunpack.c.l.b16 %v3298
        %v3331 = vunpack.c.l.b16 %v3299
        %v3332 = vunpack.c.l.b16 %v3300
        %v3333 = vunpack.c.l.b16 %v3301
        %v3334 = vunpack.c.l.b16 %v3302
        %v3335 = vunpack.c.l.b16 %v3303
        %v3336 = vunpack.c.l.b16 %v3304
        %v3337 = vunpack.c.l.b16 %v3305
        %v3338 = vunpack.c.l.b16 %v3306
        %v3339 = vunpack.c.l.b16 %v3307
        %v3340 = vunpack.c.l.b16 %v3308
        %v3341 = vunpack.c.l.b16 %v3309
        %v3342 = vunpack.c.l.b16 %v3310
        %v3343 = vunpack.c.l.b16 %v3311
        %v3344 = vunpack.c.l.b16 %v3312
        %v3345 = vunpack.c.l.b16 %v3313
        %v3346 = vpack.c.b16 %v3331, %v3330
        %v3347 = vpack.c.b16 %v3333, %v3332
        %v3348 = vpack.c.b16 %v3335, %v3334
        %v3349 = vpack.c.b16 %v3337, %v3336
        %v3350 = vpack.c.b16 %v3339, %v3338
        %v3351 = vpack.c.b16 %v3341, %v3340
        %v3352 = vpack.c.b16 %v3343, %v3342
        %v3353 = vpack.c.b16 %v3345, %v3344
        %3362 = vmatpush.bf16.msra.mxu0 %v3353
        %3363 = vmatpush.bf16.msra.mxu0 %v3352
        %3364 = vmatpush.bf16.msra.mxu0 %v3351
        %3365 = vmatpush.bf16.msra.mxu0 %v3350
        %3366 = vmatpush.bf16.msra.mxu0 %v3349
        %3367 = vmatpush.bf16.msra.mxu0 %v3348
        %3368 = vmatpush.bf16.msra.mxu0 %v3347
        %3369 = vmatpush.bf16.msra.mxu0 %v3346
        %3370 = vmatmul.bf16.gmra.mxu0 %v3282
        %v3371 = vpop.f32.mrf.mxu0
        %v3372 = vadd.f32 0.0, %v3371
        %v3373 = vpop.f32.mrf.mxu0
        %v3374 = vadd.f32 0.0, %v3373
        %3375 = vmatmul.bf16.gmra.mxu0 %v3283
        %v3376 = vpop.f32.mrf.mxu0
        %v3377 = vadd.f32 0.0, %v3376
        %v3378 = vpop.f32.mrf.mxu0
        %v3379 = vadd.f32 0.0, %v3378
        %3380 = vmatmul.bf16.gmra.mxu0 %v3284
        %v3381 = vpop.f32.mrf.mxu0
        %v3382 = vadd.f32 0.0, %v3381
        %v3383 = vpop.f32.mrf.mxu0
        %v3384 = vadd.f32 0.0, %v3383
        %3385 = vmatmul.bf16.gmra.mxu0 %v3285
        %v3386 = vpop.f32.mrf.mxu0
        %v3387 = vadd.f32 0.0, %v3386
        %v3388 = vpop.f32.mrf.mxu0
        %v3389 = vadd.f32 0.0, %v3388
        %3390 = vmatmul.bf16.gmra.mxu0 %v3286
        %v3391 = vpop.f32.mrf.mxu0
        %v3392 = vadd.f32 0.0, %v3391
        %v3393 = vpop.f32.mrf.mxu0
        %v3394 = vadd.f32 0.0, %v3393
        %3395 = vmatmul.bf16.gmra.mxu0 %v3287
        %v3396 = vpop.f32.mrf.mxu0
        %v3397 = vadd.f32 0.0, %v3396
        %v3398 = vpop.f32.mrf.mxu0
        %v3399 = vadd.f32 0.0, %v3398
        %3400 = vmatmul.bf16.gmra.mxu0 %v3288
        %v3401 = vpop.f32.mrf.mxu0
        %v3402 = vadd.f32 0.0, %v3401
        %v3403 = vpop.f32.mrf.mxu0
        %v3404 = vadd.f32 0.0, %v3403
        %3405 = vmatmul.bf16.gmra.mxu0 %v3289
        %v3406 = vpop.f32.mrf.mxu0
        %v3407 = vadd.f32 0.0, %v3406
        %v3408 = vpop.f32.mrf.mxu0
        %v3409 = vadd.f32 0.0, %v3408
        %3410 = vmatmul.bf16.gmra.mxu0 %v3290
        %v3411 = vpop.f32.mrf.mxu0
        %v3412 = vadd.f32 0.0, %v3411
        %v3413 = vpop.f32.mrf.mxu0
        %v3414 = vadd.f32 0.0, %v3413
        %3415 = vmatmul.bf16.gmra.mxu0 %v3291
        %v3416 = vpop.f32.mrf.mxu0
        %v3417 = vadd.f32 0.0, %v3416
        %v3418 = vpop.f32.mrf.mxu0
        %v3419 = vadd.f32 0.0, %v3418
        %3420 = vmatmul.bf16.gmra.mxu0 %v3292
        %v3421 = vpop.f32.mrf.mxu0
        %v3422 = vadd.f32 0.0, %v3421
        %v3423 = vpop.f32.mrf.mxu0
        %v3424 = vadd.f32 0.0, %v3423
        %3425 = vmatmul.bf16.gmra.mxu0 %v3293
        %v3426 = vpop.f32.mrf.mxu0
        %v3427 = vadd.f32 0.0, %v3426
        %v3428 = vpop.f32.mrf.mxu0
        %v3429 = vadd.f32 0.0, %v3428
        %3430 = vmatmul.bf16.gmra.mxu0 %v3294
        %v3431 = vpop.f32.mrf.mxu0
        %v3432 = vadd.f32 0.0, %v3431
        %v3433 = vpop.f32.mrf.mxu0
        %v3434 = vadd.f32 0.0, %v3433
        %3435 = vmatmul.bf16.gmra.mxu0 %v3295
        %v3436 = vpop.f32.mrf.mxu0
        %v3437 = vadd.f32 0.0, %v3436
        %v3438 = vpop.f32.mrf.mxu0
        %v3439 = vadd.f32 0.0, %v3438
        %3440 = vmatmul.bf16.gmra.mxu0 %v3296
        %v3441 = vpop.f32.mrf.mxu0
        %v3442 = vadd.f32 0.0, %v3441
        %v3443 = vpop.f32.mrf.mxu0
        %v3444 = vadd.f32 0.0, %v3443
        %3445 = vmatmul.bf16.gmra.mxu0 %v3297
        %v3446 = vpop.f32.mrf.mxu0
        %v3447 = vadd.f32 0.0, %v3446
        %v3448 = vpop.f32.mrf.mxu0
        %v3449 = vadd.f32 0.0, %v3448
        %3450 = vdwg.mxu0
        %v3451 = vadd.f32 %v3106, %v3372
        %v3452 = vadd.f32 %v3108, %v3374
        %v3453 = vadd.f32 %v3111, %v3377
        %v3454 = vadd.f32 %v3113, %v3379
        %v3455 = vadd.f32 %v3116, %v3382
        %v3456 = vadd.f32 %v3118, %v3384
        %v3457 = vadd.f32 %v3121, %v3387
        %v3458 = vadd.f32 %v3123, %v3389
        %v3459 = vadd.f32 %v3126, %v3392
        %v3460 = vadd.f32 %v3128, %v3394
        %v3461 = vadd.f32 %v3131, %v3397
        %v3462 = vadd.f32 %v3133, %v3399
        %v3463 = vadd.f32 %v3136, %v3402
        %v3464 = vadd.f32 %v3138, %v3404
        %v3465 = vadd.f32 %v3141, %v3407
        %v3466 = vadd.f32 %v3143, %v3409
        %v3467 = vadd.f32 %v3146, %v3412
        %v3468 = vadd.f32 %v3148, %v3414
        %v3469 = vadd.f32 %v3151, %v3417
        %v3470 = vadd.f32 %v3153, %v3419
        %v3471 = vadd.f32 %v3156, %v3422
        %v3472 = vadd.f32 %v3158, %v3424
        %v3473 = vadd.f32 %v3161, %v3427
        %v3474 = vadd.f32 %v3163, %v3429
        %v3475 = vadd.f32 %v3166, %v3432
        %v3476 = vadd.f32 %v3168, %v3434
        %v3477 = vadd.f32 %v3171, %v3437
        %v3478 = vadd.f32 %v3173, %v3439
        %v3479 = vadd.f32 %v3176, %v3442
        %v3480 = vadd.f32 %v3178, %v3444
        %v3481 = vadd.f32 %v3181, %v3447
        %v3482 = vadd.f32 %v3183, %v3449
        %v3483 = vrot.slane %v989, 7
        %v3484 = vrot.slane %v993, 7
        %v3485 = vrot.slane %v997, 7
        %v3486 = vrot.slane %v1001, 7
        %v3487 = vrot.slane %v1005, 7
        %v3488 = vrot.slane %v1009, 7
        %v3489 = vrot.slane %v1013, 7
        %v3490 = vrot.slane %v1017, 7
        %v3491 = vrot.slane %v1021, 7
        %v3492 = vrot.slane %v1025, 7
        %v3493 = vrot.slane %v1029, 7
        %v3494 = vrot.slane %v1033, 7
        %v3495 = vrot.slane %v1037, 7
        %v3496 = vrot.slane %v1041, 7
        %v3497 = vrot.slane %v1045, 7
        %v3498 = vrot.slane %v1049, 7
        %v3499 = vrot.slane %v1053, 7
        %v3500 = vrot.slane %v1057, 7
        %v3501 = vrot.slane %v1061, 7
        %v3502 = vrot.slane %v1065, 7
        %v3503 = vrot.slane %v1069, 7
        %v3504 = vrot.slane %v1073, 7
        %v3505 = vrot.slane %v1077, 7
        %v3506 = vrot.slane %v1081, 7
        %v3507 = vrot.slane %v1085, 7
        %v3508 = vrot.slane %v1089, 7
        %v3509 = vrot.slane %v1093, 7
        %v3510 = vrot.slane %v1097, 7
        %v3511 = vrot.slane %v1101, 7
        %v3512 = vrot.slane %v1105, 7
        %v3513 = vrot.slane %v1109, 7
        %v3514 = vrot.slane %v1113, 7
        %v3515 = vsel %vm3217, %v3513, %v3514
        %v3516 = vsel %vm3217, %v3512, %v3513
        %v3517 = vsel %vm3217, %v3511, %v3512
        %v3518 = vsel %vm3217, %v3510, %v3511
        %v3519 = vsel %vm3217, %v3509, %v3510
        %v3520 = vsel %vm3217, %v3508, %v3509
        %v3521 = vsel %vm3217, %v3507, %v3508
        %v3522 = vsel %vm3217, %v3506, %v3507
        %v3523 = vsel %vm3217, %v3505, %v3506
        %v3524 = vsel %vm3217, %v3504, %v3505
        %v3525 = vsel %vm3217, %v3503, %v3504
        %v3526 = vsel %vm3217, %v3502, %v3503
        %v3527 = vsel %vm3217, %v3501, %v3502
        %v3528 = vsel %vm3217, %v3500, %v3501
        %v3529 = vsel %vm3217, %v3499, %v3500
        %v3530 = vsel %vm3217, %v3498, %v3499
        %v3531 = vsel %vm3217, %v3497, %v3498
        %v3532 = vsel %vm3217, %v3496, %v3497
        %v3533 = vsel %vm3217, %v3495, %v3496
        %v3534 = vsel %vm3217, %v3494, %v3495
        %v3535 = vsel %vm3217, %v3493, %v3494
        %v3536 = vsel %vm3217, %v3492, %v3493
        %v3537 = vsel %vm3217, %v3491, %v3492
        %v3538 = vsel %vm3217, %v3490, %v3491
        %v3539 = vsel %vm3217, %v3489, %v3490
        %v3540 = vsel %vm3217, %v3488, %v3489
        %v3541 = vsel %vm3217, %v3487, %v3488
        %v3542 = vsel %vm3217, %v3486, %v3487
        %v3543 = vsel %vm3217, %v3485, %v3486
        %v3544 = vsel %vm3217, %v3484, %v3485
        %v3545 = vsel %vm3217, %v3483, %v3484
        %v3546 = vsel %vm3217, %v3514, %v3483
        %v3547 = vmul.f32 %v3546, %v2075
        %v3548 = vmul.f32 %v3545, %v2076
        %v3549 = vmul.f32 %v3544, %v2077
        %v3550 = vmul.f32 %v3543, %v2078
        %v3551 = vmul.f32 %v3542, %v2079
        %v3552 = vmul.f32 %v3541, %v2080
        %v3553 = vmul.f32 %v3540, %v2081
        %v3554 = vmul.f32 %v3539, %v2082
        %v3555 = vmul.f32 %v3538, %v2083
        %v3556 = vmul.f32 %v3537, %v2084
        %v3557 = vmul.f32 %v3536, %v2085
        %v3558 = vmul.f32 %v3535, %v2086
        %v3559 = vmul.f32 %v3534, %v2087
        %v3560 = vmul.f32 %v3533, %v2088
        %v3561 = vmul.f32 %v3532, %v2089
        %v3562 = vmul.f32 %v3531, %v2090
        %v3563 = vmul.f32 %v3530, %v2091
        %v3564 = vmul.f32 %v3529, %v2092
        %v3565 = vmul.f32 %v3528, %v2093
        %v3566 = vmul.f32 %v3527, %v2094
        %v3567 = vmul.f32 %v3526, %v2095
        %v3568 = vmul.f32 %v3525, %v2096
        %v3569 = vmul.f32 %v3524, %v2097
        %v3570 = vmul.f32 %v3523, %v2098
        %v3571 = vmul.f32 %v3522, %v2099
        %v3572 = vmul.f32 %v3521, %v2100
        %v3573 = vmul.f32 %v3520, %v2101
        %v3574 = vmul.f32 %v3519, %v2102
        %v3575 = vmul.f32 %v3518, %v2103
        %v3576 = vmul.f32 %v3517, %v2104
        %v3577 = vmul.f32 %v3516, %v2105
        %v3578 = vmul.f32 %v3515, %v2106
        %v3579 = vpack.c.bf16 %v3548, %v3547
        %v3580 = vpack.c.bf16 %v3550, %v3549
        %v3581 = vpack.c.bf16 %v3552, %v3551
        %v3582 = vpack.c.bf16 %v3554, %v3553
        %v3583 = vpack.c.bf16 %v3556, %v3555
        %v3584 = vpack.c.bf16 %v3558, %v3557
        %v3585 = vpack.c.bf16 %v3560, %v3559
        %v3586 = vpack.c.bf16 %v3562, %v3561
        %v3587 = vpack.c.bf16 %v3564, %v3563
        %v3588 = vpack.c.bf16 %v3566, %v3565
        %v3589 = vpack.c.bf16 %v3568, %v3567
        %v3590 = vpack.c.bf16 %v3570, %v3569
        %v3591 = vpack.c.bf16 %v3572, %v3571
        %v3592 = vpack.c.bf16 %v3574, %v3573
        %v3593 = vpack.c.bf16 %v3576, %v3575
        %v3594 = vpack.c.bf16 %v3578, %v3577
        %s3595 = scalar_lea.vmem %s5, 64
        %v3596 = vld [vmem:[%s3595] sm:$0xf]
        %v3597 = vld [vmem:[%s3595 + $0x4] sm:$0xf]
        %v3598 = vld [vmem:[%s3595 + $0x8] sm:$0xf]
        %v3599 = vld [vmem:[%s3595 + $0xc] sm:$0xf]
        %v3600 = vld [vmem:[%s3595 + $0x10] sm:$0xf]
        %v3601 = vld [vmem:[%s3595 + $0x14] sm:$0xf]
        %v3602 = vld [vmem:[%s3595 + $0x18] sm:$0xf]
        %v3603 = vld [vmem:[%s3595 + $0x1c] sm:$0xf]
        %v3604 = vld [vmem:[%s3595 + $0x20] sm:$0xf]
        %v3605 = vld [vmem:[%s3595 + $0x24] sm:$0xf]
        %v3606 = vld [vmem:[%s3595 + $0x28] sm:$0xf]
        %v3607 = vld [vmem:[%s3595 + $0x2c] sm:$0xf]
        %v3608 = vld [vmem:[%s3595 + $0x30] sm:$0xf]
        %v3609 = vld [vmem:[%s3595 + $0x34] sm:$0xf]
        %v3610 = vld [vmem:[%s3595 + $0x38] sm:$0xf]
        %v3611 = vld [vmem:[%s3595 + $0x3c] sm:$0xf]
        %v3628 = vunpack.c.l.b16 %v3596
        %v3629 = vunpack.c.l.b16 %v3597
        %v3630 = vunpack.c.l.b16 %v3598
        %v3631 = vunpack.c.l.b16 %v3599
        %v3632 = vunpack.c.l.b16 %v3600
        %v3633 = vunpack.c.l.b16 %v3601
        %v3634 = vunpack.c.l.b16 %v3602
        %v3635 = vunpack.c.l.b16 %v3603
        %v3636 = vunpack.c.l.b16 %v3604
        %v3637 = vunpack.c.l.b16 %v3605
        %v3638 = vunpack.c.l.b16 %v3606
        %v3639 = vunpack.c.l.b16 %v3607
        %v3640 = vunpack.c.l.b16 %v3608
        %v3641 = vunpack.c.l.b16 %v3609
        %v3642 = vunpack.c.l.b16 %v3610
        %v3643 = vunpack.c.l.b16 %v3611
        %v3644 = vpack.c.b16 %v3629, %v3628
        %v3645 = vpack.c.b16 %v3631, %v3630
        %v3646 = vpack.c.b16 %v3633, %v3632
        %v3647 = vpack.c.b16 %v3635, %v3634
        %v3648 = vpack.c.b16 %v3637, %v3636
        %v3649 = vpack.c.b16 %v3639, %v3638
        %v3650 = vpack.c.b16 %v3641, %v3640
        %v3651 = vpack.c.b16 %v3643, %v3642
        %3660 = vmatpush.bf16.msra.mxu0 %v3651
        %3661 = vmatpush.bf16.msra.mxu0 %v3650
        %3662 = vmatpush.bf16.msra.mxu0 %v3649
        %3663 = vmatpush.bf16.msra.mxu0 %v3648
        %3664 = vmatpush.bf16.msra.mxu0 %v3647
        %3665 = vmatpush.bf16.msra.mxu0 %v3646
        %3666 = vmatpush.bf16.msra.mxu0 %v3645
        %3667 = vmatpush.bf16.msra.mxu0 %v3644
        %3668 = vmatmul.bf16.gmra.mxu0 %v3579
        %v3669 = vpop.f32.mrf.mxu0
        %v3670 = vadd.f32 0.0, %v3669
        %v3671 = vpop.f32.mrf.mxu0
        %v3672 = vadd.f32 0.0, %v3671
        %3673 = vmatmul.bf16.gmra.mxu0 %v3580
        %v3674 = vpop.f32.mrf.mxu0
        %v3675 = vadd.f32 0.0, %v3674
        %v3676 = vpop.f32.mrf.mxu0
        %v3677 = vadd.f32 0.0, %v3676
        %3678 = vmatmul.bf16.gmra.mxu0 %v3581
        %v3679 = vpop.f32.mrf.mxu0
        %v3680 = vadd.f32 0.0, %v3679
        %v3681 = vpop.f32.mrf.mxu0
        %v3682 = vadd.f32 0.0, %v3681
        %3683 = vmatmul.bf16.gmra.mxu0 %v3582
        %v3684 = vpop.f32.mrf.mxu0
        %v3685 = vadd.f32 0.0, %v3684
        %v3686 = vpop.f32.mrf.mxu0
        %v3687 = vadd.f32 0.0, %v3686
        %3688 = vmatmul.bf16.gmra.mxu0 %v3583
        %v3689 = vpop.f32.mrf.mxu0
        %v3690 = vadd.f32 0.0, %v3689
        %v3691 = vpop.f32.mrf.mxu0
        %v3692 = vadd.f32 0.0, %v3691
        %3693 = vmatmul.bf16.gmra.mxu0 %v3584
        %v3694 = vpop.f32.mrf.mxu0
        %v3695 = vadd.f32 0.0, %v3694
        %v3696 = vpop.f32.mrf.mxu0
        %v3697 = vadd.f32 0.0, %v3696
        %3698 = vmatmul.bf16.gmra.mxu0 %v3585
        %v3699 = vpop.f32.mrf.mxu0
        %v3700 = vadd.f32 0.0, %v3699
        %v3701 = vpop.f32.mrf.mxu0
        %v3702 = vadd.f32 0.0, %v3701
        %3703 = vmatmul.bf16.gmra.mxu0 %v3586
        %v3704 = vpop.f32.mrf.mxu0
        %v3705 = vadd.f32 0.0, %v3704
        %v3706 = vpop.f32.mrf.mxu0
        %v3707 = vadd.f32 0.0, %v3706
        %3708 = vmatmul.bf16.gmra.mxu0 %v3587
        %v3709 = vpop.f32.mrf.mxu0
        %v3710 = vadd.f32 0.0, %v3709
        %v3711 = vpop.f32.mrf.mxu0
        %v3712 = vadd.f32 0.0, %v3711
        %3713 = vmatmul.bf16.gmra.mxu0 %v3588
        %v3714 = vpop.f32.mrf.mxu0
        %v3715 = vadd.f32 0.0, %v3714
        %v3716 = vpop.f32.mrf.mxu0
        %v3717 = vadd.f32 0.0, %v3716
        %3718 = vmatmul.bf16.gmra.mxu0 %v3589
        %v3719 = vpop.f32.mrf.mxu0
        %v3720 = vadd.f32 0.0, %v3719
        %v3721 = vpop.f32.mrf.mxu0
        %v3722 = vadd.f32 0.0, %v3721
        %3723 = vmatmul.bf16.gmra.mxu0 %v3590
        %v3724 = vpop.f32.mrf.mxu0
        %v3725 = vadd.f32 0.0, %v3724
        %v3726 = vpop.f32.mrf.mxu0
        %v3727 = vadd.f32 0.0, %v3726
        %3728 = vmatmul.bf16.gmra.mxu0 %v3591
        %v3729 = vpop.f32.mrf.mxu0
        %v3730 = vadd.f32 0.0, %v3729
        %v3731 = vpop.f32.mrf.mxu0
        %v3732 = vadd.f32 0.0, %v3731
        %3733 = vmatmul.bf16.gmra.mxu0 %v3592
        %v3734 = vpop.f32.mrf.mxu0
        %v3735 = vadd.f32 0.0, %v3734
        %v3736 = vpop.f32.mrf.mxu0
        %v3737 = vadd.f32 0.0, %v3736
        %3738 = vmatmul.bf16.gmra.mxu0 %v3593
        %v3739 = vpop.f32.mrf.mxu0
        %v3740 = vadd.f32 0.0, %v3739
        %v3741 = vpop.f32.mrf.mxu0
        %v3742 = vadd.f32 0.0, %v3741
        %3743 = vmatmul.bf16.gmra.mxu0 %v3594
        %v3744 = vpop.f32.mrf.mxu0
        %v3745 = vadd.f32 0.0, %v3744
        %v3746 = vpop.f32.mrf.mxu0
        %v3747 = vadd.f32 0.0, %v3746
        %3748 = vdwg.mxu0
        %v3749 = vadd.f32 %v3451, %v3670
        %v3750 = vadd.f32 %v3452, %v3672
        %v3751 = vadd.f32 %v3453, %v3675
        %v3752 = vadd.f32 %v3454, %v3677
        %v3753 = vadd.f32 %v3455, %v3680
        %v3754 = vadd.f32 %v3456, %v3682
        %v3755 = vadd.f32 %v3457, %v3685
        %v3756 = vadd.f32 %v3458, %v3687
        %v3757 = vadd.f32 %v3459, %v3690
        %v3758 = vadd.f32 %v3460, %v3692
        %v3759 = vadd.f32 %v3461, %v3695
        %v3760 = vadd.f32 %v3462, %v3697
        %v3761 = vadd.f32 %v3463, %v3700
        %v3762 = vadd.f32 %v3464, %v3702
        %v3763 = vadd.f32 %v3465, %v3705
        %v3764 = vadd.f32 %v3466, %v3707
        %v3765 = vadd.f32 %v3467, %v3710
        %v3766 = vadd.f32 %v3468, %v3712
        %v3767 = vadd.f32 %v3469, %v3715
        %v3768 = vadd.f32 %v3470, %v3717
        %v3769 = vadd.f32 %v3471, %v3720
        %v3770 = vadd.f32 %v3472, %v3722
        %v3771 = vadd.f32 %v3473, %v3725
        %v3772 = vadd.f32 %v3474, %v3727
        %v3773 = vadd.f32 %v3475, %v3730
        %v3774 = vadd.f32 %v3476, %v3732
        %v3775 = vadd.f32 %v3477, %v3735
        %v3776 = vadd.f32 %v3478, %v3737
        %v3777 = vadd.f32 %v3479, %v3740
        %v3778 = vadd.f32 %v3480, %v3742
        %v3779 = vadd.f32 %v3481, %v3745
        %v3780 = vadd.f32 %v3482, %v3747
        %v3781 = vrot.slane %v2236, 7
        %v3782 = vrot.slane %v2238, 7
        %v3783 = vrot.slane %v2240, 7
        %v3784 = vrot.slane %v2242, 7
        %v3785 = vrot.slane %v2244, 7
        %v3786 = vrot.slane %v2246, 7
        %v3787 = vrot.slane %v2248, 7
        %v3788 = vrot.slane %v2250, 7
        %v3789 = vrot.slane %v2252, 7
        %v3790 = vrot.slane %v2254, 7
        %v3791 = vrot.slane %v2256, 7
        %v3792 = vrot.slane %v2258, 7
        %v3793 = vrot.slane %v2260, 7
        %v3794 = vrot.slane %v2262, 7
        %v3795 = vrot.slane %v2264, 7
        %v3796 = vrot.slane %v2266, 7
        %v3797 = vrot.slane %v2268, 7
        %v3798 = vrot.slane %v2270, 7
        %v3799 = vrot.slane %v2272, 7
        %v3800 = vrot.slane %v2274, 7
        %v3801 = vrot.slane %v2276, 7
        %v3802 = vrot.slane %v2278, 7
        %v3803 = vrot.slane %v2280, 7
        %v3804 = vrot.slane %v2282, 7
        %v3805 = vrot.slane %v2284, 7
        %v3806 = vrot.slane %v2286, 7
        %v3807 = vrot.slane %v2288, 7
        %v3808 = vrot.slane %v2290, 7
        %v3809 = vrot.slane %v2292, 7
        %v3810 = vrot.slane %v2294, 7
        %v3811 = vrot.slane %v2296, 7
        %v3812 = vrot.slane %v2298, 7
        %v3813 = vsel %vm3217, %v3811, %v3812
        %v3814 = vsel %vm3217, %v3810, %v3811
        %v3815 = vsel %vm3217, %v3809, %v3810
        %v3816 = vsel %vm3217, %v3808, %v3809
        %v3817 = vsel %vm3217, %v3807, %v3808
        %v3818 = vsel %vm3217, %v3806, %v3807
        %v3819 = vsel %vm3217, %v3805, %v3806
        %v3820 = vsel %vm3217, %v3804, %v3805
        %v3821 = vsel %vm3217, %v3803, %v3804
        %v3822 = vsel %vm3217, %v3802, %v3803
        %v3823 = vsel %vm3217, %v3801, %v3802
        %v3824 = vsel %vm3217, %v3800, %v3801
        %v3825 = vsel %vm3217, %v3799, %v3800
        %v3826 = vsel %vm3217, %v3798, %v3799
        %v3827 = vsel %vm3217, %v3797, %v3798
        %v3828 = vsel %vm3217, %v3796, %v3797
        %v3829 = vsel %vm3217, %v3795, %v3796
        %v3830 = vsel %vm3217, %v3794, %v3795
        %v3831 = vsel %vm3217, %v3793, %v3794
        %v3832 = vsel %vm3217, %v3792, %v3793
        %v3833 = vsel %vm3217, %v3791, %v3792
        %v3834 = vsel %vm3217, %v3790, %v3791
        %v3835 = vsel %vm3217, %v3789, %v3790
        %v3836 = vsel %vm3217, %v3788, %v3789
        %v3837 = vsel %vm3217, %v3787, %v3788
        %v3838 = vsel %vm3217, %v3786, %v3787
        %v3839 = vsel %vm3217, %v3785, %v3786
        %v3840 = vsel %vm3217, %v3784, %v3785
        %v3841 = vsel %vm3217, %v3783, %v3784
        %v3842 = vsel %vm3217, %v3782, %v3783
        %v3843 = vsel %vm3217, %v3781, %v3782
        %v3844 = vsel %vm3217, %v3812, %v3781
        %v3845 = vmul.f32 %v3844, %v2075
        %v3846 = vmul.f32 %v3843, %v2076
        %v3847 = vmul.f32 %v3842, %v2077
        %v3848 = vmul.f32 %v3841, %v2078
        %v3849 = vmul.f32 %v3840, %v2079
        %v3850 = vmul.f32 %v3839, %v2080
        %v3851 = vmul.f32 %v3838, %v2081
        %v3852 = vmul.f32 %v3837, %v2082
        %v3853 = vmul.f32 %v3836, %v2083
        %v3854 = vmul.f32 %v3835, %v2084
        %v3855 = vmul.f32 %v3834, %v2085
        %v3856 = vmul.f32 %v3833, %v2086
        %v3857 = vmul.f32 %v3832, %v2087
        %v3858 = vmul.f32 %v3831, %v2088
        %v3859 = vmul.f32 %v3830, %v2089
        %v3860 = vmul.f32 %v3829, %v2090
        %v3861 = vmul.f32 %v3828, %v2091
        %v3862 = vmul.f32 %v3827, %v2092
        %v3863 = vmul.f32 %v3826, %v2093
        %v3864 = vmul.f32 %v3825, %v2094
        %v3865 = vmul.f32 %v3824, %v2095
        %v3866 = vmul.f32 %v3823, %v2096
        %v3867 = vmul.f32 %v3822, %v2097
        %v3868 = vmul.f32 %v3821, %v2098
        %v3869 = vmul.f32 %v3820, %v2099
        %v3870 = vmul.f32 %v3819, %v2100
        %v3871 = vmul.f32 %v3818, %v2101
        %v3872 = vmul.f32 %v3817, %v2102
        %v3873 = vmul.f32 %v3816, %v2103
        %v3874 = vmul.f32 %v3815, %v2104
        %v3875 = vmul.f32 %v3814, %v2105
        %v3876 = vmul.f32 %v3813, %v2106
        %v3877 = vpack.c.bf16 %v3846, %v3845
        %v3878 = vpack.c.bf16 %v3848, %v3847
        %v3879 = vpack.c.bf16 %v3850, %v3849
        %v3880 = vpack.c.bf16 %v3852, %v3851
        %v3881 = vpack.c.bf16 %v3854, %v3853
        %v3882 = vpack.c.bf16 %v3856, %v3855
        %v3883 = vpack.c.bf16 %v3858, %v3857
        %v3884 = vpack.c.bf16 %v3860, %v3859
        %v3885 = vpack.c.bf16 %v3862, %v3861
        %v3886 = vpack.c.bf16 %v3864, %v3863
        %v3887 = vpack.c.bf16 %v3866, %v3865
        %v3888 = vpack.c.bf16 %v3868, %v3867
        %v3889 = vpack.c.bf16 %v3870, %v3869
        %v3890 = vpack.c.bf16 %v3872, %v3871
        %v3891 = vpack.c.bf16 %v3874, %v3873
        %v3892 = vpack.c.bf16 %v3876, %v3875
        %s3893 = scalar_lea.vmem %s5, 128
        %v3894 = vld [vmem:[%s3893] sm:$0xf]
        %v3895 = vld [vmem:[%s3893 + $0x4] sm:$0xf]
        %v3896 = vld [vmem:[%s3893 + $0x8] sm:$0xf]
        %v3897 = vld [vmem:[%s3893 + $0xc] sm:$0xf]
        %v3898 = vld [vmem:[%s3893 + $0x10] sm:$0xf]
        %v3899 = vld [vmem:[%s3893 + $0x14] sm:$0xf]
        %v3900 = vld [vmem:[%s3893 + $0x18] sm:$0xf]
        %v3901 = vld [vmem:[%s3893 + $0x1c] sm:$0xf]
        %v3902 = vld [vmem:[%s3893 + $0x20] sm:$0xf]
        %v3903 = vld [vmem:[%s3893 + $0x24] sm:$0xf]
        %v3904 = vld [vmem:[%s3893 + $0x28] sm:$0xf]
        %v3905 = vld [vmem:[%s3893 + $0x2c] sm:$0xf]
        %v3906 = vld [vmem:[%s3893 + $0x30] sm:$0xf]
        %v3907 = vld [vmem:[%s3893 + $0x34] sm:$0xf]
        %v3908 = vld [vmem:[%s3893 + $0x38] sm:$0xf]
        %v3909 = vld [vmem:[%s3893 + $0x3c] sm:$0xf]
        %v3926 = vunpack.c.l.b16 %v3894
        %v3927 = vunpack.c.l.b16 %v3895
        %v3928 = vunpack.c.l.b16 %v3896
        %v3929 = vunpack.c.l.b16 %v3897
        %v3930 = vunpack.c.l.b16 %v3898
        %v3931 = vunpack.c.l.b16 %v3899
        %v3932 = vunpack.c.l.b16 %v3900
        %v3933 = vunpack.c.l.b16 %v3901
        %v3934 = vunpack.c.l.b16 %v3902
        %v3935 = vunpack.c.l.b16 %v3903
        %v3936 = vunpack.c.l.b16 %v3904
        %v3937 = vunpack.c.l.b16 %v3905
        %v3938 = vunpack.c.l.b16 %v3906
        %v3939 = vunpack.c.l.b16 %v3907
        %v3940 = vunpack.c.l.b16 %v3908
        %v3941 = vunpack.c.l.b16 %v3909
        %v3942 = vpack.c.b16 %v3927, %v3926
        %v3943 = vpack.c.b16 %v3929, %v3928
        %v3944 = vpack.c.b16 %v3931, %v3930
        %v3945 = vpack.c.b16 %v3933, %v3932
        %v3946 = vpack.c.b16 %v3935, %v3934
        %v3947 = vpack.c.b16 %v3937, %v3936
        %v3948 = vpack.c.b16 %v3939, %v3938
        %v3949 = vpack.c.b16 %v3941, %v3940
        %3958 = vmatpush.bf16.msra.mxu0 %v3949
        %3959 = vmatpush.bf16.msra.mxu0 %v3948
        %3960 = vmatpush.bf16.msra.mxu0 %v3947
        %3961 = vmatpush.bf16.msra.mxu0 %v3946
        %3962 = vmatpush.bf16.msra.mxu0 %v3945
        %3963 = vmatpush.bf16.msra.mxu0 %v3944
        %3964 = vmatpush.bf16.msra.mxu0 %v3943
        %3965 = vmatpush.bf16.msra.mxu0 %v3942
        %3966 = vmatmul.bf16.gmra.mxu0 %v3877
        %v3967 = vpop.f32.mrf.mxu0
        %v3968 = vadd.f32 0.0, %v3967
        %v3969 = vpop.f32.mrf.mxu0
        %v3970 = vadd.f32 0.0, %v3969
        %3971 = vmatmul.bf16.gmra.mxu0 %v3878
        %v3972 = vpop.f32.mrf.mxu0
        %v3973 = vadd.f32 0.0, %v3972
        %v3974 = vpop.f32.mrf.mxu0
        %v3975 = vadd.f32 0.0, %v3974
        %3976 = vmatmul.bf16.gmra.mxu0 %v3879
        %v3977 = vpop.f32.mrf.mxu0
        %v3978 = vadd.f32 0.0, %v3977
        %v3979 = vpop.f32.mrf.mxu0
        %v3980 = vadd.f32 0.0, %v3979
        %3981 = vmatmul.bf16.gmra.mxu0 %v3880
        %v3982 = vpop.f32.mrf.mxu0
        %v3983 = vadd.f32 0.0, %v3982
        %v3984 = vpop.f32.mrf.mxu0
        %v3985 = vadd.f32 0.0, %v3984
        %3986 = vmatmul.bf16.gmra.mxu0 %v3881
        %v3987 = vpop.f32.mrf.mxu0
        %v3988 = vadd.f32 0.0, %v3987
        %v3989 = vpop.f32.mrf.mxu0
        %v3990 = vadd.f32 0.0, %v3989
        %3991 = vmatmul.bf16.gmra.mxu0 %v3882
        %v3992 = vpop.f32.mrf.mxu0
        %v3993 = vadd.f32 0.0, %v3992
        %v3994 = vpop.f32.mrf.mxu0
        %v3995 = vadd.f32 0.0, %v3994
        %3996 = vmatmul.bf16.gmra.mxu0 %v3883
        %v3997 = vpop.f32.mrf.mxu0
        %v3998 = vadd.f32 0.0, %v3997
        %v3999 = vpop.f32.mrf.mxu0
        %v4000 = vadd.f32 0.0, %v3999
        %4001 = vmatmul.bf16.gmra.mxu0 %v3884
        %v4002 = vpop.f32.mrf.mxu0
        %v4003 = vadd.f32 0.0, %v4002
        %v4004 = vpop.f32.mrf.mxu0
        %v4005 = vadd.f32 0.0, %v4004
        %4006 = vmatmul.bf16.gmra.mxu0 %v3885
        %v4007 = vpop.f32.mrf.mxu0
        %v4008 = vadd.f32 0.0, %v4007
        %v4009 = vpop.f32.mrf.mxu0
        %v4010 = vadd.f32 0.0, %v4009
        %4011 = vmatmul.bf16.gmra.mxu0 %v3886
        %v4012 = vpop.f32.mrf.mxu0
        %v4013 = vadd.f32 0.0, %v4012
        %v4014 = vpop.f32.mrf.mxu0
        %v4015 = vadd.f32 0.0, %v4014
        %4016 = vmatmul.bf16.gmra.mxu0 %v3887
        %v4017 = vpop.f32.mrf.mxu0
        %v4018 = vadd.f32 0.0, %v4017
        %v4019 = vpop.f32.mrf.mxu0
        %v4020 = vadd.f32 0.0, %v4019
        %4021 = vmatmul.bf16.gmra.mxu0 %v3888
        %v4022 = vpop.f32.mrf.mxu0
        %v4023 = vadd.f32 0.0, %v4022
        %v4024 = vpop.f32.mrf.mxu0
        %v4025 = vadd.f32 0.0, %v4024
        %4026 = vmatmul.bf16.gmra.mxu0 %v3889
        %v4027 = vpop.f32.mrf.mxu0
        %v4028 = vadd.f32 0.0, %v4027
        %v4029 = vpop.f32.mrf.mxu0
        %v4030 = vadd.f32 0.0, %v4029
        %4031 = vmatmul.bf16.gmra.mxu0 %v3890
        %v4032 = vpop.f32.mrf.mxu0
        %v4033 = vadd.f32 0.0, %v4032
        %v4034 = vpop.f32.mrf.mxu0
        %v4035 = vadd.f32 0.0, %v4034
        %4036 = vmatmul.bf16.gmra.mxu0 %v3891
        %v4037 = vpop.f32.mrf.mxu0
        %v4038 = vadd.f32 0.0, %v4037
        %v4039 = vpop.f32.mrf.mxu0
        %v4040 = vadd.f32 0.0, %v4039
        %4041 = vmatmul.bf16.gmra.mxu0 %v3892
        %v4042 = vpop.f32.mrf.mxu0
        %v4043 = vadd.f32 0.0, %v4042
        %v4044 = vpop.f32.mrf.mxu0
        %v4045 = vadd.f32 0.0, %v4044
        %4046 = vdwg.mxu0
        %v4047 = vadd.f32 %v3749, %v3968
        %v4048 = vadd.f32 %v3750, %v3970
        %v4049 = vadd.f32 %v3751, %v3973
        %v4050 = vadd.f32 %v3752, %v3975
        %v4051 = vadd.f32 %v3753, %v3978
        %v4052 = vadd.f32 %v3754, %v3980
        %v4053 = vadd.f32 %v3755, %v3983
        %v4054 = vadd.f32 %v3756, %v3985
        %v4055 = vadd.f32 %v3757, %v3988
        %v4056 = vadd.f32 %v3758, %v3990
        %v4057 = vadd.f32 %v3759, %v3993
        %v4058 = vadd.f32 %v3760, %v3995
        %v4059 = vadd.f32 %v3761, %v3998
        %v4060 = vadd.f32 %v3762, %v4000
        %v4061 = vadd.f32 %v3763, %v4003
        %v4062 = vadd.f32 %v3764, %v4005
        %v4063 = vadd.f32 %v3765, %v4008
        %v4064 = vadd.f32 %v3766, %v4010
        %v4065 = vadd.f32 %v3767, %v4013
        %v4066 = vadd.f32 %v3768, %v4015
        %v4067 = vadd.f32 %v3769, %v4018
        %v4068 = vadd.f32 %v3770, %v4020
        %v4069 = vadd.f32 %v3771, %v4023
        %v4070 = vadd.f32 %v3772, %v4025
        %v4071 = vadd.f32 %v3773, %v4028
        %v4072 = vadd.f32 %v3774, %v4030
        %v4073 = vadd.f32 %v3775, %v4033
        %v4074 = vadd.f32 %v3776, %v4035
        %v4075 = vadd.f32 %v3777, %v4038
        %v4076 = vadd.f32 %v3778, %v4040
        %v4077 = vadd.f32 %v3779, %v4043
        %v4078 = vadd.f32 %v3780, %v4045
        %v4079 = vld [vmem:[%s6] sm:$0x1]
        %v4081 = vperm.slane %v4079, 0
        %v4083 = vadd.f32 %v4047, %v4081
        %v4084 = vadd.f32 %v4048, %v4081
        %v4085 = vadd.f32 %v4049, %v4081
        %v4086 = vadd.f32 %v4050, %v4081
        %v4087 = vadd.f32 %v4051, %v4081
        %v4088 = vadd.f32 %v4052, %v4081
        %v4089 = vadd.f32 %v4053, %v4081
        %v4090 = vadd.f32 %v4054, %v4081
        %v4091 = vadd.f32 %v4055, %v4081
        %v4092 = vadd.f32 %v4056, %v4081
        %v4093 = vadd.f32 %v4057, %v4081
        %v4094 = vadd.f32 %v4058, %v4081
        %v4095 = vadd.f32 %v4059, %v4081
        %v4096 = vadd.f32 %v4060, %v4081
        %v4097 = vadd.f32 %v4061, %v4081
        %v4098 = vadd.f32 %v4062, %v4081
        %v4099 = vadd.f32 %v4063, %v4081
        %v4100 = vadd.f32 %v4064, %v4081
        %v4101 = vadd.f32 %v4065, %v4081
        %v4102 = vadd.f32 %v4066, %v4081
        %v4103 = vadd.f32 %v4067, %v4081
        %v4104 = vadd.f32 %v4068, %v4081
        %v4105 = vadd.f32 %v4069, %v4081
        %v4106 = vadd.f32 %v4070, %v4081
        %v4107 = vadd.f32 %v4071, %v4081
        %v4108 = vadd.f32 %v4072, %v4081
        %v4109 = vadd.f32 %v4073, %v4081
        %v4110 = vadd.f32 %v4074, %v4081
        %v4111 = vadd.f32 %v4075, %v4081
        %v4112 = vadd.f32 %v4076, %v4081
        %v4113 = vadd.f32 %v4077, %v4081
        %v4114 = vadd.f32 %v4078, %v4081
        %v4115 = vmax.f32 %v4083, 0.0
        %v4116 = vmax.f32 %v4084, 0.0
        %v4117 = vmax.f32 %v4085, 0.0
        %v4118 = vmax.f32 %v4086, 0.0
        %v4119 = vmax.f32 %v4087, 0.0
        %v4120 = vmax.f32 %v4088, 0.0
        %v4121 = vmax.f32 %v4089, 0.0
        %v4122 = vmax.f32 %v4090, 0.0
        %v4123 = vmax.f32 %v4091, 0.0
        %v4124 = vmax.f32 %v4092, 0.0
        %v4125 = vmax.f32 %v4093, 0.0
        %v4126 = vmax.f32 %v4094, 0.0
        %v4127 = vmax.f32 %v4095, 0.0
        %v4128 = vmax.f32 %v4096, 0.0
        %v4129 = vmax.f32 %v4097, 0.0
        %v4130 = vmax.f32 %v4098, 0.0
        %v4131 = vmax.f32 %v4099, 0.0
        %v4132 = vmax.f32 %v4100, 0.0
        %v4133 = vmax.f32 %v4101, 0.0
        %v4134 = vmax.f32 %v4102, 0.0
        %v4135 = vmax.f32 %v4103, 0.0
        %v4136 = vmax.f32 %v4104, 0.0
        %v4137 = vmax.f32 %v4105, 0.0
        %v4138 = vmax.f32 %v4106, 0.0
        %v4139 = vmax.f32 %v4107, 0.0
        %v4140 = vmax.f32 %v4108, 0.0
        %v4141 = vmax.f32 %v4109, 0.0
        %v4142 = vmax.f32 %v4110, 0.0
        %v4143 = vmax.f32 %v4111, 0.0
        %v4144 = vmax.f32 %v4112, 0.0
        %v4145 = vmax.f32 %v4113, 0.0
        %v4146 = vmax.f32 %v4114, 0.0
        %4147 = vst [vmem:[%s291] sm:$0xff] %v4115
        %4148 = vst [vmem:[%s291 + $0x8] sm:$0xff] %v4116
        %4149 = vst [vmem:[%s291 + $0x10] sm:$0xff] %v4117
        %4150 = vst [vmem:[%s291 + $0x18] sm:$0xff] %v4118
        %4151 = vst [vmem:[%s291 + $0x20] sm:$0xff] %v4119
        %4152 = vst [vmem:[%s291 + $0x28] sm:$0xff] %v4120
        %4153 = vst [vmem:[%s291 + $0x30] sm:$0xff] %v4121
        %4154 = vst [vmem:[%s291 + $0x38] sm:$0xff] %v4122
        %4155 = vst [vmem:[%s291 + $0x40] sm:$0xff] %v4123
        %4156 = vst [vmem:[%s291 + $0x48] sm:$0xff] %v4124
        %4157 = vst [vmem:[%s291 + $0x50] sm:$0xff] %v4125
        %4158 = vst [vmem:[%s291 + $0x58] sm:$0xff] %v4126
        %4159 = vst [vmem:[%s291 + $0x60] sm:$0xff] %v4127
        %4160 = vst [vmem:[%s291 + $0x68] sm:$0xff] %v4128
        %4161 = vst [vmem:[%s291 + $0x70] sm:$0xff] %v4129
        %4162 = vst [vmem:[%s291 + $0x78] sm:$0xff] %v4130
        %4163 = vst [vmem:[%s291 + $0x80] sm:$0xff] %v4131
        %4164 = vst [vmem:[%s291 + $0x88] sm:$0xff] %v4132
        %4165 = vst [vmem:[%s291 + $0x90] sm:$0xff] %v4133
        %4166 = vst [vmem:[%s291 + $0x98] sm:$0xff] %v4134
        %4167 = vst [vmem:[%s291 + $0xa0] sm:$0xff] %v4135
        %4168 = vst [vmem:[%s291 + $0xa8] sm:$0xff] %v4136
        %4169 = vst [vmem:[%s291 + $0xb0] sm:$0xff] %v4137
        %4170 = vst [vmem:[%s291 + $0xb8] sm:$0xff] %v4138
        %4171 = vst [vmem:[%s291 + $0xc0] sm:$0xff] %v4139
        %4172 = vst [vmem:[%s291 + $0xc8] sm:$0xff] %v4140
        %4173 = vst [vmem:[%s291 + $0xd0] sm:$0xff] %v4141
        %4174 = vst [vmem:[%s291 + $0xd8] sm:$0xff] %v4142
        %4175 = vst [vmem:[%s291 + $0xe0] sm:$0xff] %v4143
        %4176 = vst [vmem:[%s291 + $0xe8] sm:$0xff] %v4144
        %4177 = vst [vmem:[%s291 + $0xf0] sm:$0xff] %v4145
        %4178 = vst [vmem:[%s291 + $0xf8] sm:$0xff] %v4146
        %s4179 = sand.u32 %s182, 1
        %s4180 = scalar_lea.sflag [#allocation4], %s4179
        %s4181 = sand.u32 %s182, 1
        %s4182 = smul.addr %s4181, 256
        %s4183 = scalar_lea.vmem [#allocation5], %s4182
        // Predicated region
        $region53: #{_lambda_.1} parent=47 // pred_check
          %p4184 = pneg %p192
        $region54: #{_lambda_.1} parent=47 // pred_check_branch
          %4186 = sbr.rel (%p4184) target = $region56
        $region55: #{_lambda_.1} parent=47 // pred_region
          %s4187 = smul.u32 2, %s22
          %4189 = vsyncadd %s4180, 0
          %s4190 = smul.addr %s4187, 16
          %s4191 = smul.addr %s4190, 8
          %s4192 = scalar_lea.hbm %s7, %s4191
          %s4193 = sshll.u32 %s4183, 4
          %s4194 = int_to_ptr.vmem [resolvable:$true] %s4193
          %s4195 = sshll.u32 %s4192, 4
          %s4196 = int_to_ptr.hbm [resolvable:$true] %s4195
          %4201 = dma.vmem_to_hbm [thread:$0]  %s4194, 4096, %s4196, %s4180, 128, 128, 8
        $region56: #{_lambda_.1} parent=47 // pred_fallthru
          _
      $region48: #{_lambda_.1} parent=5 // pred_fallthru
        _
      %p4202 = scmp.le.s32.totalorder 2, %s17
      // Predicated region
      $region57: #{_lambda_.1} parent=5 // pred_check
        %p4203 = pneg %p4202
      $region58: #{_lambda_.1} parent=5 // pred_check_branch
        %4205 = sbr.rel (%p4203) target = $region60
      $region59: #{_lambda_.1} parent=5 // pred_region
        %s4206 = ssub.s32 %s17, 2
        // Predicated region
        $region61: #{_lambda_.1} parent=59 // pred_check
          %p4207 = pneg %p198
        $region62: #{_lambda_.1} parent=59 // pred_check_branch
          %4209 = sbr.rel (%p4207) target = $region64
        $region63: #{_lambda_.1} parent=59 // pred_region
          %s4210 = sand.u32 %s183, 1
          %s4211 = scalar_lea.sflag [#allocation4], %s4210
          %s4212 = sand.u32 %s183, 1
          %s4213 = smul.addr %s4212, 256
          %s4214 = scalar_lea.vmem [#allocation5], %s4213
          %4216 = dma.done %s4211, 4096
        $region64: #{_lambda_.1} parent=59 // pred_fallthru
          _
      $region60: #{_lambda_.1} parent=5 // pred_fallthru
        _
    $region6: #{_lambda_.1} parent=1 // loop_footer
      %s21 = sadd.s32 1, %s17
    $region7: #{_lambda_.1} parent=1 // loop_footer_branch
      %16 = sbr.rel target = $region3
    $region8: #{_lambda_.1} parent=1 // loop_exit
      _
    %4217 = vsyncpa [#allocation3], 1
    %s4218 = scalar_lea.sflag [#allocation3], 1
    %4219 = vsyncpa %s4218, 1
    %4220 = vsyncpa [#allocation4], 1
    %s4221 = scalar_lea.sflag [#allocation4], 1
    %4222 = vsyncpa %s4221, 1

</llo_original>
